<compile_context>
chip_gen: v5e
topology: v5e:2x2
jax: 0.10.0
libtpu: 0.0.40
codegen_flags: <defaults>
</compile_context>

<pallas_src>
import jax
import jax.numpy as jnp
from jax.experimental import pallas as pl
from jax.experimental.pallas import tpu as pltpu

IN_FEATURES = 60
K_PAD = 64        # fc1 input features padded 60 -> 64 (sublane aligned)
HID = 512

TM_MAX = 1024     # largest batch tile (perf review: 512-1024; VMEM stays small)
SPLIT_MIN = 512   # below this, a single grid step (weight-DMA-bound latency path)


def _mlp_kernel(x_ref,
                w1_ref, b1_ref,
                w2_ref, b2_ref,
                w3_ref, b3_ref,
                w4_ref, b4_ref,
                w5_ref, b5_ref,
                w6_ref, b6_ref,
                o_ref):
    """One batch tile of the fused 6-layer MLP (weights resident in VMEM)."""
    x = x_ref[...]                                               # (TM, 64) bf16

    # fc1: Linear(60->512) -- NO activation in the reference forward.
    h = jnp.dot(x, w1_ref[...], preferred_element_type=jnp.float32) + b1_ref[...]
    h = h.astype(jnp.bfloat16)

    # fc2..fc5: Linear -> (dropout = identity in eval) -> ReLU
    for w_ref, b_ref in ((w2_ref, b2_ref), (w3_ref, b3_ref),
                         (w4_ref, b4_ref), (w5_ref, b5_ref)):
        h = jnp.dot(h, w_ref[...], preferred_element_type=jnp.float32) + b_ref[...]
        h = jnp.maximum(h, 0.0).astype(jnp.bfloat16)

    # fc6: Linear(512->1) as VPU multiply + lane reduction (frees the MXU).
    h32 = h.astype(jnp.float32)
    w6 = w6_ref[...].astype(jnp.float32)                         # (1, 512) row
    out = jnp.sum(h32 * w6, axis=-1, keepdims=True) + b6_ref[...]
    o_ref[...] = out.astype(o_ref.dtype)


def _cdiv(a, b):
    return -(-a // b)


def _round_up(x, m):
    return (x + m - 1) // m * m


def _choose_tiling(batch):
    """Pick (tm, num_steps) per the perf review.

    Small B: single step (latency path), rows rounded to 16 (bf16 packing) or
    128.  Large B: fewest steps with tm <= TM_MAX but at least 2 so the
    'parallel' axis shards across both v7x TensorCores, with a padding-aware
    tm = round_up(cdiv(B, steps), 128) (guaranteed >= 256 rows per step).
    """
    if batch < SPLIT_MIN:
        if batch <= 256:
            return max(16, _round_up(batch, 16)), 1
        return _round_up(batch, 128), 1
    num_steps = max(2, _cdiv(batch, TM_MAX))
    tm = _round_up(_cdiv(batch, num_steps), 128)
    return tm, num_steps


def init_params(key):
    """Deterministic synthetic parameters with PyTorch nn.Linear init,
    stored transposed: w is (in_features, out_features), b is (1, out)."""
    dims = [(60, 512), (512, 512), (512, 512), (512, 512), (512, 512), (512, 1)]
    params = {}
    for idx, (fan_in, fan_out) in enumerate(dims, start=1):
        key, kw, kb = jax.random.split(key, 3)
        bound = 1.0 / jnp.sqrt(jnp.float32(fan_in))
        params[f"w{idx}"] = jax.random.uniform(
            kw, (fan_in, fan_out), jnp.float32, minval=-bound, maxval=bound)
        params[f"b{idx}"] = jax.random.uniform(
            kb, (1, fan_out), jnp.float32, minval=-bound, maxval=bound)
    return params


def prepare_params(params_f32):
    """Pad / transpose / cast f32 PyTorch-layout params into kernel layout."""
    kp = {}
    w1 = jnp.pad(params_f32["w1"],
                 ((0, K_PAD - params_f32["w1"].shape[0]), (0, 0)))
    kp["w1"] = w1.astype(jnp.bfloat16)                           # (64, 512)
    for i in range(2, 6):
        kp[f"w{i}"] = params_f32[f"w{i}"].astype(jnp.bfloat16)   # (512, 512)
    kp["w6"] = params_f32["w6"].T.astype(jnp.bfloat16)           # (1, 512)
    for i in range(1, 7):
        kp[f"b{i}"] = params_f32[f"b{i}"].astype(jnp.float32)    # (1, out)
    return kp


def landlord_net_forward(x, kp, *, tm=None):
    """x: (B, 60) float32.  kp: prepared (bf16 weight / f32 bias) params."""
    B, F = x.shape
    assert F == IN_FEATURES
    if tm is None:
        tm, num_steps = _choose_tiling(B)
    else:
        num_steps = _cdiv(B, tm)
    b_pad = tm * num_steps

    # Pad batch to tm*num_steps and features 60 -> 64 with zeros.
    x_pad = jnp.zeros((b_pad, K_PAD), jnp.bfloat16)
    x_pad = x_pad.at[:B, :F].set(x.astype(jnp.bfloat16))

    args = (x_pad,
            kp["w1"], kp["b1"], kp["w2"], kp["b2"], kp["w3"], kp["b3"],
            kp["w4"], kp["b4"], kp["w5"], kp["b5"], kp["w6"], kp["b6"])

    grid = (num_steps,)
    const_map = lambda i: (0, 0)
    in_specs = [pl.BlockSpec((tm, K_PAD), lambda i: (i, 0))]
    for a in args[1:]:
        in_specs.append(pl.BlockSpec(a.shape, const_map))        # VMEM-resident
    out_specs = pl.BlockSpec((tm, 1), lambda i: (i, 0))

    flops = 2 * b_pad * (K_PAD * HID + 4 * HID * HID + HID)
    bytes_accessed = sum(int(a.size) * a.dtype.itemsize for a in args) + b_pad * 4

    out = pl.pallas_call(
        _mlp_kernel,
        out_shape=jax.ShapeDtypeStruct((b_pad, 1), jnp.float32),
        grid=grid,
        in_specs=in_specs,
        out_specs=out_specs,
        compiler_params=pltpu.CompilerParams(
            dimension_semantics=("parallel",),
            vmem_limit_bytes=32 << 20),
        cost_estimate=pl.CostEstimate(
            flops=flops, transcendentals=0, bytes_accessed=bytes_accessed),
    )(*args)
    return out[:B]


def reference_forward(x, kp):
    """Pure-JAX reference with the same bf16 casting points as the kernel."""
    B = x.shape[0]
    xp = jnp.zeros((B, K_PAD), jnp.bfloat16).at[:, :IN_FEATURES].set(
        x.astype(jnp.bfloat16))
    h = jnp.dot(xp, kp["w1"], preferred_element_type=jnp.float32) + kp["b1"]
    h = h.astype(jnp.bfloat16)
    for i in range(2, 6):
        h = jnp.dot(h, kp[f"w{i}"], preferred_element_type=jnp.float32) + kp[f"b{i}"]
        h = jnp.maximum(h, 0.0).astype(jnp.bfloat16)
    h32 = h.astype(jnp.float32)
    return jnp.sum(h32 * kp["w6"].astype(jnp.float32), axis=-1,
                   keepdims=True) + kp["b6"]


if __name__ == "__main__":
    key = jax.random.PRNGKey(0)
    key, kx = jax.random.split(key)

    params = init_params(key)
    kp = prepare_params(params)

    # Small-batch / latency path: single grid step, 16-row bf16-packed tile.
    B_small = 8
    x_small = jax.random.normal(kx, (B_small, 60), dtype=jnp.float32)
    out_small = jax.block_until_ready(landlord_net_forward(x_small, kp))
    ref_small = reference_forward(x_small, kp)
    assert out_small.shape == (B_small, 1)
    assert jnp.allclose(out_small, ref_small, atol=2e-2, rtol=2e-2), \
        "small-batch mismatch vs reference"

    # Throughput path: awkward batch size -> padding-aware 2-step grid
    # (B=600 -> tm=384, b_pad=768), exercises the megacore-friendly tiling.
    key, kx2 = jax.random.split(key)
    B_big = 600
    x_big = jax.random.normal(kx2, (B_big, 60), dtype=jnp.float32)
    out_big = jax.block_until_ready(landlord_net_forward(x_big, kp))
    ref_big = reference_forward(x_big, kp)
    assert out_big.shape == (B_big, 1)
    assert jnp.allclose(out_big, ref_big, atol=2e-2, rtol=2e-2), \
        "large-batch mismatch vs reference"

    print("KERNEL_OK")
</pallas_src>

<mosaic_0001>
module attributes {stable_mosaic.version = 11 : i64} {
  func.func @_mlp_kernel(%arg0: i32, %arg1: memref<16x64xbf16, #tpu.memory_space<vmem>>, %arg2: memref<64x512xbf16, #tpu.memory_space<vmem>>, %arg3: memref<1x512xf32, #tpu.memory_space<vmem>>, %arg4: memref<512x512xbf16, #tpu.memory_space<vmem>>, %arg5: memref<1x512xf32, #tpu.memory_space<vmem>>, %arg6: memref<512x512xbf16, #tpu.memory_space<vmem>>, %arg7: memref<1x512xf32, #tpu.memory_space<vmem>>, %arg8: memref<512x512xbf16, #tpu.memory_space<vmem>>, %arg9: memref<1x512xf32, #tpu.memory_space<vmem>>, %arg10: memref<512x512xbf16, #tpu.memory_space<vmem>>, %arg11: memref<1x512xf32, #tpu.memory_space<vmem>>, %arg12: memref<1x512xbf16, #tpu.memory_space<vmem>>, %arg13: memref<1x1xf32, #tpu.memory_space<vmem>>, %arg14: memref<16x1xf32, #tpu.memory_space<vmem>>) attributes {dimension_semantics = [#tpu.dimension_semantics<parallel>], iteration_bounds = array<i64: 1>, scalar_prefetch = 0 : i64, scratch_operands = 0 : i64, tpu.core_type = #tpu.core_type<tc>, window_params = [{transform_indices = @transform_0, window_bounds = array<i64: 16, 64>}, {pipeline_mode = #tpu.pipeline_mode<synchronous>, transform_indices = @transform_1, window_bounds = array<i64: 64, 512>}, {pipeline_mode = #tpu.pipeline_mode<synchronous>, transform_indices = @transform_2, window_bounds = array<i64: 1, 512>}, {pipeline_mode = #tpu.pipeline_mode<synchronous>, transform_indices = @transform_3, window_bounds = array<i64: 512, 512>}, {pipeline_mode = #tpu.pipeline_mode<synchronous>, transform_indices = @transform_4, window_bounds = array<i64: 1, 512>}, {pipeline_mode = #tpu.pipeline_mode<synchronous>, transform_indices = @transform_5, window_bounds = array<i64: 512, 512>}, {pipeline_mode = #tpu.pipeline_mode<synchronous>, transform_indices = @transform_6, window_bounds = array<i64: 1, 512>}, {pipeline_mode = #tpu.pipeline_mode<synchronous>, transform_indices = @transform_7, window_bounds = array<i64: 512, 512>}, {pipeline_mode = #tpu.pipeline_mode<synchronous>, transform_indices = @transform_8, window_bounds = array<i64: 1, 512>}, {pipeline_mode = #tpu.pipeline_mode<synchronous>, transform_indices = @transform_9, window_bounds = array<i64: 512, 512>}, {pipeline_mode = #tpu.pipeline_mode<synchronous>, transform_indices = @transform_10, window_bounds = array<i64: 1, 512>}, {pipeline_mode = #tpu.pipeline_mode<synchronous>, transform_indices = @transform_11, window_bounds = array<i64: 1, 512>}, {pipeline_mode = #tpu.pipeline_mode<synchronous>, transform_indices = @transform_12, window_bounds = array<i64: 1, 1>}, {transform_indices = @transform_13, window_bounds = array<i64: 16, 1>}]} {
    %c0 = arith.constant 0 : index
    %c0_0 = arith.constant 0 : index
    %0 = vector.load %arg1[%c0, %c0_0] : memref<16x64xbf16, #tpu.memory_space<vmem>>, vector<16x64xbf16>
    %c0_1 = arith.constant 0 : index
    %c0_2 = arith.constant 0 : index
    %1 = vector.load %arg2[%c0_1, %c0_2] : memref<64x512xbf16, #tpu.memory_space<vmem>>, vector<64x512xbf16>
    %cst = arith.constant dense<0.000000e+00> : vector<16x512xf32>
    %2 = tpu.matmul %0, %1, %cst {dimension_numbers = #tpu.dot_dimension_numbers<[1], [0], [0], [1], [0, 0, 1, 1], [], []>} : vector<16x64xbf16>, vector<64x512xbf16>, vector<16x512xf32> -> vector<16x512xf32>
    %c0_3 = arith.constant 0 : index
    %c0_4 = arith.constant 0 : index
    %3 = vector.load %arg3[%c0_3, %c0_4] : memref<1x512xf32, #tpu.memory_space<vmem>>, vector<1x512xf32>
    %4 = vector.broadcast %3 : vector<1x512xf32> to vector<16x512xf32>
    %5 = arith.addf %2, %4 : vector<16x512xf32>
    %6 = arith.truncf %5 : vector<16x512xf32> to vector<16x512xbf16>
    %c0_5 = arith.constant 0 : index
    %c0_6 = arith.constant 0 : index
    %7 = vector.load %arg4[%c0_5, %c0_6] : memref<512x512xbf16, #tpu.memory_space<vmem>>, vector<512x512xbf16>
    %cst_7 = arith.constant dense<0.000000e+00> : vector<16x512xf32>
    %8 = tpu.matmul %6, %7, %cst_7 {dimension_numbers = #tpu.dot_dimension_numbers<[1], [0], [0], [1], [0, 0, 1, 1], [], []>} : vector<16x512xbf16>, vector<512x512xbf16>, vector<16x512xf32> -> vector<16x512xf32>
    %c0_8 = arith.constant 0 : index
    %c0_9 = arith.constant 0 : index
    %9 = vector.load %arg5[%c0_8, %c0_9] : memref<1x512xf32, #tpu.memory_space<vmem>>, vector<1x512xf32>
    %10 = vector.broadcast %9 : vector<1x512xf32> to vector<16x512xf32>
    %11 = arith.addf %8, %10 : vector<16x512xf32>
    %cst_10 = arith.constant 0.000000e+00 : f32
    %12 = vector.broadcast %cst_10 : f32 to vector<16x512xf32>
    %13 = arith.maximumf %11, %12 : vector<16x512xf32>
    %14 = arith.truncf %13 : vector<16x512xf32> to vector<16x512xbf16>
    %c0_11 = arith.constant 0 : index
    %c0_12 = arith.constant 0 : index
    %15 = vector.load %arg6[%c0_11, %c0_12] : memref<512x512xbf16, #tpu.memory_space<vmem>>, vector<512x512xbf16>
    %cst_13 = arith.constant dense<0.000000e+00> : vector<16x512xf32>
    %16 = tpu.matmul %14, %15, %cst_13 {dimension_numbers = #tpu.dot_dimension_numbers<[1], [0], [0], [1], [0, 0, 1, 1], [], []>} : vector<16x512xbf16>, vector<512x512xbf16>, vector<16x512xf32> -> vector<16x512xf32>
    %c0_14 = arith.constant 0 : index
    %c0_15 = arith.constant 0 : index
    %17 = vector.load %arg7[%c0_14, %c0_15] : memref<1x512xf32, #tpu.memory_space<vmem>>, vector<1x512xf32>
    %18 = vector.broadcast %17 : vector<1x512xf32> to vector<16x512xf32>
    %19 = arith.addf %16, %18 : vector<16x512xf32>
    %cst_16 = arith.constant 0.000000e+00 : f32
    %20 = vector.broadcast %cst_16 : f32 to vector<16x512xf32>
    %21 = arith.maximumf %19, %20 : vector<16x512xf32>
    %22 = arith.truncf %21 : vector<16x512xf32> to vector<16x512xbf16>
    %c0_17 = arith.constant 0 : index
    %c0_18 = arith.constant 0 : index
    %23 = vector.load %arg8[%c0_17, %c0_18] : memref<512x512xbf16, #tpu.memory_space<vmem>>, vector<512x512xbf16>
    %cst_19 = arith.constant dense<0.000000e+00> : vector<16x512xf32>
    %24 = tpu.matmul %22, %23, %cst_19 {dimension_numbers = #tpu.dot_dimension_numbers<[1], [0], [0], [1], [0, 0, 1, 1], [], []>} : vector<16x512xbf16>, vector<512x512xbf16>, vector<16x512xf32> -> vector<16x512xf32>
    %c0_20 = arith.constant 0 : index
    %c0_21 = arith.constant 0 : index
    %25 = vector.load %arg9[%c0_20, %c0_21] : memref<1x512xf32, #tpu.memory_space<vmem>>, vector<1x512xf32>
    %26 = vector.broadcast %25 : vector<1x512xf32> to vector<16x512xf32>
    %27 = arith.addf %24, %26 : vector<16x512xf32>
    %cst_22 = arith.constant 0.000000e+00 : f32
    %28 = vector.broadcast %cst_22 : f32 to vector<16x512xf32>
    %29 = arith.maximumf %27, %28 : vector<16x512xf32>
    %30 = arith.truncf %29 : vector<16x512xf32> to vector<16x512xbf16>
    %c0_23 = arith.constant 0 : index
    %c0_24 = arith.constant 0 : index
    %31 = vector.load %arg10[%c0_23, %c0_24] : memref<512x512xbf16, #tpu.memory_space<vmem>>, vector<512x512xbf16>
    %cst_25 = arith.constant dense<0.000000e+00> : vector<16x512xf32>
    %32 = tpu.matmul %30, %31, %cst_25 {dimension_numbers = #tpu.dot_dimension_numbers<[1], [0], [0], [1], [0, 0, 1, 1], [], []>} : vector<16x512xbf16>, vector<512x512xbf16>, vector<16x512xf32> -> vector<16x512xf32>
    %c0_26 = arith.constant 0 : index
    %c0_27 = arith.constant 0 : index
    %33 = vector.load %arg11[%c0_26, %c0_27] : memref<1x512xf32, #tpu.memory_space<vmem>>, vector<1x512xf32>
    %34 = vector.broadcast %33 : vector<1x512xf32> to vector<16x512xf32>
    %35 = arith.addf %32, %34 : vector<16x512xf32>
    %cst_28 = arith.constant 0.000000e+00 : f32
    %36 = vector.broadcast %cst_28 : f32 to vector<16x512xf32>
    %37 = arith.maximumf %35, %36 : vector<16x512xf32>
    %38 = arith.truncf %37 : vector<16x512xf32> to vector<16x512xbf16>
    %39 = arith.extf %38 : vector<16x512xbf16> to vector<16x512xf32>
    %c0_29 = arith.constant 0 : index
    %c0_30 = arith.constant 0 : index
    %40 = vector.load %arg12[%c0_29, %c0_30] : memref<1x512xbf16, #tpu.memory_space<vmem>>, vector<1x512xbf16>
    %41 = arith.extf %40 : vector<1x512xbf16> to vector<1x512xf32>
    %42 = vector.broadcast %41 : vector<1x512xf32> to vector<16x512xf32>
    %43 = arith.mulf %39, %42 : vector<16x512xf32>
    %cst_31 = arith.constant dense<0.000000e+00> : vector<16xf32>
    %44 = vector.multi_reduction <add>, %43, %cst_31 [1] : vector<16x512xf32> to vector<16xf32>
    %45 = vector.shape_cast %44 : vector<16xf32> to vector<16x1xf32>
    %c0_32 = arith.constant 0 : index
    %c0_33 = arith.constant 0 : index
    %46 = vector.load %arg13[%c0_32, %c0_33] : memref<1x1xf32, #tpu.memory_space<vmem>>, vector<1x1xf32>
    %47 = vector.broadcast %46 : vector<1x1xf32> to vector<16x1xf32>
    %48 = arith.addf %45, %47 : vector<16x1xf32>
    %c0_34 = arith.constant 0 : index
    %c0_35 = arith.constant 0 : index
    %49 = vector.load %arg14[%c0_34, %c0_35] : memref<16x1xf32, #tpu.memory_space<vmem>>, vector<16x1xf32>
    tpu.vector_store %arg14[%c0_34, %c0_35], %48 {strides = array<i32>} : memref<16x1xf32, #tpu.memory_space<vmem>>, vector<16x1xf32>,
    return
  }
  func.func @transform_0(%arg0: i32) -> (i32, i32) {
    %c0_i32 = arith.constant 0 : i32
    %c0_i32_0 = arith.constant 0 : i32
    return %arg0, %c0_i32 : i32, i32
  }
  func.func @transform_1(%arg0: i32) -> (i32, i32) {
    %c0_i32 = arith.constant 0 : i32
    %c0_i32_0 = arith.constant 0 : i32
    %c0_i32_1 = arith.constant 0 : i32
    return %c0_i32, %c0_i32_0 : i32, i32
  }
  func.func @transform_2(%arg0: i32) -> (i32, i32) {
    %c0_i32 = arith.constant 0 : i32
    %c0_i32_0 = arith.constant 0 : i32
    %c0_i32_1 = arith.constant 0 : i32
    return %c0_i32, %c0_i32_0 : i32, i32
  }
  func.func @transform_3(%arg0: i32) -> (i32, i32) {
    %c0_i32 = arith.constant 0 : i32
    %c0_i32_0 = arith.constant 0 : i32
    %c0_i32_1 = arith.constant 0 : i32
    return %c0_i32, %c0_i32_0 : i32, i32
  }
  func.func @transform_4(%arg0: i32) -> (i32, i32) {
    %c0_i32 = arith.constant 0 : i32
    %c0_i32_0 = arith.constant 0 : i32
    %c0_i32_1 = arith.constant 0 : i32
    return %c0_i32, %c0_i32_0 : i32, i32
  }
  func.func @transform_5(%arg0: i32) -> (i32, i32) {
    %c0_i32 = arith.constant 0 : i32
    %c0_i32_0 = arith.constant 0 : i32
    %c0_i32_1 = arith.constant 0 : i32
    return %c0_i32, %c0_i32_0 : i32, i32
  }
  func.func @transform_6(%arg0: i32) -> (i32, i32) {
    %c0_i32 = arith.constant 0 : i32
    %c0_i32_0 = arith.constant 0 : i32
    %c0_i32_1 = arith.constant 0 : i32
    return %c0_i32, %c0_i32_0 : i32, i32
  }
  func.func @transform_7(%arg0: i32) -> (i32, i32) {
    %c0_i32 = arith.constant 0 : i32
    %c0_i32_0 = arith.constant 0 : i32
    %c0_i32_1 = arith.constant 0 : i32
    return %c0_i32, %c0_i32_0 : i32, i32
  }
  func.func @transform_8(%arg0: i32) -> (i32, i32) {
    %c0_i32 = arith.constant 0 : i32
    %c0_i32_0 = arith.constant 0 : i32
    %c0_i32_1 = arith.constant 0 : i32
    return %c0_i32, %c0_i32_0 : i32, i32
  }
  func.func @transform_9(%arg0: i32) -> (i32, i32) {
    %c0_i32 = arith.constant 0 : i32
    %c0_i32_0 = arith.constant 0 : i32
    %c0_i32_1 = arith.constant 0 : i32
    return %c0_i32, %c0_i32_0 : i32, i32
  }
  func.func @transform_10(%arg0: i32) -> (i32, i32) {
    %c0_i32 = arith.constant 0 : i32
    %c0_i32_0 = arith.constant 0 : i32
    %c0_i32_1 = arith.constant 0 : i32
    return %c0_i32, %c0_i32_0 : i32, i32
  }
  func.func @transform_11(%arg0: i32) -> (i32, i32) {
    %c0_i32 = arith.constant 0 : i32
    %c0_i32_0 = arith.constant 0 : i32
    %c0_i32_1 = arith.constant 0 : i32
    return %c0_i32, %c0_i32_0 : i32, i32
  }
  func.func @transform_12(%arg0: i32) -> (i32, i32) {
    %c0_i32 = arith.constant 0 : i32
    %c0_i32_0 = arith.constant 0 : i32
    %c0_i32_1 = arith.constant 0 : i32
    return %c0_i32, %c0_i32_0 : i32, i32
  }
  func.func @transform_13(%arg0: i32) -> (i32, i32) {
    %c0_i32 = arith.constant 0 : i32
    %c0_i32_0 = arith.constant 0 : i32
    return %arg0, %c0_i32 : i32, i32
  }
}

</mosaic_0001>

<llo_original>
// kernel: tpu_custom_call.1
$region0: #{tpu_custom_call.1}
  #allocation0 [shape = 'u32[]', space=smem, size = 0x4, offset = 0x4, fixed_abs, tag = 'smem constant byte address 0x4 - core index']
  #allocation1 [shape = 'u32[72,128]{1,0:T(1,128)}', space=vmem, size = 0x9000, scoped, tag = 'internal scratch']
  #allocation2 [shape = 'f32[1,1]{1,0:T(1,128)S(1)}', space=vmem, size = 0x200, scoped, tag = 'scoped memory for tpu_custom_call.1']
  %s0 = inlined_call_operand.hbm [shape: bf16[16,64], index: 0, kind: input, shape index: {}]
  %s1 = inlined_call_operand.hbm [shape: bf16[64,512], index: 1, kind: input, shape index: {}]
  %s2 = inlined_call_operand.hbm [shape: f32[1,512], index: 2, kind: input, shape index: {}]
  %s3 = inlined_call_operand.hbm [shape: bf16[512,512], index: 3, kind: input, shape index: {}]
  %s4 = inlined_call_operand.vmem [shape: f32[1,512], index: 4, kind: input, shape index: {}]
  %s5 = inlined_call_operand.hbm [shape: bf16[512,512], index: 5, kind: input, shape index: {}]
  %s6 = inlined_call_operand.hbm [shape: f32[1,512], index: 6, kind: input, shape index: {}]
  %s7 = inlined_call_operand.hbm [shape: bf16[512,512], index: 7, kind: input, shape index: {}]
  %s8 = inlined_call_operand.vmem [shape: f32[1,512], index: 8, kind: input, shape index: {}]
  %s9 = inlined_call_operand.hbm [shape: bf16[512,512], index: 9, kind: input, shape index: {}]
  %s10 = inlined_call_operand.hbm [shape: f32[1,512], index: 10, kind: input, shape index: {}]
  %s11 = inlined_call_operand.vmem [shape: bf16[1,512], index: 11, kind: input, shape index: {}]
  %s12 = inlined_call_operand.<no memory space> [shape: f32[1,1], index: 12, kind: input, shape index: {}]
  %s13 = inlined_call_operand.vmem [shape: f32[16,1], index: 13, kind: output, shape index: {}]
  %s14 = sld [smem:[#allocation0]]
  $region98: #{tpu_custom_call.1} parent=0
    _
  %s16 = ssub.s32 1, %s14
  %s17 = scalar_select 0, %s16, %s14
  %v18 = vstv %s12
  %19 = vst [vmem:[#allocation2] sm:$0x1] %v18
  $region1: #{tpu_custom_call.1} parent=0
    #allocation3 [shape = 'u8[4096]{0}', space=vmem, size = 0x1000, scoped, tag = 'input window, operand 0, single buffered']
    #allocation4 [shape = 's32[1]{0}', space=sflag, size = 0x4, scoped, tag = 'scoped memory for tpu_custom_call.1']
    #allocation5 [shape = 'u8[65536]{0}', space=vmem, size = 0x10000, scoped, tag = 'input window, operand 1, single buffered']
    #allocation6 [shape = 's32[1]{0}', space=sflag, size = 0x4, scoped, tag = 'scoped memory for tpu_custom_call.1']
    #allocation7 [shape = 'u8[2048]{0}', space=vmem, size = 0x800, scoped, tag = 'input window, operand 2, single buffered']
    #allocation8 [shape = 'u8[524288]{0}', space=vmem, size = 0x80000, scoped, tag = 'input window, operand 3, single buffered']
    #allocation9 [shape = 's32[1]{0}', space=sflag, size = 0x4, scoped, tag = 'scoped memory for tpu_custom_call.1']
    #allocation10 [shape = 'u8[524288]{0}', space=vmem, size = 0x80000, scoped, tag = 'input window, operand 5, single buffered']
    #allocation11 [shape = 'u8[2048]{0}', space=vmem, size = 0x800, scoped, tag = 'input window, operand 6, single buffered']
    #allocation12 [shape = 's32[1]{0}', space=sflag, size = 0x4, scoped, tag = 'scoped memory for tpu_custom_call.1']
    #allocation13 [shape = 'u8[524288]{0}', space=vmem, size = 0x80000, scoped, tag = 'input window, operand 7, single buffered']
    #allocation14 [shape = 'u8[524288]{0}', space=vmem, size = 0x80000, scoped, tag = 'input window, operand 9, single buffered']
    #allocation15 [shape = 's32[1]{0}', space=sflag, size = 0x4, scoped, tag = 'scoped memory for tpu_custom_call.1']
    #allocation16 [shape = 'u8[2048]{0}', space=vmem, size = 0x800, scoped, tag = 'input window, operand 10, single buffered']
    %20 = vsyncpa [#allocation4], 0
    %21 = vsyncpa [#allocation6], 0
    %22 = vsyncpa [#allocation9], 0
    %23 = vsyncpa [#allocation12], 0
    %24 = vsyncpa [#allocation15], 0
    // Predicated region
    $region2: #{tpu_custom_call.1} parent=1 // pred_check
      _
    $region3: #{tpu_custom_call.1} parent=1 // pred_check_branch
      %26 = sbr.rel (0) target = $region5
    $region4: #{tpu_custom_call.1} parent=1 // pred_region
      %28 = vsyncadd [#allocation4], 0
      %s29 = sshll.u32 %s0, 4
      %s30 = int_to_ptr.hbm [resolvable:$true] %s29
      %s31 = sshll.u32 [#allocation3], 4
      %s32 = int_to_ptr.vmem [resolvable:$true] %s31
      %37 = dma.hbm_to_vmem [thread:$0]  %s30, 128, %s32, [#allocation4], 64, 64, 4
    $region5: #{tpu_custom_call.1} parent=1 // pred_fallthru
      _
    // Predicated region
    $region6: #{tpu_custom_call.1} parent=1 // pred_check
      _
    $region7: #{tpu_custom_call.1} parent=1 // pred_check_branch
      %39 = sbr.rel (0) target = $region9
    $region8: #{tpu_custom_call.1} parent=1 // pred_region
      %41 = vsyncadd [#allocation6], 0
      %s42 = sshll.u32 %s1, 4
      %s43 = int_to_ptr.hbm [resolvable:$true] %s42
      %s44 = sshll.u32 [#allocation5], 4
      %s45 = int_to_ptr.vmem [resolvable:$true] %s44
      %50 = dma.hbm_to_vmem [thread:$0]  %s43, 2048, %s45, [#allocation6], 256, 256, 16
    $region9: #{tpu_custom_call.1} parent=1 // pred_fallthru
      _
    // Predicated region
    $region10: #{tpu_custom_call.1} parent=1 // pred_check
      _
    $region11: #{tpu_custom_call.1} parent=1 // pred_check_branch
      %52 = sbr.rel (0) target = $region13
    $region12: #{tpu_custom_call.1} parent=1 // pred_region
      %54 = vsyncadd [#allocation6], 0
      %s56 = sshll.u32 %s2, 4
      %s57 = int_to_ptr.hbm [resolvable:$true] %s56
      %s58 = sshll.u32 [#allocation7], 4
      %s59 = int_to_ptr.vmem [resolvable:$true] %s58
      %61 = dma.hbm_to_vmem [thread:$0]  %s57, 64, %s59, [#allocation6]
    $region13: #{tpu_custom_call.1} parent=1 // pred_fallthru
      _
    // Predicated region
    $region14: #{tpu_custom_call.1} parent=1 // pred_check
      _
    $region15: #{tpu_custom_call.1} parent=1 // pred_check_branch
      %63 = sbr.rel (0) target = $region17
    $region16: #{tpu_custom_call.1} parent=1 // pred_region
      %65 = vsyncadd [#allocation9], 0
      %s66 = sshll.u32 %s3, 4
      %s67 = int_to_ptr.hbm [resolvable:$true] %s66
      %s68 = sshll.u32 [#allocation8], 4
      %s69 = int_to_ptr.vmem [resolvable:$true] %s68
      %74 = dma.hbm_to_vmem [thread:$0]  %s67, 16384, %s69, [#allocation9], 256, 256, 16
    $region17: #{tpu_custom_call.1} parent=1 // pred_fallthru
      _
    // Predicated region
    $region18: #{tpu_custom_call.1} parent=1 // pred_check
      _
    $region19: #{tpu_custom_call.1} parent=1 // pred_check_branch
      %76 = sbr.rel (0) target = $region21
    $region20: #{tpu_custom_call.1} parent=1 // pred_region
      _
    $region21: #{tpu_custom_call.1} parent=1 // pred_fallthru
      _
    // Predicated region
    $region22: #{tpu_custom_call.1} parent=1 // pred_check
      _
    $region23: #{tpu_custom_call.1} parent=1 // pred_check_branch
      %78 = sbr.rel (0) target = $region25
    $region24: #{tpu_custom_call.1} parent=1 // pred_region
      %80 = vsyncadd [#allocation9], 0
      %s81 = sshll.u32 %s5, 4
      %s82 = int_to_ptr.hbm [resolvable:$true] %s81
      %s83 = sshll.u32 [#allocation10], 4
      %s84 = int_to_ptr.vmem [resolvable:$true] %s83
      %89 = dma.hbm_to_vmem [thread:$0]  %s82, 16384, %s84, [#allocation9], 256, 256, 16
    $region25: #{tpu_custom_call.1} parent=1 // pred_fallthru
      _
    // Predicated region
    $region26: #{tpu_custom_call.1} parent=1 // pred_check
      _
    $region27: #{tpu_custom_call.1} parent=1 // pred_check_branch
      %91 = sbr.rel (0) target = $region29
    $region28: #{tpu_custom_call.1} parent=1 // pred_region
      %93 = vsyncadd [#allocation12], 0
      %s95 = sshll.u32 %s6, 4
      %s96 = int_to_ptr.hbm [resolvable:$true] %s95
      %s97 = sshll.u32 [#allocation11], 4
      %s98 = int_to_ptr.vmem [resolvable:$true] %s97
      %100 = dma.hbm_to_vmem [thread:$0]  %s96, 64, %s98, [#allocation12]
    $region29: #{tpu_custom_call.1} parent=1 // pred_fallthru
      _
    // Predicated region
    $region30: #{tpu_custom_call.1} parent=1 // pred_check
      _
    $region31: #{tpu_custom_call.1} parent=1 // pred_check_branch
      %102 = sbr.rel (0) target = $region33
    $region32: #{tpu_custom_call.1} parent=1 // pred_region
      %104 = vsyncadd [#allocation12], 0
      %s105 = sshll.u32 %s7, 4
      %s106 = int_to_ptr.hbm [resolvable:$true] %s105
      %s107 = sshll.u32 [#allocation13], 4
      %s108 = int_to_ptr.vmem [resolvable:$true] %s107
      %113 = dma.hbm_to_vmem [thread:$0]  %s106, 16384, %s108, [#allocation12], 256, 256, 16
    $region33: #{tpu_custom_call.1} parent=1 // pred_fallthru
      _
    // Predicated region
    $region34: #{tpu_custom_call.1} parent=1 // pred_check
      _
    $region35: #{tpu_custom_call.1} parent=1 // pred_check_branch
      %115 = sbr.rel (0) target = $region37
    $region36: #{tpu_custom_call.1} parent=1 // pred_region
      _
    $region37: #{tpu_custom_call.1} parent=1 // pred_fallthru
      _
    // Predicated region
    $region38: #{tpu_custom_call.1} parent=1 // pred_check
      _
    $region39: #{tpu_custom_call.1} parent=1 // pred_check_branch
      %117 = sbr.rel (0) target = $region41
    $region40: #{tpu_custom_call.1} parent=1 // pred_region
      %119 = vsyncadd [#allocation15], 0
      %s120 = sshll.u32 %s9, 4
      %s121 = int_to_ptr.hbm [resolvable:$true] %s120
      %s122 = sshll.u32 [#allocation14], 4
      %s123 = int_to_ptr.vmem [resolvable:$true] %s122
      %128 = dma.hbm_to_vmem [thread:$0]  %s121, 16384, %s123, [#allocation15], 256, 256, 16
    $region41: #{tpu_custom_call.1} parent=1 // pred_fallthru
      _
    // Predicated region
    $region42: #{tpu_custom_call.1} parent=1 // pred_check
      _
    $region43: #{tpu_custom_call.1} parent=1 // pred_check_branch
      %130 = sbr.rel (0) target = $region45
    $region44: #{tpu_custom_call.1} parent=1 // pred_region
      %132 = vsyncadd [#allocation15], 0
      %s134 = sshll.u32 %s10, 4
      %s135 = int_to_ptr.hbm [resolvable:$true] %s134
      %s136 = sshll.u32 [#allocation16], 4
      %s137 = int_to_ptr.vmem [resolvable:$true] %s136
      %139 = dma.hbm_to_vmem [thread:$0]  %s135, 64, %s137, [#allocation15]
    $region45: #{tpu_custom_call.1} parent=1 // pred_fallthru
      _
    // Predicated region
    $region46: #{tpu_custom_call.1} parent=1 // pred_check
      _
    $region47: #{tpu_custom_call.1} parent=1 // pred_check_branch
      %141 = sbr.rel (0) target = $region49
    $region48: #{tpu_custom_call.1} parent=1 // pred_region
      _
    $region49: #{tpu_custom_call.1} parent=1 // pred_fallthru
      _
    // Predicated region
    $region50: #{tpu_custom_call.1} parent=1 // pred_check
      _
    $region51: #{tpu_custom_call.1} parent=1 // pred_check_branch
      %143 = sbr.rel (0) target = $region53
    $region52: #{tpu_custom_call.1} parent=1 // pred_region
      _
    $region53: #{tpu_custom_call.1} parent=1 // pred_fallthru
      _
    // Predicated region
    $region54: #{tpu_custom_call.1} parent=1 // pred_check
      _
    $region55: #{tpu_custom_call.1} parent=1 // pred_check_branch
      %145 = sbr.rel (0) target = $region57
    $region56: #{tpu_custom_call.1} parent=1 // pred_region
      %147 = dma.done [#allocation4], 128
    $region57: #{tpu_custom_call.1} parent=1 // pred_fallthru
      _
    // Predicated region
    $region58: #{tpu_custom_call.1} parent=1 // pred_check
      _
    $region59: #{tpu_custom_call.1} parent=1 // pred_check_branch
      %149 = sbr.rel (0) target = $region61
    $region60: #{tpu_custom_call.1} parent=1 // pred_region
      %151 = dma.done [#allocation6], 2048
    $region61: #{tpu_custom_call.1} parent=1 // pred_fallthru
      _
    // Predicated region
    $region62: #{tpu_custom_call.1} parent=1 // pred_check
      _
    $region63: #{tpu_custom_call.1} parent=1 // pred_check_branch
      %153 = sbr.rel (0) target = $region65
    $region64: #{tpu_custom_call.1} parent=1 // pred_region
      %155 = dma.done [#allocation6], 64
    $region65: #{tpu_custom_call.1} parent=1 // pred_fallthru
      _
    // Predicated region
    $region66: #{tpu_custom_call.1} parent=1 // pred_check
      _
    $region67: #{tpu_custom_call.1} parent=1 // pred_check_branch
      %157 = sbr.rel (0) target = $region69
    $region68: #{tpu_custom_call.1} parent=1 // pred_region
      %159 = dma.done [#allocation9], 16384
    $region69: #{tpu_custom_call.1} parent=1 // pred_fallthru
      _
    // Predicated region
    $region70: #{tpu_custom_call.1} parent=1 // pred_check
      _
    $region71: #{tpu_custom_call.1} parent=1 // pred_check_branch
      %161 = sbr.rel (0) target = $region73
    $region72: #{tpu_custom_call.1} parent=1 // pred_region
      %163 = dma.done [#allocation9], 16384
    $region73: #{tpu_custom_call.1} parent=1 // pred_fallthru
      _
    // Predicated region
    $region74: #{tpu_custom_call.1} parent=1 // pred_check
      _
    $region75: #{tpu_custom_call.1} parent=1 // pred_check_branch
      %165 = sbr.rel (0) target = $region77
    $region76: #{tpu_custom_call.1} parent=1 // pred_region
      %167 = dma.done [#allocation12], 64
    $region77: #{tpu_custom_call.1} parent=1 // pred_fallthru
      _
    // Predicated region
    $region78: #{tpu_custom_call.1} parent=1 // pred_check
      _
    $region79: #{tpu_custom_call.1} parent=1 // pred_check_branch
      %169 = sbr.rel (0) target = $region81
    $region80: #{tpu_custom_call.1} parent=1 // pred_region
      %171 = dma.done [#allocation12], 16384
    $region81: #{tpu_custom_call.1} parent=1 // pred_fallthru
      _
    // Predicated region
    $region82: #{tpu_custom_call.1} parent=1 // pred_check
      _
    $region83: #{tpu_custom_call.1} parent=1 // pred_check_branch
      %173 = sbr.rel (0) target = $region85
    $region84: #{tpu_custom_call.1} parent=1 // pred_region
      %175 = dma.done [#allocation15], 16384
    $region85: #{tpu_custom_call.1} parent=1 // pred_fallthru
      _
    // Predicated region
    $region86: #{tpu_custom_call.1} parent=1 // pred_check
      _
    $region87: #{tpu_custom_call.1} parent=1 // pred_check_branch
      %177 = sbr.rel (0) target = $region89
    $region88: #{tpu_custom_call.1} parent=1 // pred_region
      %179 = dma.done [#allocation15], 64
    $region89: #{tpu_custom_call.1} parent=1 // pred_fallthru
      _
    %v181 = vld [vmem:[#allocation3] sm:$0xf]
    %v182 = vld [vmem:[#allocation3 + $0x4] sm:$0xf]
    %v183 = vld [vmem:[#allocation5] sm:$0xff]
    %v184 = vld [vmem:[#allocation5 + $0x8] sm:$0xff]
    %v185 = vld [vmem:[#allocation5 + $0x10] sm:$0xff]
    %v186 = vld [vmem:[#allocation5 + $0x18] sm:$0xff]
    %v187 = vld [vmem:[#allocation5 + $0x20] sm:$0xff]
    %v188 = vld [vmem:[#allocation5 + $0x28] sm:$0xff]
    %v189 = vld [vmem:[#allocation5 + $0x30] sm:$0xff]
    %v190 = vld [vmem:[#allocation5 + $0x38] sm:$0xff]
    %v191 = vld [vmem:[#allocation5 + $0x40] sm:$0xff]
    %v192 = vld [vmem:[#allocation5 + $0x48] sm:$0xff]
    %v193 = vld [vmem:[#allocation5 + $0x50] sm:$0xff]
    %v194 = vld [vmem:[#allocation5 + $0x58] sm:$0xff]
    %v195 = vld [vmem:[#allocation5 + $0x60] sm:$0xff]
    %v196 = vld [vmem:[#allocation5 + $0x68] sm:$0xff]
    %v197 = vld [vmem:[#allocation5 + $0x70] sm:$0xff]
    %v198 = vld [vmem:[#allocation5 + $0x78] sm:$0xff]
    %v199 = vld [vmem:[#allocation7] sm:$0xf]
    %v201 = vperm.slane %v199, 0
    %v202 = vperm.slane %v199, 1
    %v203 = vperm.slane %v199, 2
    %v204 = vperm.slane %v199, 3
    %v211 = vunpack.c.l.b16 %v181
    %v212 = vunpack.c.l.b16 %v182
    %v213 = vpack.c.b16 %v212, %v211
    %v230 = vunpack.c.l.b16 %v183
    %v231 = vunpack.c.h.b16 %v183
    %v232 = vunpack.c.l.b16 %v184
    %v233 = vunpack.c.h.b16 %v184
    %v234 = vunpack.c.l.b16 %v185
    %v235 = vunpack.c.h.b16 %v185
    %v236 = vunpack.c.l.b16 %v186
    %v237 = vunpack.c.h.b16 %v186
    %v238 = vunpack.c.l.b16 %v187
    %v239 = vunpack.c.h.b16 %v187
    %v240 = vunpack.c.l.b16 %v188
    %v241 = vunpack.c.h.b16 %v188
    %v242 = vunpack.c.l.b16 %v189
    %v243 = vunpack.c.h.b16 %v189
    %v244 = vunpack.c.l.b16 %v190
    %v245 = vunpack.c.h.b16 %v190
    %v246 = vunpack.c.l.b16 %v191
    %v247 = vunpack.c.h.b16 %v191
    %v248 = vunpack.c.l.b16 %v192
    %v249 = vunpack.c.h.b16 %v192
    %v250 = vunpack.c.l.b16 %v193
    %v251 = vunpack.c.h.b16 %v193
    %v252 = vunpack.c.l.b16 %v194
    %v253 = vunpack.c.h.b16 %v194
    %v254 = vunpack.c.l.b16 %v195
    %v255 = vunpack.c.h.b16 %v195
    %v256 = vunpack.c.l.b16 %v196
    %v257 = vunpack.c.h.b16 %v196
    %v258 = vunpack.c.l.b16 %v197
    %v259 = vunpack.c.h.b16 %v197
    %v260 = vunpack.c.l.b16 %v198
    %v261 = vunpack.c.h.b16 %v198
    %v262 = vpack.c.b16 %v234, %v230
    %v263 = vpack.c.b16 %v235, %v231
    %v264 = vpack.c.b16 %v236, %v232
    %v265 = vpack.c.b16 %v237, %v233
    %v266 = vpack.c.b16 %v242, %v238
    %v267 = vpack.c.b16 %v243, %v239
    %v268 = vpack.c.b16 %v244, %v240
    %v269 = vpack.c.b16 %v245, %v241
    %v270 = vpack.c.b16 %v250, %v246
    %v271 = vpack.c.b16 %v251, %v247
    %v272 = vpack.c.b16 %v252, %v248
    %v273 = vpack.c.b16 %v253, %v249
    %v274 = vpack.c.b16 %v258, %v254
    %v275 = vpack.c.b16 %v259, %v255
    %v276 = vpack.c.b16 %v260, %v256
    %v277 = vpack.c.b16 %v261, %v257
    %vm294 = vcmask 523264
    %v296 = vsel %vm294, %v213, 0
    %298 = vmatpush.bf16.msra.mxu0 0
    %299 = vmatpush.bf16.msra.mxu0 0
    %300 = vmatpush.bf16.msra.mxu0 0
    %301 = vmatpush.bf16.msra.mxu0 0
    %302 = vmatpush.bf16.msra.mxu0 %v274
    %303 = vmatpush.bf16.msra.mxu0 %v270
    %304 = vmatpush.bf16.msra.mxu0 %v266
    %305 = vmatpush.bf16.msra.mxu0 %v262
    %306 = vmatmul.bf16.gmra.mxu0 %v296
    %v307 = vpop.f32.mrf.mxu0
    %v308 = vadd.f32 %v201, %v307
    %v309 = vpop.f32.mrf.mxu0
    %v310 = vadd.f32 %v201, %v309
    %311 = vdwg.mxu0
    %312 = vmatpush.bf16.msra.mxu0 0
    %313 = vmatpush.bf16.msra.mxu0 0
    %314 = vmatpush.bf16.msra.mxu0 0
    %315 = vmatpush.bf16.msra.mxu0 0
    %316 = vmatpush.bf16.msra.mxu0 %v275
    %317 = vmatpush.bf16.msra.mxu0 %v271
    %318 = vmatpush.bf16.msra.mxu0 %v267
    %319 = vmatpush.bf16.msra.mxu0 %v263
    %320 = vmatmul.bf16.gmra.mxu0 %v296
    %v321 = vpop.f32.mrf.mxu0
    %v322 = vadd.f32 %v202, %v321
    %v323 = vpop.f32.mrf.mxu0
    %v324 = vadd.f32 %v202, %v323
    %325 = vdwg.mxu0
    %326 = vmatpush.bf16.msra.mxu0 0
    %327 = vmatpush.bf16.msra.mxu0 0
    %328 = vmatpush.bf16.msra.mxu0 0
    %329 = vmatpush.bf16.msra.mxu0 0
    %330 = vmatpush.bf16.msra.mxu0 %v276
    %331 = vmatpush.bf16.msra.mxu0 %v272
    %332 = vmatpush.bf16.msra.mxu0 %v268
    %333 = vmatpush.bf16.msra.mxu0 %v264
    %334 = vmatmul.bf16.gmra.mxu0 %v296
    %v335 = vpop.f32.mrf.mxu0
    %v336 = vadd.f32 %v203, %v335
    %v337 = vpop.f32.mrf.mxu0
    %v338 = vadd.f32 %v203, %v337
    %339 = vdwg.mxu0
    %340 = vmatpush.bf16.msra.mxu0 0
    %341 = vmatpush.bf16.msra.mxu0 0
    %342 = vmatpush.bf16.msra.mxu0 0
    %343 = vmatpush.bf16.msra.mxu0 0
    %344 = vmatpush.bf16.msra.mxu0 %v277
    %345 = vmatpush.bf16.msra.mxu0 %v273
    %346 = vmatpush.bf16.msra.mxu0 %v269
    %347 = vmatpush.bf16.msra.mxu0 %v265
    %348 = vmatmul.bf16.gmra.mxu0 %v296
    %v349 = vpop.f32.mrf.mxu0
    %v350 = vadd.f32 %v204, %v349
    %v351 = vpop.f32.mrf.mxu0
    %v352 = vadd.f32 %v204, %v351
    %353 = vdwg.mxu0
    %v354 = vpack.c.bf16 %v310, %v308
    %v355 = vpack.c.bf16 %v324, %v322
    %v356 = vpack.c.bf16 %v338, %v336
    %v357 = vpack.c.bf16 %v352, %v350
    %v358 = vld [vmem:[#allocation8] sm:$0xff]
    %v359 = vld [vmem:[#allocation8 + $0x8] sm:$0xff]
    %v360 = vld [vmem:[#allocation8 + $0x10] sm:$0xff]
    %v361 = vld [vmem:[#allocation8 + $0x18] sm:$0xff]
    %v362 = vld [vmem:[#allocation8 + $0x20] sm:$0xff]
    %v363 = vld [vmem:[#allocation8 + $0x28] sm:$0xff]
    %v364 = vld [vmem:[#allocation8 + $0x30] sm:$0xff]
    %v365 = vld [vmem:[#allocation8 + $0x38] sm:$0xff]
    %v366 = vld [vmem:[#allocation8 + $0x40] sm:$0xff]
    %v367 = vld [vmem:[#allocation8 + $0x48] sm:$0xff]
    %v368 = vld [vmem:[#allocation8 + $0x50] sm:$0xff]
    %v369 = vld [vmem:[#allocation8 + $0x58] sm:$0xff]
    %v370 = vld [vmem:[#allocation8 + $0x60] sm:$0xff]
    %v371 = vld [vmem:[#allocation8 + $0x68] sm:$0xff]
    %v372 = vld [vmem:[#allocation8 + $0x70] sm:$0xff]
    %v373 = vld [vmem:[#allocation8 + $0x78] sm:$0xff]
    %v374 = vld [vmem:[#allocation8 + $0x80] sm:$0xff]
    %v375 = vld [vmem:[#allocation8 + $0x88] sm:$0xff]
    %v376 = vld [vmem:[#allocation8 + $0x90] sm:$0xff]
    %v377 = vld [vmem:[#allocation8 + $0x98] sm:$0xff]
    %v378 = vld [vmem:[#allocation8 + $0xa0] sm:$0xff]
    %v379 = vld [vmem:[#allocation8 + $0xa8] sm:$0xff]
    %v380 = vld [vmem:[#allocation8 + $0xb0] sm:$0xff]
    %v381 = vld [vmem:[#allocation8 + $0xb8] sm:$0xff]
    %v382 = vld [vmem:[#allocation8 + $0xc0] sm:$0xff]
    %v383 = vld [vmem:[#allocation8 + $0xc8] sm:$0xff]
    %v384 = vld [vmem:[#allocation8 + $0xd0] sm:$0xff]
    %v385 = vld [vmem:[#allocation8 + $0xd8] sm:$0xff]
    %v386 = vld [vmem:[#allocation8 + $0xe0] sm:$0xff]
    %v387 = vld [vmem:[#allocation8 + $0xe8] sm:$0xff]
    %v388 = vld [vmem:[#allocation8 + $0xf0] sm:$0xff]
    %v389 = vld [vmem:[#allocation8 + $0xf8] sm:$0xff]
    %v390 = vld [vmem:[#allocation8 + $0x100] sm:$0xff]
    %v391 = vld [vmem:[#allocation8 + $0x108] sm:$0xff]
    %v392 = vld [vmem:[#allocation8 + $0x110] sm:$0xff]
    %v393 = vld [vmem:[#allocation8 + $0x118] sm:$0xff]
    %v394 = vld [vmem:[#allocation8 + $0x120] sm:$0xff]
    %v395 = vld [vmem:[#allocation8 + $0x128] sm:$0xff]
    %v396 = vld [vmem:[#allocation8 + $0x130] sm:$0xff]
    %v397 = vld [vmem:[#allocation8 + $0x138] sm:$0xff]
    %v398 = vld [vmem:[#allocation8 + $0x140] sm:$0xff]
    %v399 = vld [vmem:[#allocation8 + $0x148] sm:$0xff]
    %v400 = vld [vmem:[#allocation8 + $0x150] sm:$0xff]
    %v401 = vld [vmem:[#allocation8 + $0x158] sm:$0xff]
    %v402 = vld [vmem:[#allocation8 + $0x160] sm:$0xff]
    %v403 = vld [vmem:[#allocation8 + $0x168] sm:$0xff]
    %v404 = vld [vmem:[#allocation8 + $0x170] sm:$0xff]
    %v405 = vld [vmem:[#allocation8 + $0x178] sm:$0xff]
    %v406 = vld [vmem:[#allocation8 + $0x180] sm:$0xff]
    %v407 = vld [vmem:[#allocation8 + $0x188] sm:$0xff]
    %v408 = vld [vmem:[#allocation8 + $0x190] sm:$0xff]
    %v409 = vld [vmem:[#allocation8 + $0x198] sm:$0xff]
    %v410 = vld [vmem:[#allocation8 + $0x1a0] sm:$0xff]
    %v411 = vld [vmem:[#allocation8 + $0x1a8] sm:$0xff]
    %v412 = vld [vmem:[#allocation8 + $0x1b0] sm:$0xff]
    %v413 = vld [vmem:[#allocation8 + $0x1b8] sm:$0xff]
    %v414 = vld [vmem:[#allocation8 + $0x1c0] sm:$0xff]
    %v415 = vld [vmem:[#allocation8 + $0x1c8] sm:$0xff]
    %v416 = vld [vmem:[#allocation8 + $0x1d0] sm:$0xff]
    %v417 = vld [vmem:[#allocation8 + $0x1d8] sm:$0xff]
    %v418 = vld [vmem:[#allocation8 + $0x1e0] sm:$0xff]
    %v419 = vld [vmem:[#allocation8 + $0x1e8] sm:$0xff]
    %v420 = vld [vmem:[#allocation8 + $0x1f0] sm:$0xff]
    %v421 = vld [vmem:[#allocation8 + $0x1f8] sm:$0xff]
    %v422 = vld [vmem:[#allocation8 + $0x200] sm:$0xff]
    %v423 = vld [vmem:[#allocation8 + $0x208] sm:$0xff]
    %v424 = vld [vmem:[#allocation8 + $0x210] sm:$0xff]
    %v425 = vld [vmem:[#allocation8 + $0x218] sm:$0xff]
    %v426 = vld [vmem:[#allocation8 + $0x220] sm:$0xff]
    %v427 = vld [vmem:[#allocation8 + $0x228] sm:$0xff]
    %v428 = vld [vmem:[#allocation8 + $0x230] sm:$0xff]
    %v429 = vld [vmem:[#allocation8 + $0x238] sm:$0xff]
    %v430 = vld [vmem:[#allocation8 + $0x240] sm:$0xff]
    %v431 = vld [vmem:[#allocation8 + $0x248] sm:$0xff]
    %v432 = vld [vmem:[#allocation8 + $0x250] sm:$0xff]
    %v433 = vld [vmem:[#allocation8 + $0x258] sm:$0xff]
    %v434 = vld [vmem:[#allocation8 + $0x260] sm:$0xff]
    %v435 = vld [vmem:[#allocation8 + $0x268] sm:$0xff]
    %v436 = vld [vmem:[#allocation8 + $0x270] sm:$0xff]
    %v437 = vld [vmem:[#allocation8 + $0x278] sm:$0xff]
    %v438 = vld [vmem:[#allocation8 + $0x280] sm:$0xff]
    %v439 = vld [vmem:[#allocation8 + $0x288] sm:$0xff]
    %v440 = vld [vmem:[#allocation8 + $0x290] sm:$0xff]
    %v441 = vld [vmem:[#allocation8 + $0x298] sm:$0xff]
    %v442 = vld [vmem:[#allocation8 + $0x2a0] sm:$0xff]
    %v443 = vld [vmem:[#allocation8 + $0x2a8] sm:$0xff]
    %v444 = vld [vmem:[#allocation8 + $0x2b0] sm:$0xff]
    %v445 = vld [vmem:[#allocation8 + $0x2b8] sm:$0xff]
    %v446 = vld [vmem:[#allocation8 + $0x2c0] sm:$0xff]
    %v447 = vld [vmem:[#allocation8 + $0x2c8] sm:$0xff]
    %v448 = vld [vmem:[#allocation8 + $0x2d0] sm:$0xff]
    %v449 = vld [vmem:[#allocation8 + $0x2d8] sm:$0xff]
    %v450 = vld [vmem:[#allocation8 + $0x2e0] sm:$0xff]
    %v451 = vld [vmem:[#allocation8 + $0x2e8] sm:$0xff]
    %v452 = vld [vmem:[#allocation8 + $0x2f0] sm:$0xff]
    %v453 = vld [vmem:[#allocation8 + $0x2f8] sm:$0xff]
    %v454 = vld [vmem:[#allocation8 + $0x300] sm:$0xff]
    %v455 = vld [vmem:[#allocation8 + $0x308] sm:$0xff]
    %v456 = vld [vmem:[#allocation8 + $0x310] sm:$0xff]
    %v457 = vld [vmem:[#allocation8 + $0x318] sm:$0xff]
    %v458 = vld [vmem:[#allocation8 + $0x320] sm:$0xff]
    %v459 = vld [vmem:[#allocation8 + $0x328] sm:$0xff]
    %v460 = vld [vmem:[#allocation8 + $0x330] sm:$0xff]
    %v461 = vld [vmem:[#allocation8 + $0x338] sm:$0xff]
    %v462 = vld [vmem:[#allocation8 + $0x340] sm:$0xff]
    %v463 = vld [vmem:[#allocation8 + $0x348] sm:$0xff]
    %v464 = vld [vmem:[#allocation8 + $0x350] sm:$0xff]
    %v465 = vld [vmem:[#allocation8 + $0x358] sm:$0xff]
    %v466 = vld [vmem:[#allocation8 + $0x360] sm:$0xff]
    %v467 = vld [vmem:[#allocation8 + $0x368] sm:$0xff]
    %v468 = vld [vmem:[#allocation8 + $0x370] sm:$0xff]
    %v469 = vld [vmem:[#allocation8 + $0x378] sm:$0xff]
    %v470 = vld [vmem:[#allocation8 + $0x380] sm:$0xff]
    %v471 = vld [vmem:[#allocation8 + $0x388] sm:$0xff]
    %v472 = vld [vmem:[#allocation8 + $0x390] sm:$0xff]
    %v473 = vld [vmem:[#allocation8 + $0x398] sm:$0xff]
    %v474 = vld [vmem:[#allocation8 + $0x3a0] sm:$0xff]
    %v475 = vld [vmem:[#allocation8 + $0x3a8] sm:$0xff]
    %v476 = vld [vmem:[#allocation8 + $0x3b0] sm:$0xff]
    %v477 = vld [vmem:[#allocation8 + $0x3b8] sm:$0xff]
    %v478 = vld [vmem:[#allocation8 + $0x3c0] sm:$0xff]
    %v479 = vld [vmem:[#allocation8 + $0x3c8] sm:$0xff]
    %v480 = vld [vmem:[#allocation8 + $0x3d0] sm:$0xff]
    %v481 = vld [vmem:[#allocation8 + $0x3d8] sm:$0xff]
    %v482 = vld [vmem:[#allocation8 + $0x3e0] sm:$0xff]
    %v483 = vld [vmem:[#allocation8 + $0x3e8] sm:$0xff]
    %v484 = vld [vmem:[#allocation8 + $0x3f0] sm:$0xff]
    %v485 = vld [vmem:[#allocation8 + $0x3f8] sm:$0xff]
    %v486 = vld [vmem:[%s4] sm:$0xf]
    %v488 = vperm.slane %v486, 0
    %v489 = vperm.slane %v486, 1
    %v490 = vperm.slane %v486, 2
    %v491 = vperm.slane %v486, 3
    %v624 = vunpack.c.l.b16 %v358
    %v625 = vunpack.c.h.b16 %v358
    %v626 = vunpack.c.l.b16 %v359
    %v627 = vunpack.c.h.b16 %v359
    %v628 = vunpack.c.l.b16 %v360
    %v629 = vunpack.c.h.b16 %v360
    %v630 = vunpack.c.l.b16 %v361
    %v631 = vunpack.c.h.b16 %v361
    %v632 = vunpack.c.l.b16 %v362
    %v633 = vunpack.c.h.b16 %v362
    %v634 = vunpack.c.l.b16 %v363
    %v635 = vunpack.c.h.b16 %v363
    %v636 = vunpack.c.l.b16 %v364
    %v637 = vunpack.c.h.b16 %v364
    %v638 = vunpack.c.l.b16 %v365
    %v639 = vunpack.c.h.b16 %v365
    %v640 = vunpack.c.l.b16 %v366
    %v641 = vunpack.c.h.b16 %v366
    %v642 = vunpack.c.l.b16 %v367
    %v643 = vunpack.c.h.b16 %v367
    %v644 = vunpack.c.l.b16 %v368
    %v645 = vunpack.c.h.b16 %v368
    %v646 = vunpack.c.l.b16 %v369
    %v647 = vunpack.c.h.b16 %v369
    %v648 = vunpack.c.l.b16 %v370
    %v649 = vunpack.c.h.b16 %v370
    %v650 = vunpack.c.l.b16 %v371
    %v651 = vunpack.c.h.b16 %v371
    %v652 = vunpack.c.l.b16 %v372
    %v653 = vunpack.c.h.b16 %v372
    %v654 = vunpack.c.l.b16 %v373
    %v655 = vunpack.c.h.b16 %v373
    %v656 = vunpack.c.l.b16 %v374
    %v657 = vunpack.c.h.b16 %v374
    %v658 = vunpack.c.l.b16 %v375
    %v659 = vunpack.c.h.b16 %v375
    %v660 = vunpack.c.l.b16 %v376
    %v661 = vunpack.c.h.b16 %v376
    %v662 = vunpack.c.l.b16 %v377
    %v663 = vunpack.c.h.b16 %v377
    %v664 = vunpack.c.l.b16 %v378
    %v665 = vunpack.c.h.b16 %v378
    %v666 = vunpack.c.l.b16 %v379
    %v667 = vunpack.c.h.b16 %v379
    %v668 = vunpack.c.l.b16 %v380
    %v669 = vunpack.c.h.b16 %v380
    %v670 = vunpack.c.l.b16 %v381
    %v671 = vunpack.c.h.b16 %v381
    %v672 = vunpack.c.l.b16 %v382
    %v673 = vunpack.c.h.b16 %v382
    %v674 = vunpack.c.l.b16 %v383
    %v675 = vunpack.c.h.b16 %v383
    %v676 = vunpack.c.l.b16 %v384
    %v677 = vunpack.c.h.b16 %v384
    %v678 = vunpack.c.l.b16 %v385
    %v679 = vunpack.c.h.b16 %v385
    %v680 = vunpack.c.l.b16 %v386
    %v681 = vunpack.c.h.b16 %v386
    %v682 = vunpack.c.l.b16 %v387
    %v683 = vunpack.c.h.b16 %v387
    %v684 = vunpack.c.l.b16 %v388
    %v685 = vunpack.c.h.b16 %v388
    %v686 = vunpack.c.l.b16 %v389
    %v687 = vunpack.c.h.b16 %v389
    %v688 = vunpack.c.l.b16 %v390
    %v689 = vunpack.c.h.b16 %v390
    %v690 = vunpack.c.l.b16 %v391
    %v691 = vunpack.c.h.b16 %v391
    %v692 = vunpack.c.l.b16 %v392
    %v693 = vunpack.c.h.b16 %v392
    %v694 = vunpack.c.l.b16 %v393
    %v695 = vunpack.c.h.b16 %v393
    %v696 = vunpack.c.l.b16 %v394
    %v697 = vunpack.c.h.b16 %v394
    %v698 = vunpack.c.l.b16 %v395
    %v699 = vunpack.c.h.b16 %v395
    %v700 = vunpack.c.l.b16 %v396
    %v701 = vunpack.c.h.b16 %v396
    %v702 = vunpack.c.l.b16 %v397
    %v703 = vunpack.c.h.b16 %v397
    %v704 = vunpack.c.l.b16 %v398
    %v705 = vunpack.c.h.b16 %v398
    %v706 = vunpack.c.l.b16 %v399
    %v707 = vunpack.c.h.b16 %v399
    %v708 = vunpack.c.l.b16 %v400
    %v709 = vunpack.c.h.b16 %v400
    %v710 = vunpack.c.l.b16 %v401
    %v711 = vunpack.c.h.b16 %v401
    %v712 = vunpack.c.l.b16 %v402
    %v713 = vunpack.c.h.b16 %v402
    %v714 = vunpack.c.l.b16 %v403
    %v715 = vunpack.c.h.b16 %v403
    %v716 = vunpack.c.l.b16 %v404
    %v717 = vunpack.c.h.b16 %v404
    %v718 = vunpack.c.l.b16 %v405
    %v719 = vunpack.c.h.b16 %v405
    %v720 = vunpack.c.l.b16 %v406
    %v721 = vunpack.c.h.b16 %v406
    %v722 = vunpack.c.l.b16 %v407
    %v723 = vunpack.c.h.b16 %v407
    %v724 = vunpack.c.l.b16 %v408
    %v725 = vunpack.c.h.b16 %v408
    %v726 = vunpack.c.l.b16 %v409
    %v727 = vunpack.c.h.b16 %v409
    %v728 = vunpack.c.l.b16 %v410
    %v729 = vunpack.c.h.b16 %v410
    %v730 = vunpack.c.l.b16 %v411
    %v731 = vunpack.c.h.b16 %v411
    %v732 = vunpack.c.l.b16 %v412
    %v733 = vunpack.c.h.b16 %v412
    %v734 = vunpack.c.l.b16 %v413
    %v735 = vunpack.c.h.b16 %v413
    %v736 = vunpack.c.l.b16 %v414
    %v737 = vunpack.c.h.b16 %v414
    %v738 = vunpack.c.l.b16 %v415
    %v739 = vunpack.c.h.b16 %v415
    %v740 = vunpack.c.l.b16 %v416
    %v741 = vunpack.c.h.b16 %v416
    %v742 = vunpack.c.l.b16 %v417
    %v743 = vunpack.c.h.b16 %v417
    %v744 = vunpack.c.l.b16 %v418
    %v745 = vunpack.c.h.b16 %v418
    %v746 = vunpack.c.l.b16 %v419
    %v747 = vunpack.c.h.b16 %v419
    %v748 = vunpack.c.l.b16 %v420
    %v749 = vunpack.c.h.b16 %v420
    %v750 = vunpack.c.l.b16 %v421
    %v751 = vunpack.c.h.b16 %v421
    %v752 = vunpack.c.l.b16 %v422
    %v753 = vunpack.c.h.b16 %v422
    %v754 = vunpack.c.l.b16 %v423
    %v755 = vunpack.c.h.b16 %v423
    %v756 = vunpack.c.l.b16 %v424
    %v757 = vunpack.c.h.b16 %v424
    %v758 = vunpack.c.l.b16 %v425
    %v759 = vunpack.c.h.b16 %v425
    %v760 = vunpack.c.l.b16 %v426
    %v761 = vunpack.c.h.b16 %v426
    %v762 = vunpack.c.l.b16 %v427
    %v763 = vunpack.c.h.b16 %v427
    %v764 = vunpack.c.l.b16 %v428
    %v765 = vunpack.c.h.b16 %v428
    %v766 = vunpack.c.l.b16 %v429
    %v767 = vunpack.c.h.b16 %v429
    %v768 = vunpack.c.l.b16 %v430
    %v769 = vunpack.c.h.b16 %v430
    %v770 = vunpack.c.l.b16 %v431
    %v771 = vunpack.c.h.b16 %v431
    %v772 = vunpack.c.l.b16 %v432
    %v773 = vunpack.c.h.b16 %v432
    %v774 = vunpack.c.l.b16 %v433
    %v775 = vunpack.c.h.b16 %v433
    %v776 = vunpack.c.l.b16 %v434
    %v777 = vunpack.c.h.b16 %v434
    %v778 = vunpack.c.l.b16 %v435
    %v779 = vunpack.c.h.b16 %v435
    %v780 = vunpack.c.l.b16 %v436
    %v781 = vunpack.c.h.b16 %v436
    %v782 = vunpack.c.l.b16 %v437
    %v783 = vunpack.c.h.b16 %v437
    %v784 = vunpack.c.l.b16 %v438
    %v785 = vunpack.c.h.b16 %v438
    %v786 = vunpack.c.l.b16 %v439
    %v787 = vunpack.c.h.b16 %v439
    %v788 = vunpack.c.l.b16 %v440
    %v789 = vunpack.c.h.b16 %v440
    %v790 = vunpack.c.l.b16 %v441
    %v791 = vunpack.c.h.b16 %v441
    %v792 = vunpack.c.l.b16 %v442
    %v793 = vunpack.c.h.b16 %v442
    %v794 = vunpack.c.l.b16 %v443
    %v795 = vunpack.c.h.b16 %v443
    %v796 = vunpack.c.l.b16 %v444
    %v797 = vunpack.c.h.b16 %v444
    %v798 = vunpack.c.l.b16 %v445
    %v799 = vunpack.c.h.b16 %v445
    %v800 = vunpack.c.l.b16 %v446
    %v801 = vunpack.c.h.b16 %v446
    %v802 = vunpack.c.l.b16 %v447
    %v803 = vunpack.c.h.b16 %v447
    %v804 = vunpack.c.l.b16 %v448
    %v805 = vunpack.c.h.b16 %v448
    %v806 = vunpack.c.l.b16 %v449
    %v807 = vunpack.c.h.b16 %v449
    %v808 = vunpack.c.l.b16 %v450
    %v809 = vunpack.c.h.b16 %v450
    %v810 = vunpack.c.l.b16 %v451
    %v811 = vunpack.c.h.b16 %v451
    %v812 = vunpack.c.l.b16 %v452
    %v813 = vunpack.c.h.b16 %v452
    %v814 = vunpack.c.l.b16 %v453
    %v815 = vunpack.c.h.b16 %v453
    %v816 = vunpack.c.l.b16 %v454
    %v817 = vunpack.c.h.b16 %v454
    %v818 = vunpack.c.l.b16 %v455
    %v819 = vunpack.c.h.b16 %v455
    %v820 = vunpack.c.l.b16 %v456
    %v821 = vunpack.c.h.b16 %v456
    %v822 = vunpack.c.l.b16 %v457
    %v823 = vunpack.c.h.b16 %v457
    %v824 = vunpack.c.l.b16 %v458
    %v825 = vunpack.c.h.b16 %v458
    %v826 = vunpack.c.l.b16 %v459
    %v827 = vunpack.c.h.b16 %v459
    %v828 = vunpack.c.l.b16 %v460
    %v829 = vunpack.c.h.b16 %v460
    %v830 = vunpack.c.l.b16 %v461
    %v831 = vunpack.c.h.b16 %v461
    %v832 = vunpack.c.l.b16 %v462
    %v833 = vunpack.c.h.b16 %v462
    %v834 = vunpack.c.l.b16 %v463
    %v835 = vunpack.c.h.b16 %v463
    %v836 = vunpack.c.l.b16 %v464
    %v837 = vunpack.c.h.b16 %v464
    %v838 = vunpack.c.l.b16 %v465
    %v839 = vunpack.c.h.b16 %v465
    %v840 = vunpack.c.l.b16 %v466
    %v841 = vunpack.c.h.b16 %v466
    %v842 = vunpack.c.l.b16 %v467
    %v843 = vunpack.c.h.b16 %v467
    %v844 = vunpack.c.l.b16 %v468
    %v845 = vunpack.c.h.b16 %v468
    %v846 = vunpack.c.l.b16 %v469
    %v847 = vunpack.c.h.b16 %v469
    %v848 = vunpack.c.l.b16 %v470
    %v849 = vunpack.c.h.b16 %v470
    %v850 = vunpack.c.l.b16 %v471
    %v851 = vunpack.c.h.b16 %v471
    %v852 = vunpack.c.l.b16 %v472
    %v853 = vunpack.c.h.b16 %v472
    %v854 = vunpack.c.l.b16 %v473
    %v855 = vunpack.c.h.b16 %v473
    %v856 = vunpack.c.l.b16 %v474
    %v857 = vunpack.c.h.b16 %v474
    %v858 = vunpack.c.l.b16 %v475
    %v859 = vunpack.c.h.b16 %v475
    %v860 = vunpack.c.l.b16 %v476
    %v861 = vunpack.c.h.b16 %v476
    %v862 = vunpack.c.l.b16 %v477
    %v863 = vunpack.c.h.b16 %v477
    %v864 = vunpack.c.l.b16 %v478
    %v865 = vunpack.c.h.b16 %v478
    %v866 = vunpack.c.l.b16 %v479
    %v867 = vunpack.c.h.b16 %v479
    %v868 = vunpack.c.l.b16 %v480
    %v869 = vunpack.c.h.b16 %v480
    %v870 = vunpack.c.l.b16 %v481
    %v871 = vunpack.c.h.b16 %v481
    %v872 = vunpack.c.l.b16 %v482
    %v873 = vunpack.c.h.b16 %v482
    %v874 = vunpack.c.l.b16 %v483
    %v875 = vunpack.c.h.b16 %v483
    %v876 = vunpack.c.l.b16 %v484
    %v877 = vunpack.c.h.b16 %v484
    %v878 = vunpack.c.l.b16 %v485
    %v879 = vunpack.c.h.b16 %v485
    %v880 = vpack.c.b16 %v628, %v624
    %v881 = vpack.c.b16 %v629, %v625
    %v882 = vpack.c.b16 %v630, %v626
    %v883 = vpack.c.b16 %v631, %v627
    %v884 = vpack.c.b16 %v636, %v632
    %v885 = vpack.c.b16 %v637, %v633
    %v886 = vpack.c.b16 %v638, %v634
    %v887 = vpack.c.b16 %v639, %v635
    %v888 = vpack.c.b16 %v644, %v640
    %v889 = vpack.c.b16 %v645, %v641
    %v890 = vpack.c.b16 %v646, %v642
    %v891 = vpack.c.b16 %v647, %v643
    %v892 = vpack.c.b16 %v652, %v648
    %v893 = vpack.c.b16 %v653, %v649
    %v894 = vpack.c.b16 %v654, %v650
    %v895 = vpack.c.b16 %v655, %v651
    %v896 = vpack.c.b16 %v660, %v656
    %v897 = vpack.c.b16 %v661, %v657
    %v898 = vpack.c.b16 %v662, %v658
    %v899 = vpack.c.b16 %v663, %v659
    %v900 = vpack.c.b16 %v668, %v664
    %v901 = vpack.c.b16 %v669, %v665
    %v902 = vpack.c.b16 %v670, %v666
    %v903 = vpack.c.b16 %v671, %v667
    %v904 = vpack.c.b16 %v676, %v672
    %v905 = vpack.c.b16 %v677, %v673
    %v906 = vpack.c.b16 %v678, %v674
    %v907 = vpack.c.b16 %v679, %v675
    %v908 = vpack.c.b16 %v684, %v680
    %v909 = vpack.c.b16 %v685, %v681
    %v910 = vpack.c.b16 %v686, %v682
    %v911 = vpack.c.b16 %v687, %v683
    %v912 = vpack.c.b16 %v692, %v688
    %v913 = vpack.c.b16 %v693, %v689
    %v914 = vpack.c.b16 %v694, %v690
    %v915 = vpack.c.b16 %v695, %v691
    %v916 = vpack.c.b16 %v700, %v696
    %v917 = vpack.c.b16 %v701, %v697
    %v918 = vpack.c.b16 %v702, %v698
    %v919 = vpack.c.b16 %v703, %v699
    %v920 = vpack.c.b16 %v708, %v704
    %v921 = vpack.c.b16 %v709, %v705
    %v922 = vpack.c.b16 %v710, %v706
    %v923 = vpack.c.b16 %v711, %v707
    %v924 = vpack.c.b16 %v716, %v712
    %v925 = vpack.c.b16 %v717, %v713
    %v926 = vpack.c.b16 %v718, %v714
    %v927 = vpack.c.b16 %v719, %v715
    %v928 = vpack.c.b16 %v724, %v720
    %v929 = vpack.c.b16 %v725, %v721
    %v930 = vpack.c.b16 %v726, %v722
    %v931 = vpack.c.b16 %v727, %v723
    %v932 = vpack.c.b16 %v732, %v728
    %v933 = vpack.c.b16 %v733, %v729
    %v934 = vpack.c.b16 %v734, %v730
    %v935 = vpack.c.b16 %v735, %v731
    %v936 = vpack.c.b16 %v740, %v736
    %v937 = vpack.c.b16 %v741, %v737
    %v938 = vpack.c.b16 %v742, %v738
    %v939 = vpack.c.b16 %v743, %v739
    %v940 = vpack.c.b16 %v748, %v744
    %v941 = vpack.c.b16 %v749, %v745
    %v942 = vpack.c.b16 %v750, %v746
    %v943 = vpack.c.b16 %v751, %v747
    %v944 = vpack.c.b16 %v756, %v752
    %v945 = vpack.c.b16 %v757, %v753
    %v946 = vpack.c.b16 %v758, %v754
    %v947 = vpack.c.b16 %v759, %v755
    %v948 = vpack.c.b16 %v764, %v760
    %v949 = vpack.c.b16 %v765, %v761
    %v950 = vpack.c.b16 %v766, %v762
    %v951 = vpack.c.b16 %v767, %v763
    %v952 = vpack.c.b16 %v772, %v768
    %v953 = vpack.c.b16 %v773, %v769
    %v954 = vpack.c.b16 %v774, %v770
    %v955 = vpack.c.b16 %v775, %v771
    %v956 = vpack.c.b16 %v780, %v776
    %v957 = vpack.c.b16 %v781, %v777
    %v958 = vpack.c.b16 %v782, %v778
    %v959 = vpack.c.b16 %v783, %v779
    %v960 = vpack.c.b16 %v788, %v784
    %v961 = vpack.c.b16 %v789, %v785
    %v962 = vpack.c.b16 %v790, %v786
    %v963 = vpack.c.b16 %v791, %v787
    %v964 = vpack.c.b16 %v796, %v792
    %v965 = vpack.c.b16 %v797, %v793
    %v966 = vpack.c.b16 %v798, %v794
    %v967 = vpack.c.b16 %v799, %v795
    %v968 = vpack.c.b16 %v804, %v800
    %v969 = vpack.c.b16 %v805, %v801
    %v970 = vpack.c.b16 %v806, %v802
    %v971 = vpack.c.b16 %v807, %v803
    %v972 = vpack.c.b16 %v812, %v808
    %v973 = vpack.c.b16 %v813, %v809
    %v974 = vpack.c.b16 %v814, %v810
    %v975 = vpack.c.b16 %v815, %v811
    %v976 = vpack.c.b16 %v820, %v816
    %v977 = vpack.c.b16 %v821, %v817
    %v978 = vpack.c.b16 %v822, %v818
    %v979 = vpack.c.b16 %v823, %v819
    %v980 = vpack.c.b16 %v828, %v824
    %v981 = vpack.c.b16 %v829, %v825
    %v982 = vpack.c.b16 %v830, %v826
    %v983 = vpack.c.b16 %v831, %v827
    %v984 = vpack.c.b16 %v836, %v832
    %v985 = vpack.c.b16 %v837, %v833
    %v986 = vpack.c.b16 %v838, %v834
    %v987 = vpack.c.b16 %v839, %v835
    %v988 = vpack.c.b16 %v844, %v840
    %v989 = vpack.c.b16 %v845, %v841
    %v990 = vpack.c.b16 %v846, %v842
    %v991 = vpack.c.b16 %v847, %v843
    %v992 = vpack.c.b16 %v852, %v848
    %v993 = vpack.c.b16 %v853, %v849
    %v994 = vpack.c.b16 %v854, %v850
    %v995 = vpack.c.b16 %v855, %v851
    %v996 = vpack.c.b16 %v860, %v856
    %v997 = vpack.c.b16 %v861, %v857
    %v998 = vpack.c.b16 %v862, %v858
    %v999 = vpack.c.b16 %v863, %v859
    %v1000 = vpack.c.b16 %v868, %v864
    %v1001 = vpack.c.b16 %v869, %v865
    %v1002 = vpack.c.b16 %v870, %v866
    %v1003 = vpack.c.b16 %v871, %v867
    %v1004 = vpack.c.b16 %v876, %v872
    %v1005 = vpack.c.b16 %v877, %v873
    %v1006 = vpack.c.b16 %v878, %v874
    %v1007 = vpack.c.b16 %v879, %v875
    %1136 = vmatpush.bf16.msra.mxu0 %v908
    %1137 = vmatpush.bf16.msra.mxu0 %v904
    %1138 = vmatpush.bf16.msra.mxu0 %v900
    %1139 = vmatpush.bf16.msra.mxu0 %v896
    %1140 = vmatpush.bf16.msra.mxu0 %v892
    %1141 = vmatpush.bf16.msra.mxu0 %v888
    %1142 = vmatpush.bf16.msra.mxu0 %v884
    %1143 = vmatpush.bf16.msra.mxu0 %v880
    %1144 = vmatmul.bf16.gmra.mxu0 %v354
    %v1145 = vpop.f32.mrf.mxu0
    %v1146 = vadd.f32 %v488, %v1145
    %v1147 = vpop.f32.mrf.mxu0
    %v1148 = vadd.f32 %v488, %v1147
    %1149 = vdwg.mxu0
    %1150 = vmatpush.bf16.msra.mxu0 %v940
    %1151 = vmatpush.bf16.msra.mxu0 %v936
    %1152 = vmatpush.bf16.msra.mxu0 %v932
    %1153 = vmatpush.bf16.msra.mxu0 %v928
    %1154 = vmatpush.bf16.msra.mxu0 %v924
    %1155 = vmatpush.bf16.msra.mxu0 %v920
    %1156 = vmatpush.bf16.msra.mxu0 %v916
    %1157 = vmatpush.bf16.msra.mxu0 %v912
    %1158 = vmatmul.bf16.gmra.mxu0 %v355
    %v1159 = vpop.f32.mrf.mxu0
    %v1160 = vadd.f32 %v1146, %v1159
    %v1161 = vpop.f32.mrf.mxu0
    %v1162 = vadd.f32 %v1148, %v1161
    %1163 = vdwg.mxu0
    %1164 = vmatpush.bf16.msra.mxu0 %v972
    %1165 = vmatpush.bf16.msra.mxu0 %v968
    %1166 = vmatpush.bf16.msra.mxu0 %v964
    %1167 = vmatpush.bf16.msra.mxu0 %v960
    %1168 = vmatpush.bf16.msra.mxu0 %v956
    %1169 = vmatpush.bf16.msra.mxu0 %v952
    %1170 = vmatpush.bf16.msra.mxu0 %v948
    %1171 = vmatpush.bf16.msra.mxu0 %v944
    %1172 = vmatmul.bf16.gmra.mxu0 %v356
    %v1173 = vpop.f32.mrf.mxu0
    %v1174 = vadd.f32 %v1160, %v1173
    %v1175 = vpop.f32.mrf.mxu0
    %v1176 = vadd.f32 %v1162, %v1175
    %1177 = vdwg.mxu0
    %1178 = vmatpush.bf16.msra.mxu0 %v1004
    %1179 = vmatpush.bf16.msra.mxu0 %v1000
    %1180 = vmatpush.bf16.msra.mxu0 %v996
    %1181 = vmatpush.bf16.msra.mxu0 %v992
    %1182 = vmatpush.bf16.msra.mxu0 %v988
    %1183 = vmatpush.bf16.msra.mxu0 %v984
    %1184 = vmatpush.bf16.msra.mxu0 %v980
    %1185 = vmatpush.bf16.msra.mxu0 %v976
    %1186 = vmatmul.bf16.gmra.mxu0 %v357
    %v1187 = vpop.f32.mrf.mxu0
    %v1188 = vadd.f32 %v1174, %v1187
    %v1189 = vpop.f32.mrf.mxu0
    %v1190 = vadd.f32 %v1176, %v1189
    %1191 = vdwg.mxu0
    %1192 = vmatpush.bf16.msra.mxu0 %v909
    %1193 = vmatpush.bf16.msra.mxu0 %v905
    %1194 = vmatpush.bf16.msra.mxu0 %v901
    %1195 = vmatpush.bf16.msra.mxu0 %v897
    %1196 = vmatpush.bf16.msra.mxu0 %v893
    %1197 = vmatpush.bf16.msra.mxu0 %v889
    %1198 = vmatpush.bf16.msra.mxu0 %v885
    %1199 = vmatpush.bf16.msra.mxu0 %v881
    %1200 = vmatmul.bf16.gmra.mxu0 %v354
    %v1201 = vpop.f32.mrf.mxu0
    %v1202 = vadd.f32 %v489, %v1201
    %v1203 = vpop.f32.mrf.mxu0
    %v1204 = vadd.f32 %v489, %v1203
    %1205 = vdwg.mxu0
    %1206 = vmatpush.bf16.msra.mxu0 %v941
    %1207 = vmatpush.bf16.msra.mxu0 %v937
    %1208 = vmatpush.bf16.msra.mxu0 %v933
    %1209 = vmatpush.bf16.msra.mxu0 %v929
    %1210 = vmatpush.bf16.msra.mxu0 %v925
    %1211 = vmatpush.bf16.msra.mxu0 %v921
    %1212 = vmatpush.bf16.msra.mxu0 %v917
    %1213 = vmatpush.bf16.msra.mxu0 %v913
    %1214 = vmatmul.bf16.gmra.mxu0 %v355
    %v1215 = vpop.f32.mrf.mxu0
    %v1216 = vadd.f32 %v1202, %v1215
    %v1217 = vpop.f32.mrf.mxu0
    %v1218 = vadd.f32 %v1204, %v1217
    %1219 = vdwg.mxu0
    %1220 = vmatpush.bf16.msra.mxu0 %v973
    %1221 = vmatpush.bf16.msra.mxu0 %v969
    %1222 = vmatpush.bf16.msra.mxu0 %v965
    %1223 = vmatpush.bf16.msra.mxu0 %v961
    %1224 = vmatpush.bf16.msra.mxu0 %v957
    %1225 = vmatpush.bf16.msra.mxu0 %v953
    %1226 = vmatpush.bf16.msra.mxu0 %v949
    %1227 = vmatpush.bf16.msra.mxu0 %v945
    %1228 = vmatmul.bf16.gmra.mxu0 %v356
    %v1229 = vpop.f32.mrf.mxu0
    %v1230 = vadd.f32 %v1216, %v1229
    %v1231 = vpop.f32.mrf.mxu0
    %v1232 = vadd.f32 %v1218, %v1231
    %1233 = vdwg.mxu0
    %1234 = vmatpush.bf16.msra.mxu0 %v1005
    %1235 = vmatpush.bf16.msra.mxu0 %v1001
    %1236 = vmatpush.bf16.msra.mxu0 %v997
    %1237 = vmatpush.bf16.msra.mxu0 %v993
    %1238 = vmatpush.bf16.msra.mxu0 %v989
    %1239 = vmatpush.bf16.msra.mxu0 %v985
    %1240 = vmatpush.bf16.msra.mxu0 %v981
    %1241 = vmatpush.bf16.msra.mxu0 %v977
    %1242 = vmatmul.bf16.gmra.mxu0 %v357
    %v1243 = vpop.f32.mrf.mxu0
    %v1244 = vadd.f32 %v1230, %v1243
    %v1245 = vpop.f32.mrf.mxu0
    %v1246 = vadd.f32 %v1232, %v1245
    %1247 = vdwg.mxu0
    %1248 = vmatpush.bf16.msra.mxu0 %v910
    %1249 = vmatpush.bf16.msra.mxu0 %v906
    %1250 = vmatpush.bf16.msra.mxu0 %v902
    %1251 = vmatpush.bf16.msra.mxu0 %v898
    %1252 = vmatpush.bf16.msra.mxu0 %v894
    %1253 = vmatpush.bf16.msra.mxu0 %v890
    %1254 = vmatpush.bf16.msra.mxu0 %v886
    %1255 = vmatpush.bf16.msra.mxu0 %v882
    %1256 = vmatmul.bf16.gmra.mxu0 %v354
    %v1257 = vpop.f32.mrf.mxu0
    %v1258 = vadd.f32 %v490, %v1257
    %v1259 = vpop.f32.mrf.mxu0
    %v1260 = vadd.f32 %v490, %v1259
    %1261 = vdwg.mxu0
    %1262 = vmatpush.bf16.msra.mxu0 %v942
    %1263 = vmatpush.bf16.msra.mxu0 %v938
    %1264 = vmatpush.bf16.msra.mxu0 %v934
    %1265 = vmatpush.bf16.msra.mxu0 %v930
    %1266 = vmatpush.bf16.msra.mxu0 %v926
    %1267 = vmatpush.bf16.msra.mxu0 %v922
    %1268 = vmatpush.bf16.msra.mxu0 %v918
    %1269 = vmatpush.bf16.msra.mxu0 %v914
    %1270 = vmatmul.bf16.gmra.mxu0 %v355
    %v1271 = vpop.f32.mrf.mxu0
    %v1272 = vadd.f32 %v1258, %v1271
    %v1273 = vpop.f32.mrf.mxu0
    %v1274 = vadd.f32 %v1260, %v1273
    %1275 = vdwg.mxu0
    %1276 = vmatpush.bf16.msra.mxu0 %v974
    %1277 = vmatpush.bf16.msra.mxu0 %v970
    %1278 = vmatpush.bf16.msra.mxu0 %v966
    %1279 = vmatpush.bf16.msra.mxu0 %v962
    %1280 = vmatpush.bf16.msra.mxu0 %v958
    %1281 = vmatpush.bf16.msra.mxu0 %v954
    %1282 = vmatpush.bf16.msra.mxu0 %v950
    %1283 = vmatpush.bf16.msra.mxu0 %v946
    %1284 = vmatmul.bf16.gmra.mxu0 %v356
    %v1285 = vpop.f32.mrf.mxu0
    %v1286 = vadd.f32 %v1272, %v1285
    %v1287 = vpop.f32.mrf.mxu0
    %v1288 = vadd.f32 %v1274, %v1287
    %1289 = vdwg.mxu0
    %1290 = vmatpush.bf16.msra.mxu0 %v1006
    %1291 = vmatpush.bf16.msra.mxu0 %v1002
    %1292 = vmatpush.bf16.msra.mxu0 %v998
    %1293 = vmatpush.bf16.msra.mxu0 %v994
    %1294 = vmatpush.bf16.msra.mxu0 %v990
    %1295 = vmatpush.bf16.msra.mxu0 %v986
    %1296 = vmatpush.bf16.msra.mxu0 %v982
    %1297 = vmatpush.bf16.msra.mxu0 %v978
    %1298 = vmatmul.bf16.gmra.mxu0 %v357
    %v1299 = vpop.f32.mrf.mxu0
    %v1300 = vadd.f32 %v1286, %v1299
    %v1301 = vpop.f32.mrf.mxu0
    %v1302 = vadd.f32 %v1288, %v1301
    %1303 = vdwg.mxu0
    %1304 = vmatpush.bf16.msra.mxu0 %v911
    %1305 = vmatpush.bf16.msra.mxu0 %v907
    %1306 = vmatpush.bf16.msra.mxu0 %v903
    %1307 = vmatpush.bf16.msra.mxu0 %v899
    %1308 = vmatpush.bf16.msra.mxu0 %v895
    %1309 = vmatpush.bf16.msra.mxu0 %v891
    %1310 = vmatpush.bf16.msra.mxu0 %v887
    %1311 = vmatpush.bf16.msra.mxu0 %v883
    %1312 = vmatmul.bf16.gmra.mxu0 %v354
    %v1313 = vpop.f32.mrf.mxu0
    %v1314 = vadd.f32 %v491, %v1313
    %v1315 = vpop.f32.mrf.mxu0
    %v1316 = vadd.f32 %v491, %v1315
    %1317 = vdwg.mxu0
    %1318 = vmatpush.bf16.msra.mxu0 %v943
    %1319 = vmatpush.bf16.msra.mxu0 %v939
    %1320 = vmatpush.bf16.msra.mxu0 %v935
    %1321 = vmatpush.bf16.msra.mxu0 %v931
    %1322 = vmatpush.bf16.msra.mxu0 %v927
    %1323 = vmatpush.bf16.msra.mxu0 %v923
    %1324 = vmatpush.bf16.msra.mxu0 %v919
    %1325 = vmatpush.bf16.msra.mxu0 %v915
    %1326 = vmatmul.bf16.gmra.mxu0 %v355
    %v1327 = vpop.f32.mrf.mxu0
    %v1328 = vadd.f32 %v1314, %v1327
    %v1329 = vpop.f32.mrf.mxu0
    %v1330 = vadd.f32 %v1316, %v1329
    %1331 = vdwg.mxu0
    %1332 = vmatpush.bf16.msra.mxu0 %v975
    %1333 = vmatpush.bf16.msra.mxu0 %v971
    %1334 = vmatpush.bf16.msra.mxu0 %v967
    %1335 = vmatpush.bf16.msra.mxu0 %v963
    %1336 = vmatpush.bf16.msra.mxu0 %v959
    %1337 = vmatpush.bf16.msra.mxu0 %v955
    %1338 = vmatpush.bf16.msra.mxu0 %v951
    %1339 = vmatpush.bf16.msra.mxu0 %v947
    %1340 = vmatmul.bf16.gmra.mxu0 %v356
    %v1341 = vpop.f32.mrf.mxu0
    %v1342 = vadd.f32 %v1328, %v1341
    %v1343 = vpop.f32.mrf.mxu0
    %v1344 = vadd.f32 %v1330, %v1343
    %1345 = vdwg.mxu0
    %1346 = vmatpush.bf16.msra.mxu0 %v1007
    %1347 = vmatpush.bf16.msra.mxu0 %v1003
    %1348 = vmatpush.bf16.msra.mxu0 %v999
    %1349 = vmatpush.bf16.msra.mxu0 %v995
    %1350 = vmatpush.bf16.msra.mxu0 %v991
    %1351 = vmatpush.bf16.msra.mxu0 %v987
    %1352 = vmatpush.bf16.msra.mxu0 %v983
    %1353 = vmatpush.bf16.msra.mxu0 %v979
    %1354 = vmatmul.bf16.gmra.mxu0 %v357
    %v1355 = vpop.f32.mrf.mxu0
    %v1356 = vadd.f32 %v1342, %v1355
    %v1357 = vpop.f32.mrf.mxu0
    %v1358 = vadd.f32 %v1344, %v1357
    %1359 = vdwg.mxu0
    %v1360 = vmax.f32 %v1188, 0.0
    %v1361 = vmax.f32 %v1244, 0.0
    %v1362 = vmax.f32 %v1300, 0.0
    %v1363 = vmax.f32 %v1356, 0.0
    %v1364 = vmax.f32 %v1190, 0.0
    %v1365 = vmax.f32 %v1246, 0.0
    %v1366 = vmax.f32 %v1302, 0.0
    %v1367 = vmax.f32 %v1358, 0.0
    %v1368 = vpack.c.bf16 %v1364, %v1360
    %v1369 = vpack.c.bf16 %v1365, %v1361
    %v1370 = vpack.c.bf16 %v1366, %v1362
    %v1371 = vpack.c.bf16 %v1367, %v1363
    %v1372 = vld [vmem:[#allocation10] sm:$0xff]
    %v1373 = vld [vmem:[#allocation10 + $0x8] sm:$0xff]
    %v1374 = vld [vmem:[#allocation10 + $0x10] sm:$0xff]
    %v1375 = vld [vmem:[#allocation10 + $0x18] sm:$0xff]
    %v1376 = vld [vmem:[#allocation10 + $0x20] sm:$0xff]
    %v1377 = vld [vmem:[#allocation10 + $0x28] sm:$0xff]
    %v1378 = vld [vmem:[#allocation10 + $0x30] sm:$0xff]
    %v1379 = vld [vmem:[#allocation10 + $0x38] sm:$0xff]
    %v1380 = vld [vmem:[#allocation10 + $0x40] sm:$0xff]
    %v1381 = vld [vmem:[#allocation10 + $0x48] sm:$0xff]
    %v1382 = vld [vmem:[#allocation10 + $0x50] sm:$0xff]
    %v1383 = vld [vmem:[#allocation10 + $0x58] sm:$0xff]
    %v1384 = vld [vmem:[#allocation10 + $0x60] sm:$0xff]
    %v1385 = vld [vmem:[#allocation10 + $0x68] sm:$0xff]
    %v1386 = vld [vmem:[#allocation10 + $0x70] sm:$0xff]
    %v1387 = vld [vmem:[#allocation10 + $0x78] sm:$0xff]
    %v1388 = vld [vmem:[#allocation10 + $0x80] sm:$0xff]
    %v1389 = vld [vmem:[#allocation10 + $0x88] sm:$0xff]
    %v1390 = vld [vmem:[#allocation10 + $0x90] sm:$0xff]
    %v1391 = vld [vmem:[#allocation10 + $0x98] sm:$0xff]
    %v1392 = vld [vmem:[#allocation10 + $0xa0] sm:$0xff]
    %v1393 = vld [vmem:[#allocation10 + $0xa8] sm:$0xff]
    %v1394 = vld [vmem:[#allocation10 + $0xb0] sm:$0xff]
    %v1395 = vld [vmem:[#allocation10 + $0xb8] sm:$0xff]
    %v1396 = vld [vmem:[#allocation10 + $0xc0] sm:$0xff]
    %v1397 = vld [vmem:[#allocation10 + $0xc8] sm:$0xff]
    %v1398 = vld [vmem:[#allocation10 + $0xd0] sm:$0xff]
    %v1399 = vld [vmem:[#allocation10 + $0xd8] sm:$0xff]
    %v1400 = vld [vmem:[#allocation10 + $0xe0] sm:$0xff]
    %v1401 = vld [vmem:[#allocation10 + $0xe8] sm:$0xff]
    %v1402 = vld [vmem:[#allocation10 + $0xf0] sm:$0xff]
    %v1403 = vld [vmem:[#allocation10 + $0xf8] sm:$0xff]
    %v1404 = vld [vmem:[#allocation10 + $0x100] sm:$0xff]
    %v1405 = vld [vmem:[#allocation10 + $0x108] sm:$0xff]
    %v1406 = vld [vmem:[#allocation10 + $0x110] sm:$0xff]
    %v1407 = vld [vmem:[#allocation10 + $0x118] sm:$0xff]
    %v1408 = vld [vmem:[#allocation10 + $0x120] sm:$0xff]
    %v1409 = vld [vmem:[#allocation10 + $0x128] sm:$0xff]
    %v1410 = vld [vmem:[#allocation10 + $0x130] sm:$0xff]
    %v1411 = vld [vmem:[#allocation10 + $0x138] sm:$0xff]
    %v1412 = vld [vmem:[#allocation10 + $0x140] sm:$0xff]
    %v1413 = vld [vmem:[#allocation10 + $0x148] sm:$0xff]
    %v1414 = vld [vmem:[#allocation10 + $0x150] sm:$0xff]
    %v1415 = vld [vmem:[#allocation10 + $0x158] sm:$0xff]
    %v1416 = vld [vmem:[#allocation10 + $0x160] sm:$0xff]
    %v1417 = vld [vmem:[#allocation10 + $0x168] sm:$0xff]
    %v1418 = vld [vmem:[#allocation10 + $0x170] sm:$0xff]
    %v1419 = vld [vmem:[#allocation10 + $0x178] sm:$0xff]
    %v1420 = vld [vmem:[#allocation10 + $0x180] sm:$0xff]
    %v1421 = vld [vmem:[#allocation10 + $0x188] sm:$0xff]
    %v1422 = vld [vmem:[#allocation10 + $0x190] sm:$0xff]
    %v1423 = vld [vmem:[#allocation10 + $0x198] sm:$0xff]
    %v1424 = vld [vmem:[#allocation10 + $0x1a0] sm:$0xff]
    %v1425 = vld [vmem:[#allocation10 + $0x1a8] sm:$0xff]
    %v1426 = vld [vmem:[#allocation10 + $0x1b0] sm:$0xff]
    %v1427 = vld [vmem:[#allocation10 + $0x1b8] sm:$0xff]
    %v1428 = vld [vmem:[#allocation10 + $0x1c0] sm:$0xff]
    %v1429 = vld [vmem:[#allocation10 + $0x1c8] sm:$0xff]
    %v1430 = vld [vmem:[#allocation10 + $0x1d0] sm:$0xff]
    %v1431 = vld [vmem:[#allocation10 + $0x1d8] sm:$0xff]
    %v1432 = vld [vmem:[#allocation10 + $0x1e0] sm:$0xff]
    %v1433 = vld [vmem:[#allocation10 + $0x1e8] sm:$0xff]
    %v1434 = vld [vmem:[#allocation10 + $0x1f0] sm:$0xff]
    %v1435 = vld [vmem:[#allocation10 + $0x1f8] sm:$0xff]
    %v1436 = vld [vmem:[#allocation10 + $0x200] sm:$0xff]
    %v1437 = vld [vmem:[#allocation10 + $0x208] sm:$0xff]
    %v1438 = vld [vmem:[#allocation10 + $0x210] sm:$0xff]
    %v1439 = vld [vmem:[#allocation10 + $0x218] sm:$0xff]
    %v1440 = vld [vmem:[#allocation10 + $0x220] sm:$0xff]
    %v1441 = vld [vmem:[#allocation10 + $0x228] sm:$0xff]
    %v1442 = vld [vmem:[#allocation10 + $0x230] sm:$0xff]
    %v1443 = vld [vmem:[#allocation10 + $0x238] sm:$0xff]
    %v1444 = vld [vmem:[#allocation10 + $0x240] sm:$0xff]
    %v1445 = vld [vmem:[#allocation10 + $0x248] sm:$0xff]
    %v1446 = vld [vmem:[#allocation10 + $0x250] sm:$0xff]
    %v1447 = vld [vmem:[#allocation10 + $0x258] sm:$0xff]
    %v1448 = vld [vmem:[#allocation10 + $0x260] sm:$0xff]
    %v1449 = vld [vmem:[#allocation10 + $0x268] sm:$0xff]
    %v1450 = vld [vmem:[#allocation10 + $0x270] sm:$0xff]
    %v1451 = vld [vmem:[#allocation10 + $0x278] sm:$0xff]
    %v1452 = vld [vmem:[#allocation10 + $0x280] sm:$0xff]
    %v1453 = vld [vmem:[#allocation10 + $0x288] sm:$0xff]
    %v1454 = vld [vmem:[#allocation10 + $0x290] sm:$0xff]
    %v1455 = vld [vmem:[#allocation10 + $0x298] sm:$0xff]
    %v1456 = vld [vmem:[#allocation10 + $0x2a0] sm:$0xff]
    %v1457 = vld [vmem:[#allocation10 + $0x2a8] sm:$0xff]
    %v1458 = vld [vmem:[#allocation10 + $0x2b0] sm:$0xff]
    %v1459 = vld [vmem:[#allocation10 + $0x2b8] sm:$0xff]
    %v1460 = vld [vmem:[#allocation10 + $0x2c0] sm:$0xff]
    %v1461 = vld [vmem:[#allocation10 + $0x2c8] sm:$0xff]
    %v1462 = vld [vmem:[#allocation10 + $0x2d0] sm:$0xff]
    %v1463 = vld [vmem:[#allocation10 + $0x2d8] sm:$0xff]
    %v1464 = vld [vmem:[#allocation10 + $0x2e0] sm:$0xff]
    %v1465 = vld [vmem:[#allocation10 + $0x2e8] sm:$0xff]
    %v1466 = vld [vmem:[#allocation10 + $0x2f0] sm:$0xff]
    %v1467 = vld [vmem:[#allocation10 + $0x2f8] sm:$0xff]
    %v1468 = vld [vmem:[#allocation10 + $0x300] sm:$0xff]
    %v1469 = vld [vmem:[#allocation10 + $0x308] sm:$0xff]
    %v1470 = vld [vmem:[#allocation10 + $0x310] sm:$0xff]
    %v1471 = vld [vmem:[#allocation10 + $0x318] sm:$0xff]
    %v1472 = vld [vmem:[#allocation10 + $0x320] sm:$0xff]
    %v1473 = vld [vmem:[#allocation10 + $0x328] sm:$0xff]
    %v1474 = vld [vmem:[#allocation10 + $0x330] sm:$0xff]
    %v1475 = vld [vmem:[#allocation10 + $0x338] sm:$0xff]
    %v1476 = vld [vmem:[#allocation10 + $0x340] sm:$0xff]
    %v1477 = vld [vmem:[#allocation10 + $0x348] sm:$0xff]
    %v1478 = vld [vmem:[#allocation10 + $0x350] sm:$0xff]
    %v1479 = vld [vmem:[#allocation10 + $0x358] sm:$0xff]
    %v1480 = vld [vmem:[#allocation10 + $0x360] sm:$0xff]
    %v1481 = vld [vmem:[#allocation10 + $0x368] sm:$0xff]
    %v1482 = vld [vmem:[#allocation10 + $0x370] sm:$0xff]
    %v1483 = vld [vmem:[#allocation10 + $0x378] sm:$0xff]
    %v1484 = vld [vmem:[#allocation10 + $0x380] sm:$0xff]
    %v1485 = vld [vmem:[#allocation10 + $0x388] sm:$0xff]
    %v1486 = vld [vmem:[#allocation10 + $0x390] sm:$0xff]
    %v1487 = vld [vmem:[#allocation10 + $0x398] sm:$0xff]
    %v1488 = vld [vmem:[#allocation10 + $0x3a0] sm:$0xff]
    %v1489 = vld [vmem:[#allocation10 + $0x3a8] sm:$0xff]
    %v1490 = vld [vmem:[#allocation10 + $0x3b0] sm:$0xff]
    %v1491 = vld [vmem:[#allocation10 + $0x3b8] sm:$0xff]
    %v1492 = vld [vmem:[#allocation10 + $0x3c0] sm:$0xff]
    %v1493 = vld [vmem:[#allocation10 + $0x3c8] sm:$0xff]
    %v1494 = vld [vmem:[#allocation10 + $0x3d0] sm:$0xff]
    %v1495 = vld [vmem:[#allocation10 + $0x3d8] sm:$0xff]
    %v1496 = vld [vmem:[#allocation10 + $0x3e0] sm:$0xff]
    %v1497 = vld [vmem:[#allocation10 + $0x3e8] sm:$0xff]
    %v1498 = vld [vmem:[#allocation10 + $0x3f0] sm:$0xff]
    %v1499 = vld [vmem:[#allocation10 + $0x3f8] sm:$0xff]
    %v1500 = vld [vmem:[#allocation11] sm:$0xf]
    %v1502 = vperm.slane %v1500, 0
    %v1503 = vperm.slane %v1500, 1
    %v1504 = vperm.slane %v1500, 2
    %v1505 = vperm.slane %v1500, 3
    %v1638 = vunpack.c.l.b16 %v1372
    %v1639 = vunpack.c.h.b16 %v1372
    %v1640 = vunpack.c.l.b16 %v1373
    %v1641 = vunpack.c.h.b16 %v1373
    %v1642 = vunpack.c.l.b16 %v1374
    %v1643 = vunpack.c.h.b16 %v1374
    %v1644 = vunpack.c.l.b16 %v1375
    %v1645 = vunpack.c.h.b16 %v1375
    %v1646 = vunpack.c.l.b16 %v1376
    %v1647 = vunpack.c.h.b16 %v1376
    %v1648 = vunpack.c.l.b16 %v1377
    %v1649 = vunpack.c.h.b16 %v1377
    %v1650 = vunpack.c.l.b16 %v1378
    %v1651 = vunpack.c.h.b16 %v1378
    %v1652 = vunpack.c.l.b16 %v1379
    %v1653 = vunpack.c.h.b16 %v1379
    %v1654 = vunpack.c.l.b16 %v1380
    %v1655 = vunpack.c.h.b16 %v1380
    %v1656 = vunpack.c.l.b16 %v1381
    %v1657 = vunpack.c.h.b16 %v1381
    %v1658 = vunpack.c.l.b16 %v1382
    %v1659 = vunpack.c.h.b16 %v1382
    %v1660 = vunpack.c.l.b16 %v1383
    %v1661 = vunpack.c.h.b16 %v1383
    %v1662 = vunpack.c.l.b16 %v1384
    %v1663 = vunpack.c.h.b16 %v1384
    %v1664 = vunpack.c.l.b16 %v1385
    %v1665 = vunpack.c.h.b16 %v1385
    %v1666 = vunpack.c.l.b16 %v1386
    %v1667 = vunpack.c.h.b16 %v1386
    %v1668 = vunpack.c.l.b16 %v1387
    %v1669 = vunpack.c.h.b16 %v1387
    %v1670 = vunpack.c.l.b16 %v1388
    %v1671 = vunpack.c.h.b16 %v1388
    %v1672 = vunpack.c.l.b16 %v1389
    %v1673 = vunpack.c.h.b16 %v1389
    %v1674 = vunpack.c.l.b16 %v1390
    %v1675 = vunpack.c.h.b16 %v1390
    %v1676 = vunpack.c.l.b16 %v1391
    %v1677 = vunpack.c.h.b16 %v1391
    %v1678 = vunpack.c.l.b16 %v1392
    %v1679 = vunpack.c.h.b16 %v1392
    %v1680 = vunpack.c.l.b16 %v1393
    %v1681 = vunpack.c.h.b16 %v1393
    %v1682 = vunpack.c.l.b16 %v1394
    %v1683 = vunpack.c.h.b16 %v1394
    %v1684 = vunpack.c.l.b16 %v1395
    %v1685 = vunpack.c.h.b16 %v1395
    %v1686 = vunpack.c.l.b16 %v1396
    %v1687 = vunpack.c.h.b16 %v1396
    %v1688 = vunpack.c.l.b16 %v1397
    %v1689 = vunpack.c.h.b16 %v1397
    %v1690 = vunpack.c.l.b16 %v1398
    %v1691 = vunpack.c.h.b16 %v1398
    %v1692 = vunpack.c.l.b16 %v1399
    %v1693 = vunpack.c.h.b16 %v1399
    %v1694 = vunpack.c.l.b16 %v1400
    %v1695 = vunpack.c.h.b16 %v1400
    %v1696 = vunpack.c.l.b16 %v1401
    %v1697 = vunpack.c.h.b16 %v1401
    %v1698 = vunpack.c.l.b16 %v1402
    %v1699 = vunpack.c.h.b16 %v1402
    %v1700 = vunpack.c.l.b16 %v1403
    %v1701 = vunpack.c.h.b16 %v1403
    %v1702 = vunpack.c.l.b16 %v1404
    %v1703 = vunpack.c.h.b16 %v1404
    %v1704 = vunpack.c.l.b16 %v1405
    %v1705 = vunpack.c.h.b16 %v1405
    %v1706 = vunpack.c.l.b16 %v1406
    %v1707 = vunpack.c.h.b16 %v1406
    %v1708 = vunpack.c.l.b16 %v1407
    %v1709 = vunpack.c.h.b16 %v1407
    %v1710 = vunpack.c.l.b16 %v1408
    %v1711 = vunpack.c.h.b16 %v1408
    %v1712 = vunpack.c.l.b16 %v1409
    %v1713 = vunpack.c.h.b16 %v1409
    %v1714 = vunpack.c.l.b16 %v1410
    %v1715 = vunpack.c.h.b16 %v1410
    %v1716 = vunpack.c.l.b16 %v1411
    %v1717 = vunpack.c.h.b16 %v1411
    %v1718 = vunpack.c.l.b16 %v1412
    %v1719 = vunpack.c.h.b16 %v1412
    %v1720 = vunpack.c.l.b16 %v1413
    %v1721 = vunpack.c.h.b16 %v1413
    %v1722 = vunpack.c.l.b16 %v1414
    %v1723 = vunpack.c.h.b16 %v1414
    %v1724 = vunpack.c.l.b16 %v1415
    %v1725 = vunpack.c.h.b16 %v1415
    %v1726 = vunpack.c.l.b16 %v1416
    %v1727 = vunpack.c.h.b16 %v1416
    %v1728 = vunpack.c.l.b16 %v1417
    %v1729 = vunpack.c.h.b16 %v1417
    %v1730 = vunpack.c.l.b16 %v1418
    %v1731 = vunpack.c.h.b16 %v1418
    %v1732 = vunpack.c.l.b16 %v1419
    %v1733 = vunpack.c.h.b16 %v1419
    %v1734 = vunpack.c.l.b16 %v1420
    %v1735 = vunpack.c.h.b16 %v1420
    %v1736 = vunpack.c.l.b16 %v1421
    %v1737 = vunpack.c.h.b16 %v1421
    %v1738 = vunpack.c.l.b16 %v1422
    %v1739 = vunpack.c.h.b16 %v1422
    %v1740 = vunpack.c.l.b16 %v1423
    %v1741 = vunpack.c.h.b16 %v1423
    %v1742 = vunpack.c.l.b16 %v1424
    %v1743 = vunpack.c.h.b16 %v1424
    %v1744 = vunpack.c.l.b16 %v1425
    %v1745 = vunpack.c.h.b16 %v1425
    %v1746 = vunpack.c.l.b16 %v1426
    %v1747 = vunpack.c.h.b16 %v1426
    %v1748 = vunpack.c.l.b16 %v1427
    %v1749 = vunpack.c.h.b16 %v1427
    %v1750 = vunpack.c.l.b16 %v1428
    %v1751 = vunpack.c.h.b16 %v1428
    %v1752 = vunpack.c.l.b16 %v1429
    %v1753 = vunpack.c.h.b16 %v1429
    %v1754 = vunpack.c.l.b16 %v1430
    %v1755 = vunpack.c.h.b16 %v1430
    %v1756 = vunpack.c.l.b16 %v1431
    %v1757 = vunpack.c.h.b16 %v1431
    %v1758 = vunpack.c.l.b16 %v1432
    %v1759 = vunpack.c.h.b16 %v1432
    %v1760 = vunpack.c.l.b16 %v1433
    %v1761 = vunpack.c.h.b16 %v1433
    %v1762 = vunpack.c.l.b16 %v1434
    %v1763 = vunpack.c.h.b16 %v1434
    %v1764 = vunpack.c.l.b16 %v1435
    %v1765 = vunpack.c.h.b16 %v1435
    %v1766 = vunpack.c.l.b16 %v1436
    %v1767 = vunpack.c.h.b16 %v1436
    %v1768 = vunpack.c.l.b16 %v1437
    %v1769 = vunpack.c.h.b16 %v1437
    %v1770 = vunpack.c.l.b16 %v1438
    %v1771 = vunpack.c.h.b16 %v1438
    %v1772 = vunpack.c.l.b16 %v1439
    %v1773 = vunpack.c.h.b16 %v1439
    %v1774 = vunpack.c.l.b16 %v1440
    %v1775 = vunpack.c.h.b16 %v1440
    %v1776 = vunpack.c.l.b16 %v1441
    %v1777 = vunpack.c.h.b16 %v1441
    %v1778 = vunpack.c.l.b16 %v1442
    %v1779 = vunpack.c.h.b16 %v1442
    %v1780 = vunpack.c.l.b16 %v1443
    %v1781 = vunpack.c.h.b16 %v1443
    %v1782 = vunpack.c.l.b16 %v1444
    %v1783 = vunpack.c.h.b16 %v1444
    %v1784 = vunpack.c.l.b16 %v1445
    %v1785 = vunpack.c.h.b16 %v1445
    %v1786 = vunpack.c.l.b16 %v1446
    %v1787 = vunpack.c.h.b16 %v1446
    %v1788 = vunpack.c.l.b16 %v1447
    %v1789 = vunpack.c.h.b16 %v1447
    %v1790 = vunpack.c.l.b16 %v1448
    %v1791 = vunpack.c.h.b16 %v1448
    %v1792 = vunpack.c.l.b16 %v1449
    %v1793 = vunpack.c.h.b16 %v1449
    %v1794 = vunpack.c.l.b16 %v1450
    %v1795 = vunpack.c.h.b16 %v1450
    %v1796 = vunpack.c.l.b16 %v1451
    %v1797 = vunpack.c.h.b16 %v1451
    %v1798 = vunpack.c.l.b16 %v1452
    %v1799 = vunpack.c.h.b16 %v1452
    %v1800 = vunpack.c.l.b16 %v1453
    %v1801 = vunpack.c.h.b16 %v1453
    %v1802 = vunpack.c.l.b16 %v1454
    %v1803 = vunpack.c.h.b16 %v1454
    %v1804 = vunpack.c.l.b16 %v1455
    %v1805 = vunpack.c.h.b16 %v1455
    %v1806 = vunpack.c.l.b16 %v1456
    %v1807 = vunpack.c.h.b16 %v1456
    %v1808 = vunpack.c.l.b16 %v1457
    %v1809 = vunpack.c.h.b16 %v1457
    %v1810 = vunpack.c.l.b16 %v1458
    %v1811 = vunpack.c.h.b16 %v1458
    %v1812 = vunpack.c.l.b16 %v1459
    %v1813 = vunpack.c.h.b16 %v1459
    %v1814 = vunpack.c.l.b16 %v1460
    %v1815 = vunpack.c.h.b16 %v1460
    %v1816 = vunpack.c.l.b16 %v1461
    %v1817 = vunpack.c.h.b16 %v1461
    %v1818 = vunpack.c.l.b16 %v1462
    %v1819 = vunpack.c.h.b16 %v1462
    %v1820 = vunpack.c.l.b16 %v1463
    %v1821 = vunpack.c.h.b16 %v1463
    %v1822 = vunpack.c.l.b16 %v1464
    %v1823 = vunpack.c.h.b16 %v1464
    %v1824 = vunpack.c.l.b16 %v1465
    %v1825 = vunpack.c.h.b16 %v1465
    %v1826 = vunpack.c.l.b16 %v1466
    %v1827 = vunpack.c.h.b16 %v1466
    %v1828 = vunpack.c.l.b16 %v1467
    %v1829 = vunpack.c.h.b16 %v1467
    %v1830 = vunpack.c.l.b16 %v1468
    %v1831 = vunpack.c.h.b16 %v1468
    %v1832 = vunpack.c.l.b16 %v1469
    %v1833 = vunpack.c.h.b16 %v1469
    %v1834 = vunpack.c.l.b16 %v1470
    %v1835 = vunpack.c.h.b16 %v1470
    %v1836 = vunpack.c.l.b16 %v1471
    %v1837 = vunpack.c.h.b16 %v1471
    %v1838 = vunpack.c.l.b16 %v1472
    %v1839 = vunpack.c.h.b16 %v1472
    %v1840 = vunpack.c.l.b16 %v1473
    %v1841 = vunpack.c.h.b16 %v1473
    %v1842 = vunpack.c.l.b16 %v1474
    %v1843 = vunpack.c.h.b16 %v1474
    %v1844 = vunpack.c.l.b16 %v1475
    %v1845 = vunpack.c.h.b16 %v1475
    %v1846 = vunpack.c.l.b16 %v1476
    %v1847 = vunpack.c.h.b16 %v1476
    %v1848 = vunpack.c.l.b16 %v1477
    %v1849 = vunpack.c.h.b16 %v1477
    %v1850 = vunpack.c.l.b16 %v1478
    %v1851 = vunpack.c.h.b16 %v1478
    %v1852 = vunpack.c.l.b16 %v1479
    %v1853 = vunpack.c.h.b16 %v1479
    %v1854 = vunpack.c.l.b16 %v1480
    %v1855 = vunpack.c.h.b16 %v1480
    %v1856 = vunpack.c.l.b16 %v1481
    %v1857 = vunpack.c.h.b16 %v1481
    %v1858 = vunpack.c.l.b16 %v1482
    %v1859 = vunpack.c.h.b16 %v1482
    %v1860 = vunpack.c.l.b16 %v1483
    %v1861 = vunpack.c.h.b16 %v1483
    %v1862 = vunpack.c.l.b16 %v1484
    %v1863 = vunpack.c.h.b16 %v1484
    %v1864 = vunpack.c.l.b16 %v1485
    %v1865 = vunpack.c.h.b16 %v1485
    %v1866 = vunpack.c.l.b16 %v1486
    %v1867 = vunpack.c.h.b16 %v1486
    %v1868 = vunpack.c.l.b16 %v1487
    %v1869 = vunpack.c.h.b16 %v1487
    %v1870 = vunpack.c.l.b16 %v1488
    %v1871 = vunpack.c.h.b16 %v1488
    %v1872 = vunpack.c.l.b16 %v1489
    %v1873 = vunpack.c.h.b16 %v1489
    %v1874 = vunpack.c.l.b16 %v1490
    %v1875 = vunpack.c.h.b16 %v1490
    %v1876 = vunpack.c.l.b16 %v1491
    %v1877 = vunpack.c.h.b16 %v1491
    %v1878 = vunpack.c.l.b16 %v1492
    %v1879 = vunpack.c.h.b16 %v1492
    %v1880 = vunpack.c.l.b16 %v1493
    %v1881 = vunpack.c.h.b16 %v1493
    %v1882 = vunpack.c.l.b16 %v1494
    %v1883 = vunpack.c.h.b16 %v1494
    %v1884 = vunpack.c.l.b16 %v1495
    %v1885 = vunpack.c.h.b16 %v1495
    %v1886 = vunpack.c.l.b16 %v1496
    %v1887 = vunpack.c.h.b16 %v1496
    %v1888 = vunpack.c.l.b16 %v1497
    %v1889 = vunpack.c.h.b16 %v1497
    %v1890 = vunpack.c.l.b16 %v1498
    %v1891 = vunpack.c.h.b16 %v1498
    %v1892 = vunpack.c.l.b16 %v1499
    %v1893 = vunpack.c.h.b16 %v1499
    %v1894 = vpack.c.b16 %v1642, %v1638
    %v1895 = vpack.c.b16 %v1643, %v1639
    %v1896 = vpack.c.b16 %v1644, %v1640
    %v1897 = vpack.c.b16 %v1645, %v1641
    %v1898 = vpack.c.b16 %v1650, %v1646
    %v1899 = vpack.c.b16 %v1651, %v1647
    %v1900 = vpack.c.b16 %v1652, %v1648
    %v1901 = vpack.c.b16 %v1653, %v1649
    %v1902 = vpack.c.b16 %v1658, %v1654
    %v1903 = vpack.c.b16 %v1659, %v1655
    %v1904 = vpack.c.b16 %v1660, %v1656
    %v1905 = vpack.c.b16 %v1661, %v1657
    %v1906 = vpack.c.b16 %v1666, %v1662
    %v1907 = vpack.c.b16 %v1667, %v1663
    %v1908 = vpack.c.b16 %v1668, %v1664
    %v1909 = vpack.c.b16 %v1669, %v1665
    %v1910 = vpack.c.b16 %v1674, %v1670
    %v1911 = vpack.c.b16 %v1675, %v1671
    %v1912 = vpack.c.b16 %v1676, %v1672
    %v1913 = vpack.c.b16 %v1677, %v1673
    %v1914 = vpack.c.b16 %v1682, %v1678
    %v1915 = vpack.c.b16 %v1683, %v1679
    %v1916 = vpack.c.b16 %v1684, %v1680
    %v1917 = vpack.c.b16 %v1685, %v1681
    %v1918 = vpack.c.b16 %v1690, %v1686
    %v1919 = vpack.c.b16 %v1691, %v1687
    %v1920 = vpack.c.b16 %v1692, %v1688
    %v1921 = vpack.c.b16 %v1693, %v1689
    %v1922 = vpack.c.b16 %v1698, %v1694
    %v1923 = vpack.c.b16 %v1699, %v1695
    %v1924 = vpack.c.b16 %v1700, %v1696
    %v1925 = vpack.c.b16 %v1701, %v1697
    %v1926 = vpack.c.b16 %v1706, %v1702
    %v1927 = vpack.c.b16 %v1707, %v1703
    %v1928 = vpack.c.b16 %v1708, %v1704
    %v1929 = vpack.c.b16 %v1709, %v1705
    %v1930 = vpack.c.b16 %v1714, %v1710
    %v1931 = vpack.c.b16 %v1715, %v1711
    %v1932 = vpack.c.b16 %v1716, %v1712
    %v1933 = vpack.c.b16 %v1717, %v1713
    %v1934 = vpack.c.b16 %v1722, %v1718
    %v1935 = vpack.c.b16 %v1723, %v1719
    %v1936 = vpack.c.b16 %v1724, %v1720
    %v1937 = vpack.c.b16 %v1725, %v1721
    %v1938 = vpack.c.b16 %v1730, %v1726
    %v1939 = vpack.c.b16 %v1731, %v1727
    %v1940 = vpack.c.b16 %v1732, %v1728
    %v1941 = vpack.c.b16 %v1733, %v1729
    %v1942 = vpack.c.b16 %v1738, %v1734
    %v1943 = vpack.c.b16 %v1739, %v1735
    %v1944 = vpack.c.b16 %v1740, %v1736
    %v1945 = vpack.c.b16 %v1741, %v1737
    %v1946 = vpack.c.b16 %v1746, %v1742
    %v1947 = vpack.c.b16 %v1747, %v1743
    %v1948 = vpack.c.b16 %v1748, %v1744
    %v1949 = vpack.c.b16 %v1749, %v1745
    %v1950 = vpack.c.b16 %v1754, %v1750
    %v1951 = vpack.c.b16 %v1755, %v1751
    %v1952 = vpack.c.b16 %v1756, %v1752
    %v1953 = vpack.c.b16 %v1757, %v1753
    %v1954 = vpack.c.b16 %v1762, %v1758
    %v1955 = vpack.c.b16 %v1763, %v1759
    %v1956 = vpack.c.b16 %v1764, %v1760
    %v1957 = vpack.c.b16 %v1765, %v1761
    %v1958 = vpack.c.b16 %v1770, %v1766
    %v1959 = vpack.c.b16 %v1771, %v1767
    %v1960 = vpack.c.b16 %v1772, %v1768
    %v1961 = vpack.c.b16 %v1773, %v1769
    %v1962 = vpack.c.b16 %v1778, %v1774
    %v1963 = vpack.c.b16 %v1779, %v1775
    %v1964 = vpack.c.b16 %v1780, %v1776
    %v1965 = vpack.c.b16 %v1781, %v1777
    %v1966 = vpack.c.b16 %v1786, %v1782
    %v1967 = vpack.c.b16 %v1787, %v1783
    %v1968 = vpack.c.b16 %v1788, %v1784
    %v1969 = vpack.c.b16 %v1789, %v1785
    %v1970 = vpack.c.b16 %v1794, %v1790
    %v1971 = vpack.c.b16 %v1795, %v1791
    %v1972 = vpack.c.b16 %v1796, %v1792
    %v1973 = vpack.c.b16 %v1797, %v1793
    %v1974 = vpack.c.b16 %v1802, %v1798
    %v1975 = vpack.c.b16 %v1803, %v1799
    %v1976 = vpack.c.b16 %v1804, %v1800
    %v1977 = vpack.c.b16 %v1805, %v1801
    %v1978 = vpack.c.b16 %v1810, %v1806
    %v1979 = vpack.c.b16 %v1811, %v1807
    %v1980 = vpack.c.b16 %v1812, %v1808
    %v1981 = vpack.c.b16 %v1813, %v1809
    %v1982 = vpack.c.b16 %v1818, %v1814
    %v1983 = vpack.c.b16 %v1819, %v1815
    %v1984 = vpack.c.b16 %v1820, %v1816
    %v1985 = vpack.c.b16 %v1821, %v1817
    %v1986 = vpack.c.b16 %v1826, %v1822
    %v1987 = vpack.c.b16 %v1827, %v1823
    %v1988 = vpack.c.b16 %v1828, %v1824
    %v1989 = vpack.c.b16 %v1829, %v1825
    %v1990 = vpack.c.b16 %v1834, %v1830
    %v1991 = vpack.c.b16 %v1835, %v1831
    %v1992 = vpack.c.b16 %v1836, %v1832
    %v1993 = vpack.c.b16 %v1837, %v1833
    %v1994 = vpack.c.b16 %v1842, %v1838
    %v1995 = vpack.c.b16 %v1843, %v1839
    %v1996 = vpack.c.b16 %v1844, %v1840
    %v1997 = vpack.c.b16 %v1845, %v1841
    %v1998 = vpack.c.b16 %v1850, %v1846
    %v1999 = vpack.c.b16 %v1851, %v1847
    %v2000 = vpack.c.b16 %v1852, %v1848
    %v2001 = vpack.c.b16 %v1853, %v1849
    %v2002 = vpack.c.b16 %v1858, %v1854
    %v2003 = vpack.c.b16 %v1859, %v1855
    %v2004 = vpack.c.b16 %v1860, %v1856
    %v2005 = vpack.c.b16 %v1861, %v1857
    %v2006 = vpack.c.b16 %v1866, %v1862
    %v2007 = vpack.c.b16 %v1867, %v1863
    %v2008 = vpack.c.b16 %v1868, %v1864
    %v2009 = vpack.c.b16 %v1869, %v1865
    %v2010 = vpack.c.b16 %v1874, %v1870
    %v2011 = vpack.c.b16 %v1875, %v1871
    %v2012 = vpack.c.b16 %v1876, %v1872
    %v2013 = vpack.c.b16 %v1877, %v1873
    %v2014 = vpack.c.b16 %v1882, %v1878
    %v2015 = vpack.c.b16 %v1883, %v1879
    %v2016 = vpack.c.b16 %v1884, %v1880
    %v2017 = vpack.c.b16 %v1885, %v1881
    %v2018 = vpack.c.b16 %v1890, %v1886
    %v2019 = vpack.c.b16 %v1891, %v1887
    %v2020 = vpack.c.b16 %v1892, %v1888
    %v2021 = vpack.c.b16 %v1893, %v1889
    %2150 = vmatpush.bf16.msra.mxu0 %v1922
    %2151 = vmatpush.bf16.msra.mxu0 %v1918
    %2152 = vmatpush.bf16.msra.mxu0 %v1914
    %2153 = vmatpush.bf16.msra.mxu0 %v1910
    %2154 = vmatpush.bf16.msra.mxu0 %v1906
    %2155 = vmatpush.bf16.msra.mxu0 %v1902
    %2156 = vmatpush.bf16.msra.mxu0 %v1898
    %2157 = vmatpush.bf16.msra.mxu0 %v1894
    %2158 = vmatmul.bf16.gmra.mxu0 %v1368
    %v2159 = vpop.f32.mrf.mxu0
    %v2160 = vadd.f32 %v1502, %v2159
    %v2161 = vpop.f32.mrf.mxu0
    %v2162 = vadd.f32 %v1502, %v2161
    %2163 = vdwg.mxu0
    %2164 = vmatpush.bf16.msra.mxu0 %v1954
    %2165 = vmatpush.bf16.msra.mxu0 %v1950
    %2166 = vmatpush.bf16.msra.mxu0 %v1946
    %2167 = vmatpush.bf16.msra.mxu0 %v1942
    %2168 = vmatpush.bf16.msra.mxu0 %v1938
    %2169 = vmatpush.bf16.msra.mxu0 %v1934
    %2170 = vmatpush.bf16.msra.mxu0 %v1930
    %2171 = vmatpush.bf16.msra.mxu0 %v1926
    %2172 = vmatmul.bf16.gmra.mxu0 %v1369
    %v2173 = vpop.f32.mrf.mxu0
    %v2174 = vadd.f32 %v2160, %v2173
    %v2175 = vpop.f32.mrf.mxu0
    %v2176 = vadd.f32 %v2162, %v2175
    %2177 = vdwg.mxu0
    %2178 = vmatpush.bf16.msra.mxu0 %v1986
    %2179 = vmatpush.bf16.msra.mxu0 %v1982
    %2180 = vmatpush.bf16.msra.mxu0 %v1978
    %2181 = vmatpush.bf16.msra.mxu0 %v1974
    %2182 = vmatpush.bf16.msra.mxu0 %v1970
    %2183 = vmatpush.bf16.msra.mxu0 %v1966
    %2184 = vmatpush.bf16.msra.mxu0 %v1962
    %2185 = vmatpush.bf16.msra.mxu0 %v1958
    %2186 = vmatmul.bf16.gmra.mxu0 %v1370
    %v2187 = vpop.f32.mrf.mxu0
    %v2188 = vadd.f32 %v2174, %v2187
    %v2189 = vpop.f32.mrf.mxu0
    %v2190 = vadd.f32 %v2176, %v2189
    %2191 = vdwg.mxu0
    %2192 = vmatpush.bf16.msra.mxu0 %v2018
    %2193 = vmatpush.bf16.msra.mxu0 %v2014
    %2194 = vmatpush.bf16.msra.mxu0 %v2010
    %2195 = vmatpush.bf16.msra.mxu0 %v2006
    %2196 = vmatpush.bf16.msra.mxu0 %v2002
    %2197 = vmatpush.bf16.msra.mxu0 %v1998
    %2198 = vmatpush.bf16.msra.mxu0 %v1994
    %2199 = vmatpush.bf16.msra.mxu0 %v1990
    %2200 = vmatmul.bf16.gmra.mxu0 %v1371
    %v2201 = vpop.f32.mrf.mxu0
    %v2202 = vadd.f32 %v2188, %v2201
    %v2203 = vpop.f32.mrf.mxu0
    %v2204 = vadd.f32 %v2190, %v2203
    %2205 = vdwg.mxu0
    %2206 = vmatpush.bf16.msra.mxu0 %v1923
    %2207 = vmatpush.bf16.msra.mxu0 %v1919
    %2208 = vmatpush.bf16.msra.mxu0 %v1915
    %2209 = vmatpush.bf16.msra.mxu0 %v1911
    %2210 = vmatpush.bf16.msra.mxu0 %v1907
    %2211 = vmatpush.bf16.msra.mxu0 %v1903
    %2212 = vmatpush.bf16.msra.mxu0 %v1899
    %2213 = vmatpush.bf16.msra.mxu0 %v1895
    %2214 = vmatmul.bf16.gmra.mxu0 %v1368
    %v2215 = vpop.f32.mrf.mxu0
    %v2216 = vadd.f32 %v1503, %v2215
    %v2217 = vpop.f32.mrf.mxu0
    %v2218 = vadd.f32 %v1503, %v2217
    %2219 = vdwg.mxu0
    %2220 = vmatpush.bf16.msra.mxu0 %v1955
    %2221 = vmatpush.bf16.msra.mxu0 %v1951
    %2222 = vmatpush.bf16.msra.mxu0 %v1947
    %2223 = vmatpush.bf16.msra.mxu0 %v1943
    %2224 = vmatpush.bf16.msra.mxu0 %v1939
    %2225 = vmatpush.bf16.msra.mxu0 %v1935
    %2226 = vmatpush.bf16.msra.mxu0 %v1931
    %2227 = vmatpush.bf16.msra.mxu0 %v1927
    %2228 = vmatmul.bf16.gmra.mxu0 %v1369
    %v2229 = vpop.f32.mrf.mxu0
    %v2230 = vadd.f32 %v2216, %v2229
    %v2231 = vpop.f32.mrf.mxu0
    %v2232 = vadd.f32 %v2218, %v2231
    %2233 = vdwg.mxu0
    %2234 = vmatpush.bf16.msra.mxu0 %v1987
    %2235 = vmatpush.bf16.msra.mxu0 %v1983
    %2236 = vmatpush.bf16.msra.mxu0 %v1979
    %2237 = vmatpush.bf16.msra.mxu0 %v1975
    %2238 = vmatpush.bf16.msra.mxu0 %v1971
    %2239 = vmatpush.bf16.msra.mxu0 %v1967
    %2240 = vmatpush.bf16.msra.mxu0 %v1963
    %2241 = vmatpush.bf16.msra.mxu0 %v1959
    %2242 = vmatmul.bf16.gmra.mxu0 %v1370
    %v2243 = vpop.f32.mrf.mxu0
    %v2244 = vadd.f32 %v2230, %v2243
    %v2245 = vpop.f32.mrf.mxu0
    %v2246 = vadd.f32 %v2232, %v2245
    %2247 = vdwg.mxu0
    %2248 = vmatpush.bf16.msra.mxu0 %v2019
    %2249 = vmatpush.bf16.msra.mxu0 %v2015
    %2250 = vmatpush.bf16.msra.mxu0 %v2011
    %2251 = vmatpush.bf16.msra.mxu0 %v2007
    %2252 = vmatpush.bf16.msra.mxu0 %v2003
    %2253 = vmatpush.bf16.msra.mxu0 %v1999
    %2254 = vmatpush.bf16.msra.mxu0 %v1995
    %2255 = vmatpush.bf16.msra.mxu0 %v1991
    %2256 = vmatmul.bf16.gmra.mxu0 %v1371
    %v2257 = vpop.f32.mrf.mxu0
    %v2258 = vadd.f32 %v2244, %v2257
    %v2259 = vpop.f32.mrf.mxu0
    %v2260 = vadd.f32 %v2246, %v2259
    %2261 = vdwg.mxu0
    %2262 = vmatpush.bf16.msra.mxu0 %v1924
    %2263 = vmatpush.bf16.msra.mxu0 %v1920
    %2264 = vmatpush.bf16.msra.mxu0 %v1916
    %2265 = vmatpush.bf16.msra.mxu0 %v1912
    %2266 = vmatpush.bf16.msra.mxu0 %v1908
    %2267 = vmatpush.bf16.msra.mxu0 %v1904
    %2268 = vmatpush.bf16.msra.mxu0 %v1900
    %2269 = vmatpush.bf16.msra.mxu0 %v1896
    %2270 = vmatmul.bf16.gmra.mxu0 %v1368
    %v2271 = vpop.f32.mrf.mxu0
    %v2272 = vadd.f32 %v1504, %v2271
    %v2273 = vpop.f32.mrf.mxu0
    %v2274 = vadd.f32 %v1504, %v2273
    %2275 = vdwg.mxu0
    %2276 = vmatpush.bf16.msra.mxu0 %v1956
    %2277 = vmatpush.bf16.msra.mxu0 %v1952
    %2278 = vmatpush.bf16.msra.mxu0 %v1948
    %2279 = vmatpush.bf16.msra.mxu0 %v1944
    %2280 = vmatpush.bf16.msra.mxu0 %v1940
    %2281 = vmatpush.bf16.msra.mxu0 %v1936
    %2282 = vmatpush.bf16.msra.mxu0 %v1932
    %2283 = vmatpush.bf16.msra.mxu0 %v1928
    %2284 = vmatmul.bf16.gmra.mxu0 %v1369
    %v2285 = vpop.f32.mrf.mxu0
    %v2286 = vadd.f32 %v2272, %v2285
    %v2287 = vpop.f32.mrf.mxu0
    %v2288 = vadd.f32 %v2274, %v2287
    %2289 = vdwg.mxu0
    %2290 = vmatpush.bf16.msra.mxu0 %v1988
    %2291 = vmatpush.bf16.msra.mxu0 %v1984
    %2292 = vmatpush.bf16.msra.mxu0 %v1980
    %2293 = vmatpush.bf16.msra.mxu0 %v1976
    %2294 = vmatpush.bf16.msra.mxu0 %v1972
    %2295 = vmatpush.bf16.msra.mxu0 %v1968
    %2296 = vmatpush.bf16.msra.mxu0 %v1964
    %2297 = vmatpush.bf16.msra.mxu0 %v1960
    %2298 = vmatmul.bf16.gmra.mxu0 %v1370
    %v2299 = vpop.f32.mrf.mxu0
    %v2300 = vadd.f32 %v2286, %v2299
    %v2301 = vpop.f32.mrf.mxu0
    %v2302 = vadd.f32 %v2288, %v2301
    %2303 = vdwg.mxu0
    %2304 = vmatpush.bf16.msra.mxu0 %v2020
    %2305 = vmatpush.bf16.msra.mxu0 %v2016
    %2306 = vmatpush.bf16.msra.mxu0 %v2012
    %2307 = vmatpush.bf16.msra.mxu0 %v2008
    %2308 = vmatpush.bf16.msra.mxu0 %v2004
    %2309 = vmatpush.bf16.msra.mxu0 %v2000
    %2310 = vmatpush.bf16.msra.mxu0 %v1996
    %2311 = vmatpush.bf16.msra.mxu0 %v1992
    %2312 = vmatmul.bf16.gmra.mxu0 %v1371
    %v2313 = vpop.f32.mrf.mxu0
    %v2314 = vadd.f32 %v2300, %v2313
    %v2315 = vpop.f32.mrf.mxu0
    %v2316 = vadd.f32 %v2302, %v2315
    %2317 = vdwg.mxu0
    %2318 = vmatpush.bf16.msra.mxu0 %v1925
    %2319 = vmatpush.bf16.msra.mxu0 %v1921
    %2320 = vmatpush.bf16.msra.mxu0 %v1917
    %2321 = vmatpush.bf16.msra.mxu0 %v1913
    %2322 = vmatpush.bf16.msra.mxu0 %v1909
    %2323 = vmatpush.bf16.msra.mxu0 %v1905
    %2324 = vmatpush.bf16.msra.mxu0 %v1901
    %2325 = vmatpush.bf16.msra.mxu0 %v1897
    %2326 = vmatmul.bf16.gmra.mxu0 %v1368
    %v2327 = vpop.f32.mrf.mxu0
    %v2328 = vadd.f32 %v1505, %v2327
    %v2329 = vpop.f32.mrf.mxu0
    %v2330 = vadd.f32 %v1505, %v2329
    %2331 = vdwg.mxu0
    %2332 = vmatpush.bf16.msra.mxu0 %v1957
    %2333 = vmatpush.bf16.msra.mxu0 %v1953
    %2334 = vmatpush.bf16.msra.mxu0 %v1949
    %2335 = vmatpush.bf16.msra.mxu0 %v1945
    %2336 = vmatpush.bf16.msra.mxu0 %v1941
    %2337 = vmatpush.bf16.msra.mxu0 %v1937
    %2338 = vmatpush.bf16.msra.mxu0 %v1933
    %2339 = vmatpush.bf16.msra.mxu0 %v1929
    %2340 = vmatmul.bf16.gmra.mxu0 %v1369
    %v2341 = vpop.f32.mrf.mxu0
    %v2342 = vadd.f32 %v2328, %v2341
    %v2343 = vpop.f32.mrf.mxu0
    %v2344 = vadd.f32 %v2330, %v2343
    %2345 = vdwg.mxu0
    %2346 = vmatpush.bf16.msra.mxu0 %v1989
    %2347 = vmatpush.bf16.msra.mxu0 %v1985
    %2348 = vmatpush.bf16.msra.mxu0 %v1981
    %2349 = vmatpush.bf16.msra.mxu0 %v1977
    %2350 = vmatpush.bf16.msra.mxu0 %v1973
    %2351 = vmatpush.bf16.msra.mxu0 %v1969
    %2352 = vmatpush.bf16.msra.mxu0 %v1965
    %2353 = vmatpush.bf16.msra.mxu0 %v1961
    %2354 = vmatmul.bf16.gmra.mxu0 %v1370
    %v2355 = vpop.f32.mrf.mxu0
    %v2356 = vadd.f32 %v2342, %v2355
    %v2357 = vpop.f32.mrf.mxu0
    %v2358 = vadd.f32 %v2344, %v2357
    %2359 = vdwg.mxu0
    %2360 = vmatpush.bf16.msra.mxu0 %v2021
    %2361 = vmatpush.bf16.msra.mxu0 %v2017
    %2362 = vmatpush.bf16.msra.mxu0 %v2013
    %2363 = vmatpush.bf16.msra.mxu0 %v2009
    %2364 = vmatpush.bf16.msra.mxu0 %v2005
    %2365 = vmatpush.bf16.msra.mxu0 %v2001
    %2366 = vmatpush.bf16.msra.mxu0 %v1997
    %2367 = vmatpush.bf16.msra.mxu0 %v1993
    %2368 = vmatmul.bf16.gmra.mxu0 %v1371
    %v2369 = vpop.f32.mrf.mxu0
    %v2370 = vadd.f32 %v2356, %v2369
    %v2371 = vpop.f32.mrf.mxu0
    %v2372 = vadd.f32 %v2358, %v2371
    %2373 = vdwg.mxu0
    %v2374 = vmax.f32 %v2202, 0.0
    %v2375 = vmax.f32 %v2258, 0.0
    %v2376 = vmax.f32 %v2314, 0.0
    %v2377 = vmax.f32 %v2370, 0.0
    %v2378 = vmax.f32 %v2204, 0.0
    %v2379 = vmax.f32 %v2260, 0.0
    %v2380 = vmax.f32 %v2316, 0.0
    %v2381 = vmax.f32 %v2372, 0.0
    %v2382 = vpack.c.bf16 %v2378, %v2374
    %v2383 = vpack.c.bf16 %v2379, %v2375
    %v2384 = vpack.c.bf16 %v2380, %v2376
    %v2385 = vpack.c.bf16 %v2381, %v2377
    %v2386 = vld [vmem:[#allocation13] sm:$0xff]
    %v2387 = vld [vmem:[#allocation13 + $0x8] sm:$0xff]
    %v2388 = vld [vmem:[#allocation13 + $0x10] sm:$0xff]
    %v2389 = vld [vmem:[#allocation13 + $0x18] sm:$0xff]
    %v2390 = vld [vmem:[#allocation13 + $0x20] sm:$0xff]
    %v2391 = vld [vmem:[#allocation13 + $0x28] sm:$0xff]
    %v2392 = vld [vmem:[#allocation13 + $0x30] sm:$0xff]
    %v2393 = vld [vmem:[#allocation13 + $0x38] sm:$0xff]
    %v2394 = vld [vmem:[#allocation13 + $0x40] sm:$0xff]
    %v2395 = vld [vmem:[#allocation13 + $0x48] sm:$0xff]
    %v2396 = vld [vmem:[#allocation13 + $0x50] sm:$0xff]
    %v2397 = vld [vmem:[#allocation13 + $0x58] sm:$0xff]
    %v2398 = vld [vmem:[#allocation13 + $0x60] sm:$0xff]
    %v2399 = vld [vmem:[#allocation13 + $0x68] sm:$0xff]
    %v2400 = vld [vmem:[#allocation13 + $0x70] sm:$0xff]
    %v2401 = vld [vmem:[#allocation13 + $0x78] sm:$0xff]
    %v2402 = vld [vmem:[#allocation13 + $0x80] sm:$0xff]
    %v2403 = vld [vmem:[#allocation13 + $0x88] sm:$0xff]
    %v2404 = vld [vmem:[#allocation13 + $0x90] sm:$0xff]
    %v2405 = vld [vmem:[#allocation13 + $0x98] sm:$0xff]
    %v2406 = vld [vmem:[#allocation13 + $0xa0] sm:$0xff]
    %v2407 = vld [vmem:[#allocation13 + $0xa8] sm:$0xff]
    %v2408 = vld [vmem:[#allocation13 + $0xb0] sm:$0xff]
    %v2409 = vld [vmem:[#allocation13 + $0xb8] sm:$0xff]
    %v2410 = vld [vmem:[#allocation13 + $0xc0] sm:$0xff]
    %v2411 = vld [vmem:[#allocation13 + $0xc8] sm:$0xff]
    %v2412 = vld [vmem:[#allocation13 + $0xd0] sm:$0xff]
    %v2413 = vld [vmem:[#allocation13 + $0xd8] sm:$0xff]
    %v2414 = vld [vmem:[#allocation13 + $0xe0] sm:$0xff]
    %v2415 = vld [vmem:[#allocation13 + $0xe8] sm:$0xff]
    %v2416 = vld [vmem:[#allocation13 + $0xf0] sm:$0xff]
    %v2417 = vld [vmem:[#allocation13 + $0xf8] sm:$0xff]
    %v2418 = vld [vmem:[#allocation13 + $0x100] sm:$0xff]
    %v2419 = vld [vmem:[#allocation13 + $0x108] sm:$0xff]
    %v2420 = vld [vmem:[#allocation13 + $0x110] sm:$0xff]
    %v2421 = vld [vmem:[#allocation13 + $0x118] sm:$0xff]
    %v2422 = vld [vmem:[#allocation13 + $0x120] sm:$0xff]
    %v2423 = vld [vmem:[#allocation13 + $0x128] sm:$0xff]
    %v2424 = vld [vmem:[#allocation13 + $0x130] sm:$0xff]
    %v2425 = vld [vmem:[#allocation13 + $0x138] sm:$0xff]
    %v2426 = vld [vmem:[#allocation13 + $0x140] sm:$0xff]
    %v2427 = vld [vmem:[#allocation13 + $0x148] sm:$0xff]
    %v2428 = vld [vmem:[#allocation13 + $0x150] sm:$0xff]
    %v2429 = vld [vmem:[#allocation13 + $0x158] sm:$0xff]
    %v2430 = vld [vmem:[#allocation13 + $0x160] sm:$0xff]
    %v2431 = vld [vmem:[#allocation13 + $0x168] sm:$0xff]
    %v2432 = vld [vmem:[#allocation13 + $0x170] sm:$0xff]
    %v2433 = vld [vmem:[#allocation13 + $0x178] sm:$0xff]
    %v2434 = vld [vmem:[#allocation13 + $0x180] sm:$0xff]
    %v2435 = vld [vmem:[#allocation13 + $0x188] sm:$0xff]
    %v2436 = vld [vmem:[#allocation13 + $0x190] sm:$0xff]
    %v2437 = vld [vmem:[#allocation13 + $0x198] sm:$0xff]
    %v2438 = vld [vmem:[#allocation13 + $0x1a0] sm:$0xff]
    %v2439 = vld [vmem:[#allocation13 + $0x1a8] sm:$0xff]
    %v2440 = vld [vmem:[#allocation13 + $0x1b0] sm:$0xff]
    %v2441 = vld [vmem:[#allocation13 + $0x1b8] sm:$0xff]
    %v2442 = vld [vmem:[#allocation13 + $0x1c0] sm:$0xff]
    %v2443 = vld [vmem:[#allocation13 + $0x1c8] sm:$0xff]
    %v2444 = vld [vmem:[#allocation13 + $0x1d0] sm:$0xff]
    %v2445 = vld [vmem:[#allocation13 + $0x1d8] sm:$0xff]
    %v2446 = vld [vmem:[#allocation13 + $0x1e0] sm:$0xff]
    %v2447 = vld [vmem:[#allocation13 + $0x1e8] sm:$0xff]
    %v2448 = vld [vmem:[#allocation13 + $0x1f0] sm:$0xff]
    %v2449 = vld [vmem:[#allocation13 + $0x1f8] sm:$0xff]
    %v2450 = vld [vmem:[#allocation13 + $0x200] sm:$0xff]
    %v2451 = vld [vmem:[#allocation13 + $0x208] sm:$0xff]
    %v2452 = vld [vmem:[#allocation13 + $0x210] sm:$0xff]
    %v2453 = vld [vmem:[#allocation13 + $0x218] sm:$0xff]
    %v2454 = vld [vmem:[#allocation13 + $0x220] sm:$0xff]
    %v2455 = vld [vmem:[#allocation13 + $0x228] sm:$0xff]
    %v2456 = vld [vmem:[#allocation13 + $0x230] sm:$0xff]
    %v2457 = vld [vmem:[#allocation13 + $0x238] sm:$0xff]
    %v2458 = vld [vmem:[#allocation13 + $0x240] sm:$0xff]
    %v2459 = vld [vmem:[#allocation13 + $0x248] sm:$0xff]
    %v2460 = vld [vmem:[#allocation13 + $0x250] sm:$0xff]
    %v2461 = vld [vmem:[#allocation13 + $0x258] sm:$0xff]
    %v2462 = vld [vmem:[#allocation13 + $0x260] sm:$0xff]
    %v2463 = vld [vmem:[#allocation13 + $0x268] sm:$0xff]
    %v2464 = vld [vmem:[#allocation13 + $0x270] sm:$0xff]
    %v2465 = vld [vmem:[#allocation13 + $0x278] sm:$0xff]
    %v2466 = vld [vmem:[#allocation13 + $0x280] sm:$0xff]
    %v2467 = vld [vmem:[#allocation13 + $0x288] sm:$0xff]
    %v2468 = vld [vmem:[#allocation13 + $0x290] sm:$0xff]
    %v2469 = vld [vmem:[#allocation13 + $0x298] sm:$0xff]
    %v2470 = vld [vmem:[#allocation13 + $0x2a0] sm:$0xff]
    %v2471 = vld [vmem:[#allocation13 + $0x2a8] sm:$0xff]
    %v2472 = vld [vmem:[#allocation13 + $0x2b0] sm:$0xff]
    %v2473 = vld [vmem:[#allocation13 + $0x2b8] sm:$0xff]
    %v2474 = vld [vmem:[#allocation13 + $0x2c0] sm:$0xff]
    %v2475 = vld [vmem:[#allocation13 + $0x2c8] sm:$0xff]
    %v2476 = vld [vmem:[#allocation13 + $0x2d0] sm:$0xff]
    %v2477 = vld [vmem:[#allocation13 + $0x2d8] sm:$0xff]
    %v2478 = vld [vmem:[#allocation13 + $0x2e0] sm:$0xff]
    %v2479 = vld [vmem:[#allocation13 + $0x2e8] sm:$0xff]
    %v2480 = vld [vmem:[#allocation13 + $0x2f0] sm:$0xff]
    %v2481 = vld [vmem:[#allocation13 + $0x2f8] sm:$0xff]
    %v2482 = vld [vmem:[#allocation13 + $0x300] sm:$0xff]
    %v2483 = vld [vmem:[#allocation13 + $0x308] sm:$0xff]
    %v2484 = vld [vmem:[#allocation13 + $0x310] sm:$0xff]
    %v2485 = vld [vmem:[#allocation13 + $0x318] sm:$0xff]
    %v2486 = vld [vmem:[#allocation13 + $0x320] sm:$0xff]
    %v2487 = vld [vmem:[#allocation13 + $0x328] sm:$0xff]
    %v2488 = vld [vmem:[#allocation13 + $0x330] sm:$0xff]
    %v2489 = vld [vmem:[#allocation13 + $0x338] sm:$0xff]
    %v2490 = vld [vmem:[#allocation13 + $0x340] sm:$0xff]
    %v2491 = vld [vmem:[#allocation13 + $0x348] sm:$0xff]
    %v2492 = vld [vmem:[#allocation13 + $0x350] sm:$0xff]
    %v2493 = vld [vmem:[#allocation13 + $0x358] sm:$0xff]
    %v2494 = vld [vmem:[#allocation13 + $0x360] sm:$0xff]
    %v2495 = vld [vmem:[#allocation13 + $0x368] sm:$0xff]
    %v2496 = vld [vmem:[#allocation13 + $0x370] sm:$0xff]
    %v2497 = vld [vmem:[#allocation13 + $0x378] sm:$0xff]
    %v2498 = vld [vmem:[#allocation13 + $0x380] sm:$0xff]
    %v2499 = vld [vmem:[#allocation13 + $0x388] sm:$0xff]
    %v2500 = vld [vmem:[#allocation13 + $0x390] sm:$0xff]
    %v2501 = vld [vmem:[#allocation13 + $0x398] sm:$0xff]
    %v2502 = vld [vmem:[#allocation13 + $0x3a0] sm:$0xff]
    %v2503 = vld [vmem:[#allocation13 + $0x3a8] sm:$0xff]
    %v2504 = vld [vmem:[#allocation13 + $0x3b0] sm:$0xff]
    %v2505 = vld [vmem:[#allocation13 + $0x3b8] sm:$0xff]
    %v2506 = vld [vmem:[#allocation13 + $0x3c0] sm:$0xff]
    %v2507 = vld [vmem:[#allocation13 + $0x3c8] sm:$0xff]
    %v2508 = vld [vmem:[#allocation13 + $0x3d0] sm:$0xff]
    %v2509 = vld [vmem:[#allocation13 + $0x3d8] sm:$0xff]
    %v2510 = vld [vmem:[#allocation13 + $0x3e0] sm:$0xff]
    %v2511 = vld [vmem:[#allocation13 + $0x3e8] sm:$0xff]
    %v2512 = vld [vmem:[#allocation13 + $0x3f0] sm:$0xff]
    %v2513 = vld [vmem:[#allocation13 + $0x3f8] sm:$0xff]
    %v2514 = vld [vmem:[%s8] sm:$0xf]
    %v2516 = vperm.slane %v2514, 0
    %v2517 = vperm.slane %v2514, 1
    %v2518 = vperm.slane %v2514, 2
    %v2519 = vperm.slane %v2514, 3
    %v2652 = vunpack.c.l.b16 %v2386
    %v2653 = vunpack.c.h.b16 %v2386
    %v2654 = vunpack.c.l.b16 %v2387
    %v2655 = vunpack.c.h.b16 %v2387
    %v2656 = vunpack.c.l.b16 %v2388
    %v2657 = vunpack.c.h.b16 %v2388
    %v2658 = vunpack.c.l.b16 %v2389
    %v2659 = vunpack.c.h.b16 %v2389
    %v2660 = vunpack.c.l.b16 %v2390
    %v2661 = vunpack.c.h.b16 %v2390
    %v2662 = vunpack.c.l.b16 %v2391
    %v2663 = vunpack.c.h.b16 %v2391
    %v2664 = vunpack.c.l.b16 %v2392
    %v2665 = vunpack.c.h.b16 %v2392
    %v2666 = vunpack.c.l.b16 %v2393
    %v2667 = vunpack.c.h.b16 %v2393
    %v2668 = vunpack.c.l.b16 %v2394
    %v2669 = vunpack.c.h.b16 %v2394
    %v2670 = vunpack.c.l.b16 %v2395
    %v2671 = vunpack.c.h.b16 %v2395
    %v2672 = vunpack.c.l.b16 %v2396
    %v2673 = vunpack.c.h.b16 %v2396
    %v2674 = vunpack.c.l.b16 %v2397
    %v2675 = vunpack.c.h.b16 %v2397
    %v2676 = vunpack.c.l.b16 %v2398
    %v2677 = vunpack.c.h.b16 %v2398
    %v2678 = vunpack.c.l.b16 %v2399
    %v2679 = vunpack.c.h.b16 %v2399
    %v2680 = vunpack.c.l.b16 %v2400
    %v2681 = vunpack.c.h.b16 %v2400
    %v2682 = vunpack.c.l.b16 %v2401
    %v2683 = vunpack.c.h.b16 %v2401
    %v2684 = vunpack.c.l.b16 %v2402
    %v2685 = vunpack.c.h.b16 %v2402
    %v2686 = vunpack.c.l.b16 %v2403
    %v2687 = vunpack.c.h.b16 %v2403
    %v2688 = vunpack.c.l.b16 %v2404
    %v2689 = vunpack.c.h.b16 %v2404
    %v2690 = vunpack.c.l.b16 %v2405
    %v2691 = vunpack.c.h.b16 %v2405
    %v2692 = vunpack.c.l.b16 %v2406
    %v2693 = vunpack.c.h.b16 %v2406
    %v2694 = vunpack.c.l.b16 %v2407
    %v2695 = vunpack.c.h.b16 %v2407
    %v2696 = vunpack.c.l.b16 %v2408
    %v2697 = vunpack.c.h.b16 %v2408
    %v2698 = vunpack.c.l.b16 %v2409
    %v2699 = vunpack.c.h.b16 %v2409
    %v2700 = vunpack.c.l.b16 %v2410
    %v2701 = vunpack.c.h.b16 %v2410
    %v2702 = vunpack.c.l.b16 %v2411
    %v2703 = vunpack.c.h.b16 %v2411
    %v2704 = vunpack.c.l.b16 %v2412
    %v2705 = vunpack.c.h.b16 %v2412
    %v2706 = vunpack.c.l.b16 %v2413
    %v2707 = vunpack.c.h.b16 %v2413
    %v2708 = vunpack.c.l.b16 %v2414
    %v2709 = vunpack.c.h.b16 %v2414
    %v2710 = vunpack.c.l.b16 %v2415
    %v2711 = vunpack.c.h.b16 %v2415
    %v2712 = vunpack.c.l.b16 %v2416
    %v2713 = vunpack.c.h.b16 %v2416
    %v2714 = vunpack.c.l.b16 %v2417
    %v2715 = vunpack.c.h.b16 %v2417
    %v2716 = vunpack.c.l.b16 %v2418
    %v2717 = vunpack.c.h.b16 %v2418
    %v2718 = vunpack.c.l.b16 %v2419
    %v2719 = vunpack.c.h.b16 %v2419
    %v2720 = vunpack.c.l.b16 %v2420
    %v2721 = vunpack.c.h.b16 %v2420
    %v2722 = vunpack.c.l.b16 %v2421
    %v2723 = vunpack.c.h.b16 %v2421
    %v2724 = vunpack.c.l.b16 %v2422
    %v2725 = vunpack.c.h.b16 %v2422
    %v2726 = vunpack.c.l.b16 %v2423
    %v2727 = vunpack.c.h.b16 %v2423
    %v2728 = vunpack.c.l.b16 %v2424
    %v2729 = vunpack.c.h.b16 %v2424
    %v2730 = vunpack.c.l.b16 %v2425
    %v2731 = vunpack.c.h.b16 %v2425
    %v2732 = vunpack.c.l.b16 %v2426
    %v2733 = vunpack.c.h.b16 %v2426
    %v2734 = vunpack.c.l.b16 %v2427
    %v2735 = vunpack.c.h.b16 %v2427
    %v2736 = vunpack.c.l.b16 %v2428
    %v2737 = vunpack.c.h.b16 %v2428
    %v2738 = vunpack.c.l.b16 %v2429
    %v2739 = vunpack.c.h.b16 %v2429
    %v2740 = vunpack.c.l.b16 %v2430
    %v2741 = vunpack.c.h.b16 %v2430
    %v2742 = vunpack.c.l.b16 %v2431
    %v2743 = vunpack.c.h.b16 %v2431
    %v2744 = vunpack.c.l.b16 %v2432
    %v2745 = vunpack.c.h.b16 %v2432
    %v2746 = vunpack.c.l.b16 %v2433
    %v2747 = vunpack.c.h.b16 %v2433
    %v2748 = vunpack.c.l.b16 %v2434
    %v2749 = vunpack.c.h.b16 %v2434
    %v2750 = vunpack.c.l.b16 %v2435
    %v2751 = vunpack.c.h.b16 %v2435
    %v2752 = vunpack.c.l.b16 %v2436
    %v2753 = vunpack.c.h.b16 %v2436
    %v2754 = vunpack.c.l.b16 %v2437
    %v2755 = vunpack.c.h.b16 %v2437
    %v2756 = vunpack.c.l.b16 %v2438
    %v2757 = vunpack.c.h.b16 %v2438
    %v2758 = vunpack.c.l.b16 %v2439
    %v2759 = vunpack.c.h.b16 %v2439
    %v2760 = vunpack.c.l.b16 %v2440
    %v2761 = vunpack.c.h.b16 %v2440
    %v2762 = vunpack.c.l.b16 %v2441
    %v2763 = vunpack.c.h.b16 %v2441
    %v2764 = vunpack.c.l.b16 %v2442
    %v2765 = vunpack.c.h.b16 %v2442
    %v2766 = vunpack.c.l.b16 %v2443
    %v2767 = vunpack.c.h.b16 %v2443
    %v2768 = vunpack.c.l.b16 %v2444
    %v2769 = vunpack.c.h.b16 %v2444
    %v2770 = vunpack.c.l.b16 %v2445
    %v2771 = vunpack.c.h.b16 %v2445
    %v2772 = vunpack.c.l.b16 %v2446
    %v2773 = vunpack.c.h.b16 %v2446
    %v2774 = vunpack.c.l.b16 %v2447
    %v2775 = vunpack.c.h.b16 %v2447
    %v2776 = vunpack.c.l.b16 %v2448
    %v2777 = vunpack.c.h.b16 %v2448
    %v2778 = vunpack.c.l.b16 %v2449
    %v2779 = vunpack.c.h.b16 %v2449
    %v2780 = vunpack.c.l.b16 %v2450
    %v2781 = vunpack.c.h.b16 %v2450
    %v2782 = vunpack.c.l.b16 %v2451
    %v2783 = vunpack.c.h.b16 %v2451
    %v2784 = vunpack.c.l.b16 %v2452
    %v2785 = vunpack.c.h.b16 %v2452
    %v2786 = vunpack.c.l.b16 %v2453
    %v2787 = vunpack.c.h.b16 %v2453
    %v2788 = vunpack.c.l.b16 %v2454
    %v2789 = vunpack.c.h.b16 %v2454
    %v2790 = vunpack.c.l.b16 %v2455
    %v2791 = vunpack.c.h.b16 %v2455
    %v2792 = vunpack.c.l.b16 %v2456
    %v2793 = vunpack.c.h.b16 %v2456
    %v2794 = vunpack.c.l.b16 %v2457
    %v2795 = vunpack.c.h.b16 %v2457
    %v2796 = vunpack.c.l.b16 %v2458
    %v2797 = vunpack.c.h.b16 %v2458
    %v2798 = vunpack.c.l.b16 %v2459
    %v2799 = vunpack.c.h.b16 %v2459
    %v2800 = vunpack.c.l.b16 %v2460
    %v2801 = vunpack.c.h.b16 %v2460
    %v2802 = vunpack.c.l.b16 %v2461
    %v2803 = vunpack.c.h.b16 %v2461
    %v2804 = vunpack.c.l.b16 %v2462
    %v2805 = vunpack.c.h.b16 %v2462
    %v2806 = vunpack.c.l.b16 %v2463
    %v2807 = vunpack.c.h.b16 %v2463
    %v2808 = vunpack.c.l.b16 %v2464
    %v2809 = vunpack.c.h.b16 %v2464
    %v2810 = vunpack.c.l.b16 %v2465
    %v2811 = vunpack.c.h.b16 %v2465
    %v2812 = vunpack.c.l.b16 %v2466
    %v2813 = vunpack.c.h.b16 %v2466
    %v2814 = vunpack.c.l.b16 %v2467
    %v2815 = vunpack.c.h.b16 %v2467
    %v2816 = vunpack.c.l.b16 %v2468
    %v2817 = vunpack.c.h.b16 %v2468
    %v2818 = vunpack.c.l.b16 %v2469
    %v2819 = vunpack.c.h.b16 %v2469
    %v2820 = vunpack.c.l.b16 %v2470
    %v2821 = vunpack.c.h.b16 %v2470
    %v2822 = vunpack.c.l.b16 %v2471
    %v2823 = vunpack.c.h.b16 %v2471
    %v2824 = vunpack.c.l.b16 %v2472
    %v2825 = vunpack.c.h.b16 %v2472
    %v2826 = vunpack.c.l.b16 %v2473
    %v2827 = vunpack.c.h.b16 %v2473
    %v2828 = vunpack.c.l.b16 %v2474
    %v2829 = vunpack.c.h.b16 %v2474
    %v2830 = vunpack.c.l.b16 %v2475
    %v2831 = vunpack.c.h.b16 %v2475
    %v2832 = vunpack.c.l.b16 %v2476
    %v2833 = vunpack.c.h.b16 %v2476
    %v2834 = vunpack.c.l.b16 %v2477
    %v2835 = vunpack.c.h.b16 %v2477
    %v2836 = vunpack.c.l.b16 %v2478
    %v2837 = vunpack.c.h.b16 %v2478
    %v2838 = vunpack.c.l.b16 %v2479
    %v2839 = vunpack.c.h.b16 %v2479
    %v2840 = vunpack.c.l.b16 %v2480
    %v2841 = vunpack.c.h.b16 %v2480
    %v2842 = vunpack.c.l.b16 %v2481
    %v2843 = vunpack.c.h.b16 %v2481
    %v2844 = vunpack.c.l.b16 %v2482
    %v2845 = vunpack.c.h.b16 %v2482
    %v2846 = vunpack.c.l.b16 %v2483
    %v2847 = vunpack.c.h.b16 %v2483
    %v2848 = vunpack.c.l.b16 %v2484
    %v2849 = vunpack.c.h.b16 %v2484
    %v2850 = vunpack.c.l.b16 %v2485
    %v2851 = vunpack.c.h.b16 %v2485
    %v2852 = vunpack.c.l.b16 %v2486
    %v2853 = vunpack.c.h.b16 %v2486
    %v2854 = vunpack.c.l.b16 %v2487
    %v2855 = vunpack.c.h.b16 %v2487
    %v2856 = vunpack.c.l.b16 %v2488
    %v2857 = vunpack.c.h.b16 %v2488
    %v2858 = vunpack.c.l.b16 %v2489
    %v2859 = vunpack.c.h.b16 %v2489
    %v2860 = vunpack.c.l.b16 %v2490
    %v2861 = vunpack.c.h.b16 %v2490
    %v2862 = vunpack.c.l.b16 %v2491
    %v2863 = vunpack.c.h.b16 %v2491
    %v2864 = vunpack.c.l.b16 %v2492
    %v2865 = vunpack.c.h.b16 %v2492
    %v2866 = vunpack.c.l.b16 %v2493
    %v2867 = vunpack.c.h.b16 %v2493
    %v2868 = vunpack.c.l.b16 %v2494
    %v2869 = vunpack.c.h.b16 %v2494
    %v2870 = vunpack.c.l.b16 %v2495
    %v2871 = vunpack.c.h.b16 %v2495
    %v2872 = vunpack.c.l.b16 %v2496
    %v2873 = vunpack.c.h.b16 %v2496
    %v2874 = vunpack.c.l.b16 %v2497
    %v2875 = vunpack.c.h.b16 %v2497
    %v2876 = vunpack.c.l.b16 %v2498
    %v2877 = vunpack.c.h.b16 %v2498
    %v2878 = vunpack.c.l.b16 %v2499
    %v2879 = vunpack.c.h.b16 %v2499
    %v2880 = vunpack.c.l.b16 %v2500
    %v2881 = vunpack.c.h.b16 %v2500
    %v2882 = vunpack.c.l.b16 %v2501
    %v2883 = vunpack.c.h.b16 %v2501
    %v2884 = vunpack.c.l.b16 %v2502
    %v2885 = vunpack.c.h.b16 %v2502
    %v2886 = vunpack.c.l.b16 %v2503
    %v2887 = vunpack.c.h.b16 %v2503
    %v2888 = vunpack.c.l.b16 %v2504
    %v2889 = vunpack.c.h.b16 %v2504
    %v2890 = vunpack.c.l.b16 %v2505
    %v2891 = vunpack.c.h.b16 %v2505
    %v2892 = vunpack.c.l.b16 %v2506
    %v2893 = vunpack.c.h.b16 %v2506
    %v2894 = vunpack.c.l.b16 %v2507
    %v2895 = vunpack.c.h.b16 %v2507
    %v2896 = vunpack.c.l.b16 %v2508
    %v2897 = vunpack.c.h.b16 %v2508
    %v2898 = vunpack.c.l.b16 %v2509
    %v2899 = vunpack.c.h.b16 %v2509
    %v2900 = vunpack.c.l.b16 %v2510
    %v2901 = vunpack.c.h.b16 %v2510
    %v2902 = vunpack.c.l.b16 %v2511
    %v2903 = vunpack.c.h.b16 %v2511
    %v2904 = vunpack.c.l.b16 %v2512
    %v2905 = vunpack.c.h.b16 %v2512
    %v2906 = vunpack.c.l.b16 %v2513
    %v2907 = vunpack.c.h.b16 %v2513
    %v2908 = vpack.c.b16 %v2656, %v2652
    %v2909 = vpack.c.b16 %v2657, %v2653
    %v2910 = vpack.c.b16 %v2658, %v2654
    %v2911 = vpack.c.b16 %v2659, %v2655
    %v2912 = vpack.c.b16 %v2664, %v2660
    %v2913 = vpack.c.b16 %v2665, %v2661
    %v2914 = vpack.c.b16 %v2666, %v2662
    %v2915 = vpack.c.b16 %v2667, %v2663
    %v2916 = vpack.c.b16 %v2672, %v2668
    %v2917 = vpack.c.b16 %v2673, %v2669
    %v2918 = vpack.c.b16 %v2674, %v2670
    %v2919 = vpack.c.b16 %v2675, %v2671
    %v2920 = vpack.c.b16 %v2680, %v2676
    %v2921 = vpack.c.b16 %v2681, %v2677
    %v2922 = vpack.c.b16 %v2682, %v2678
    %v2923 = vpack.c.b16 %v2683, %v2679
    %v2924 = vpack.c.b16 %v2688, %v2684
    %v2925 = vpack.c.b16 %v2689, %v2685
    %v2926 = vpack.c.b16 %v2690, %v2686
    %v2927 = vpack.c.b16 %v2691, %v2687
    %v2928 = vpack.c.b16 %v2696, %v2692
    %v2929 = vpack.c.b16 %v2697, %v2693
    %v2930 = vpack.c.b16 %v2698, %v2694
    %v2931 = vpack.c.b16 %v2699, %v2695
    %v2932 = vpack.c.b16 %v2704, %v2700
    %v2933 = vpack.c.b16 %v2705, %v2701
    %v2934 = vpack.c.b16 %v2706, %v2702
    %v2935 = vpack.c.b16 %v2707, %v2703
    %v2936 = vpack.c.b16 %v2712, %v2708
    %v2937 = vpack.c.b16 %v2713, %v2709
    %v2938 = vpack.c.b16 %v2714, %v2710
    %v2939 = vpack.c.b16 %v2715, %v2711
    %v2940 = vpack.c.b16 %v2720, %v2716
    %v2941 = vpack.c.b16 %v2721, %v2717
    %v2942 = vpack.c.b16 %v2722, %v2718
    %v2943 = vpack.c.b16 %v2723, %v2719
    %v2944 = vpack.c.b16 %v2728, %v2724
    %v2945 = vpack.c.b16 %v2729, %v2725
    %v2946 = vpack.c.b16 %v2730, %v2726
    %v2947 = vpack.c.b16 %v2731, %v2727
    %v2948 = vpack.c.b16 %v2736, %v2732
    %v2949 = vpack.c.b16 %v2737, %v2733
    %v2950 = vpack.c.b16 %v2738, %v2734
    %v2951 = vpack.c.b16 %v2739, %v2735
    %v2952 = vpack.c.b16 %v2744, %v2740
    %v2953 = vpack.c.b16 %v2745, %v2741
    %v2954 = vpack.c.b16 %v2746, %v2742
    %v2955 = vpack.c.b16 %v2747, %v2743
    %v2956 = vpack.c.b16 %v2752, %v2748
    %v2957 = vpack.c.b16 %v2753, %v2749
    %v2958 = vpack.c.b16 %v2754, %v2750
    %v2959 = vpack.c.b16 %v2755, %v2751
    %v2960 = vpack.c.b16 %v2760, %v2756
    %v2961 = vpack.c.b16 %v2761, %v2757
    %v2962 = vpack.c.b16 %v2762, %v2758
    %v2963 = vpack.c.b16 %v2763, %v2759
    %v2964 = vpack.c.b16 %v2768, %v2764
    %v2965 = vpack.c.b16 %v2769, %v2765
    %v2966 = vpack.c.b16 %v2770, %v2766
    %v2967 = vpack.c.b16 %v2771, %v2767
    %v2968 = vpack.c.b16 %v2776, %v2772
    %v2969 = vpack.c.b16 %v2777, %v2773
    %v2970 = vpack.c.b16 %v2778, %v2774
    %v2971 = vpack.c.b16 %v2779, %v2775
    %v2972 = vpack.c.b16 %v2784, %v2780
    %v2973 = vpack.c.b16 %v2785, %v2781
    %v2974 = vpack.c.b16 %v2786, %v2782
    %v2975 = vpack.c.b16 %v2787, %v2783
    %v2976 = vpack.c.b16 %v2792, %v2788
    %v2977 = vpack.c.b16 %v2793, %v2789
    %v2978 = vpack.c.b16 %v2794, %v2790
    %v2979 = vpack.c.b16 %v2795, %v2791
    %v2980 = vpack.c.b16 %v2800, %v2796
    %v2981 = vpack.c.b16 %v2801, %v2797
    %v2982 = vpack.c.b16 %v2802, %v2798
    %v2983 = vpack.c.b16 %v2803, %v2799
    %v2984 = vpack.c.b16 %v2808, %v2804
    %v2985 = vpack.c.b16 %v2809, %v2805
    %v2986 = vpack.c.b16 %v2810, %v2806
    %v2987 = vpack.c.b16 %v2811, %v2807
    %v2988 = vpack.c.b16 %v2816, %v2812
    %v2989 = vpack.c.b16 %v2817, %v2813
    %v2990 = vpack.c.b16 %v2818, %v2814
    %v2991 = vpack.c.b16 %v2819, %v2815
    %v2992 = vpack.c.b16 %v2824, %v2820
    %v2993 = vpack.c.b16 %v2825, %v2821
    %v2994 = vpack.c.b16 %v2826, %v2822
    %v2995 = vpack.c.b16 %v2827, %v2823
    %v2996 = vpack.c.b16 %v2832, %v2828
    %v2997 = vpack.c.b16 %v2833, %v2829
    %v2998 = vpack.c.b16 %v2834, %v2830
    %v2999 = vpack.c.b16 %v2835, %v2831
    %v3000 = vpack.c.b16 %v2840, %v2836
    %v3001 = vpack.c.b16 %v2841, %v2837
    %v3002 = vpack.c.b16 %v2842, %v2838
    %v3003 = vpack.c.b16 %v2843, %v2839
    %v3004 = vpack.c.b16 %v2848, %v2844
    %v3005 = vpack.c.b16 %v2849, %v2845
    %v3006 = vpack.c.b16 %v2850, %v2846
    %v3007 = vpack.c.b16 %v2851, %v2847
    %v3008 = vpack.c.b16 %v2856, %v2852
    %v3009 = vpack.c.b16 %v2857, %v2853
    %v3010 = vpack.c.b16 %v2858, %v2854
    %v3011 = vpack.c.b16 %v2859, %v2855
    %v3012 = vpack.c.b16 %v2864, %v2860
    %v3013 = vpack.c.b16 %v2865, %v2861
    %v3014 = vpack.c.b16 %v2866, %v2862
    %v3015 = vpack.c.b16 %v2867, %v2863
    %v3016 = vpack.c.b16 %v2872, %v2868
    %v3017 = vpack.c.b16 %v2873, %v2869
    %v3018 = vpack.c.b16 %v2874, %v2870
    %v3019 = vpack.c.b16 %v2875, %v2871
    %v3020 = vpack.c.b16 %v2880, %v2876
    %v3021 = vpack.c.b16 %v2881, %v2877
    %v3022 = vpack.c.b16 %v2882, %v2878
    %v3023 = vpack.c.b16 %v2883, %v2879
    %v3024 = vpack.c.b16 %v2888, %v2884
    %v3025 = vpack.c.b16 %v2889, %v2885
    %v3026 = vpack.c.b16 %v2890, %v2886
    %v3027 = vpack.c.b16 %v2891, %v2887
    %v3028 = vpack.c.b16 %v2896, %v2892
    %v3029 = vpack.c.b16 %v2897, %v2893
    %v3030 = vpack.c.b16 %v2898, %v2894
    %v3031 = vpack.c.b16 %v2899, %v2895
    %v3032 = vpack.c.b16 %v2904, %v2900
    %v3033 = vpack.c.b16 %v2905, %v2901
    %v3034 = vpack.c.b16 %v2906, %v2902
    %v3035 = vpack.c.b16 %v2907, %v2903
    %3164 = vmatpush.bf16.msra.mxu0 %v2936
    %3165 = vmatpush.bf16.msra.mxu0 %v2932
    %3166 = vmatpush.bf16.msra.mxu0 %v2928
    %3167 = vmatpush.bf16.msra.mxu0 %v2924
    %3168 = vmatpush.bf16.msra.mxu0 %v2920
    %3169 = vmatpush.bf16.msra.mxu0 %v2916
    %3170 = vmatpush.bf16.msra.mxu0 %v2912
    %3171 = vmatpush.bf16.msra.mxu0 %v2908
    %3172 = vmatmul.bf16.gmra.mxu0 %v2382
    %v3173 = vpop.f32.mrf.mxu0
    %v3174 = vadd.f32 %v2516, %v3173
    %v3175 = vpop.f32.mrf.mxu0
    %v3176 = vadd.f32 %v2516, %v3175
    %3177 = vdwg.mxu0
    %3178 = vmatpush.bf16.msra.mxu0 %v2968
    %3179 = vmatpush.bf16.msra.mxu0 %v2964
    %3180 = vmatpush.bf16.msra.mxu0 %v2960
    %3181 = vmatpush.bf16.msra.mxu0 %v2956
    %3182 = vmatpush.bf16.msra.mxu0 %v2952
    %3183 = vmatpush.bf16.msra.mxu0 %v2948
    %3184 = vmatpush.bf16.msra.mxu0 %v2944
    %3185 = vmatpush.bf16.msra.mxu0 %v2940
    %3186 = vmatmul.bf16.gmra.mxu0 %v2383
    %v3187 = vpop.f32.mrf.mxu0
    %v3188 = vadd.f32 %v3174, %v3187
    %v3189 = vpop.f32.mrf.mxu0
    %v3190 = vadd.f32 %v3176, %v3189
    %3191 = vdwg.mxu0
    %3192 = vmatpush.bf16.msra.mxu0 %v3000
    %3193 = vmatpush.bf16.msra.mxu0 %v2996
    %3194 = vmatpush.bf16.msra.mxu0 %v2992
    %3195 = vmatpush.bf16.msra.mxu0 %v2988
    %3196 = vmatpush.bf16.msra.mxu0 %v2984
    %3197 = vmatpush.bf16.msra.mxu0 %v2980
    %3198 = vmatpush.bf16.msra.mxu0 %v2976
    %3199 = vmatpush.bf16.msra.mxu0 %v2972
    %3200 = vmatmul.bf16.gmra.mxu0 %v2384
    %v3201 = vpop.f32.mrf.mxu0
    %v3202 = vadd.f32 %v3188, %v3201
    %v3203 = vpop.f32.mrf.mxu0
    %v3204 = vadd.f32 %v3190, %v3203
    %3205 = vdwg.mxu0
    %3206 = vmatpush.bf16.msra.mxu0 %v3032
    %3207 = vmatpush.bf16.msra.mxu0 %v3028
    %3208 = vmatpush.bf16.msra.mxu0 %v3024
    %3209 = vmatpush.bf16.msra.mxu0 %v3020
    %3210 = vmatpush.bf16.msra.mxu0 %v3016
    %3211 = vmatpush.bf16.msra.mxu0 %v3012
    %3212 = vmatpush.bf16.msra.mxu0 %v3008
    %3213 = vmatpush.bf16.msra.mxu0 %v3004
    %3214 = vmatmul.bf16.gmra.mxu0 %v2385
    %v3215 = vpop.f32.mrf.mxu0
    %v3216 = vadd.f32 %v3202, %v3215
    %v3217 = vpop.f32.mrf.mxu0
    %v3218 = vadd.f32 %v3204, %v3217
    %3219 = vdwg.mxu0
    %3220 = vmatpush.bf16.msra.mxu0 %v2937
    %3221 = vmatpush.bf16.msra.mxu0 %v2933
    %3222 = vmatpush.bf16.msra.mxu0 %v2929
    %3223 = vmatpush.bf16.msra.mxu0 %v2925
    %3224 = vmatpush.bf16.msra.mxu0 %v2921
    %3225 = vmatpush.bf16.msra.mxu0 %v2917
    %3226 = vmatpush.bf16.msra.mxu0 %v2913
    %3227 = vmatpush.bf16.msra.mxu0 %v2909
    %3228 = vmatmul.bf16.gmra.mxu0 %v2382
    %v3229 = vpop.f32.mrf.mxu0
    %v3230 = vadd.f32 %v2517, %v3229
    %v3231 = vpop.f32.mrf.mxu0
    %v3232 = vadd.f32 %v2517, %v3231
    %3233 = vdwg.mxu0
    %3234 = vmatpush.bf16.msra.mxu0 %v2969
    %3235 = vmatpush.bf16.msra.mxu0 %v2965
    %3236 = vmatpush.bf16.msra.mxu0 %v2961
    %3237 = vmatpush.bf16.msra.mxu0 %v2957
    %3238 = vmatpush.bf16.msra.mxu0 %v2953
    %3239 = vmatpush.bf16.msra.mxu0 %v2949
    %3240 = vmatpush.bf16.msra.mxu0 %v2945
    %3241 = vmatpush.bf16.msra.mxu0 %v2941
    %3242 = vmatmul.bf16.gmra.mxu0 %v2383
    %v3243 = vpop.f32.mrf.mxu0
    %v3244 = vadd.f32 %v3230, %v3243
    %v3245 = vpop.f32.mrf.mxu0
    %v3246 = vadd.f32 %v3232, %v3245
    %3247 = vdwg.mxu0
    %3248 = vmatpush.bf16.msra.mxu0 %v3001
    %3249 = vmatpush.bf16.msra.mxu0 %v2997
    %3250 = vmatpush.bf16.msra.mxu0 %v2993
    %3251 = vmatpush.bf16.msra.mxu0 %v2989
    %3252 = vmatpush.bf16.msra.mxu0 %v2985
    %3253 = vmatpush.bf16.msra.mxu0 %v2981
    %3254 = vmatpush.bf16.msra.mxu0 %v2977
    %3255 = vmatpush.bf16.msra.mxu0 %v2973
    %3256 = vmatmul.bf16.gmra.mxu0 %v2384
    %v3257 = vpop.f32.mrf.mxu0
    %v3258 = vadd.f32 %v3244, %v3257
    %v3259 = vpop.f32.mrf.mxu0
    %v3260 = vadd.f32 %v3246, %v3259
    %3261 = vdwg.mxu0
    %3262 = vmatpush.bf16.msra.mxu0 %v3033
    %3263 = vmatpush.bf16.msra.mxu0 %v3029
    %3264 = vmatpush.bf16.msra.mxu0 %v3025
    %3265 = vmatpush.bf16.msra.mxu0 %v3021
    %3266 = vmatpush.bf16.msra.mxu0 %v3017
    %3267 = vmatpush.bf16.msra.mxu0 %v3013
    %3268 = vmatpush.bf16.msra.mxu0 %v3009
    %3269 = vmatpush.bf16.msra.mxu0 %v3005
    %3270 = vmatmul.bf16.gmra.mxu0 %v2385
    %v3271 = vpop.f32.mrf.mxu0
    %v3272 = vadd.f32 %v3258, %v3271
    %v3273 = vpop.f32.mrf.mxu0
    %v3274 = vadd.f32 %v3260, %v3273
    %3275 = vdwg.mxu0
    %3276 = vmatpush.bf16.msra.mxu0 %v2938
    %3277 = vmatpush.bf16.msra.mxu0 %v2934
    %3278 = vmatpush.bf16.msra.mxu0 %v2930
    %3279 = vmatpush.bf16.msra.mxu0 %v2926
    %3280 = vmatpush.bf16.msra.mxu0 %v2922
    %3281 = vmatpush.bf16.msra.mxu0 %v2918
    %3282 = vmatpush.bf16.msra.mxu0 %v2914
    %3283 = vmatpush.bf16.msra.mxu0 %v2910
    %3284 = vmatmul.bf16.gmra.mxu0 %v2382
    %v3285 = vpop.f32.mrf.mxu0
    %v3286 = vadd.f32 %v2518, %v3285
    %v3287 = vpop.f32.mrf.mxu0
    %v3288 = vadd.f32 %v2518, %v3287
    %3289 = vdwg.mxu0
    %3290 = vmatpush.bf16.msra.mxu0 %v2970
    %3291 = vmatpush.bf16.msra.mxu0 %v2966
    %3292 = vmatpush.bf16.msra.mxu0 %v2962
    %3293 = vmatpush.bf16.msra.mxu0 %v2958
    %3294 = vmatpush.bf16.msra.mxu0 %v2954
    %3295 = vmatpush.bf16.msra.mxu0 %v2950
    %3296 = vmatpush.bf16.msra.mxu0 %v2946
    %3297 = vmatpush.bf16.msra.mxu0 %v2942
    %3298 = vmatmul.bf16.gmra.mxu0 %v2383
    %v3299 = vpop.f32.mrf.mxu0
    %v3300 = vadd.f32 %v3286, %v3299
    %v3301 = vpop.f32.mrf.mxu0
    %v3302 = vadd.f32 %v3288, %v3301
    %3303 = vdwg.mxu0
    %3304 = vmatpush.bf16.msra.mxu0 %v3002
    %3305 = vmatpush.bf16.msra.mxu0 %v2998
    %3306 = vmatpush.bf16.msra.mxu0 %v2994
    %3307 = vmatpush.bf16.msra.mxu0 %v2990
    %3308 = vmatpush.bf16.msra.mxu0 %v2986
    %3309 = vmatpush.bf16.msra.mxu0 %v2982
    %3310 = vmatpush.bf16.msra.mxu0 %v2978
    %3311 = vmatpush.bf16.msra.mxu0 %v2974
    %3312 = vmatmul.bf16.gmra.mxu0 %v2384
    %v3313 = vpop.f32.mrf.mxu0
    %v3314 = vadd.f32 %v3300, %v3313
    %v3315 = vpop.f32.mrf.mxu0
    %v3316 = vadd.f32 %v3302, %v3315
    %3317 = vdwg.mxu0
    %3318 = vmatpush.bf16.msra.mxu0 %v3034
    %3319 = vmatpush.bf16.msra.mxu0 %v3030
    %3320 = vmatpush.bf16.msra.mxu0 %v3026
    %3321 = vmatpush.bf16.msra.mxu0 %v3022
    %3322 = vmatpush.bf16.msra.mxu0 %v3018
    %3323 = vmatpush.bf16.msra.mxu0 %v3014
    %3324 = vmatpush.bf16.msra.mxu0 %v3010
    %3325 = vmatpush.bf16.msra.mxu0 %v3006
    %3326 = vmatmul.bf16.gmra.mxu0 %v2385
    %v3327 = vpop.f32.mrf.mxu0
    %v3328 = vadd.f32 %v3314, %v3327
    %v3329 = vpop.f32.mrf.mxu0
    %v3330 = vadd.f32 %v3316, %v3329
    %3331 = vdwg.mxu0
    %3332 = vmatpush.bf16.msra.mxu0 %v2939
    %3333 = vmatpush.bf16.msra.mxu0 %v2935
    %3334 = vmatpush.bf16.msra.mxu0 %v2931
    %3335 = vmatpush.bf16.msra.mxu0 %v2927
    %3336 = vmatpush.bf16.msra.mxu0 %v2923
    %3337 = vmatpush.bf16.msra.mxu0 %v2919
    %3338 = vmatpush.bf16.msra.mxu0 %v2915
    %3339 = vmatpush.bf16.msra.mxu0 %v2911
    %3340 = vmatmul.bf16.gmra.mxu0 %v2382
    %v3341 = vpop.f32.mrf.mxu0
    %v3342 = vadd.f32 %v2519, %v3341
    %v3343 = vpop.f32.mrf.mxu0
    %v3344 = vadd.f32 %v2519, %v3343
    %3345 = vdwg.mxu0
    %3346 = vmatpush.bf16.msra.mxu0 %v2971
    %3347 = vmatpush.bf16.msra.mxu0 %v2967
    %3348 = vmatpush.bf16.msra.mxu0 %v2963
    %3349 = vmatpush.bf16.msra.mxu0 %v2959
    %3350 = vmatpush.bf16.msra.mxu0 %v2955
    %3351 = vmatpush.bf16.msra.mxu0 %v2951
    %3352 = vmatpush.bf16.msra.mxu0 %v2947
    %3353 = vmatpush.bf16.msra.mxu0 %v2943
    %3354 = vmatmul.bf16.gmra.mxu0 %v2383
    %v3355 = vpop.f32.mrf.mxu0
    %v3356 = vadd.f32 %v3342, %v3355
    %v3357 = vpop.f32.mrf.mxu0
    %v3358 = vadd.f32 %v3344, %v3357
    %3359 = vdwg.mxu0
    %3360 = vmatpush.bf16.msra.mxu0 %v3003
    %3361 = vmatpush.bf16.msra.mxu0 %v2999
    %3362 = vmatpush.bf16.msra.mxu0 %v2995
    %3363 = vmatpush.bf16.msra.mxu0 %v2991
    %3364 = vmatpush.bf16.msra.mxu0 %v2987
    %3365 = vmatpush.bf16.msra.mxu0 %v2983
    %3366 = vmatpush.bf16.msra.mxu0 %v2979
    %3367 = vmatpush.bf16.msra.mxu0 %v2975
    %3368 = vmatmul.bf16.gmra.mxu0 %v2384
    %v3369 = vpop.f32.mrf.mxu0
    %v3370 = vadd.f32 %v3356, %v3369
    %v3371 = vpop.f32.mrf.mxu0
    %v3372 = vadd.f32 %v3358, %v3371
    %3373 = vdwg.mxu0
    %3374 = vmatpush.bf16.msra.mxu0 %v3035
    %3375 = vmatpush.bf16.msra.mxu0 %v3031
    %3376 = vmatpush.bf16.msra.mxu0 %v3027
    %3377 = vmatpush.bf16.msra.mxu0 %v3023
    %3378 = vmatpush.bf16.msra.mxu0 %v3019
    %3379 = vmatpush.bf16.msra.mxu0 %v3015
    %3380 = vmatpush.bf16.msra.mxu0 %v3011
    %3381 = vmatpush.bf16.msra.mxu0 %v3007
    %3382 = vmatmul.bf16.gmra.mxu0 %v2385
    %v3383 = vpop.f32.mrf.mxu0
    %v3384 = vadd.f32 %v3370, %v3383
    %v3385 = vpop.f32.mrf.mxu0
    %v3386 = vadd.f32 %v3372, %v3385
    %3387 = vdwg.mxu0
    %v3388 = vmax.f32 %v3216, 0.0
    %v3389 = vmax.f32 %v3272, 0.0
    %v3390 = vmax.f32 %v3328, 0.0
    %v3391 = vmax.f32 %v3384, 0.0
    %v3392 = vmax.f32 %v3218, 0.0
    %v3393 = vmax.f32 %v3274, 0.0
    %v3394 = vmax.f32 %v3330, 0.0
    %v3395 = vmax.f32 %v3386, 0.0
    %v3396 = vpack.c.bf16 %v3392, %v3388
    %v3397 = vpack.c.bf16 %v3393, %v3389
    %v3398 = vpack.c.bf16 %v3394, %v3390
    %v3399 = vpack.c.bf16 %v3395, %v3391
    %v3400 = vld [vmem:[#allocation14] sm:$0xff]
    %v3401 = vld [vmem:[#allocation14 + $0x8] sm:$0xff]
    %v3402 = vld [vmem:[#allocation14 + $0x10] sm:$0xff]
    %v3403 = vld [vmem:[#allocation14 + $0x18] sm:$0xff]
    %v3404 = vld [vmem:[#allocation14 + $0x20] sm:$0xff]
    %v3405 = vld [vmem:[#allocation14 + $0x28] sm:$0xff]
    %v3406 = vld [vmem:[#allocation14 + $0x30] sm:$0xff]
    %v3407 = vld [vmem:[#allocation14 + $0x38] sm:$0xff]
    %v3408 = vld [vmem:[#allocation14 + $0x40] sm:$0xff]
    %v3409 = vld [vmem:[#allocation14 + $0x48] sm:$0xff]
    %v3410 = vld [vmem:[#allocation14 + $0x50] sm:$0xff]
    %v3411 = vld [vmem:[#allocation14 + $0x58] sm:$0xff]
    %v3412 = vld [vmem:[#allocation14 + $0x60] sm:$0xff]
    %v3413 = vld [vmem:[#allocation14 + $0x68] sm:$0xff]
    %v3414 = vld [vmem:[#allocation14 + $0x70] sm:$0xff]
    %v3415 = vld [vmem:[#allocation14 + $0x78] sm:$0xff]
    %v3416 = vld [vmem:[#allocation14 + $0x80] sm:$0xff]
    %v3417 = vld [vmem:[#allocation14 + $0x88] sm:$0xff]
    %v3418 = vld [vmem:[#allocation14 + $0x90] sm:$0xff]
    %v3419 = vld [vmem:[#allocation14 + $0x98] sm:$0xff]
    %v3420 = vld [vmem:[#allocation14 + $0xa0] sm:$0xff]
    %v3421 = vld [vmem:[#allocation14 + $0xa8] sm:$0xff]
    %v3422 = vld [vmem:[#allocation14 + $0xb0] sm:$0xff]
    %v3423 = vld [vmem:[#allocation14 + $0xb8] sm:$0xff]
    %v3424 = vld [vmem:[#allocation14 + $0xc0] sm:$0xff]
    %v3425 = vld [vmem:[#allocation14 + $0xc8] sm:$0xff]
    %v3426 = vld [vmem:[#allocation14 + $0xd0] sm:$0xff]
    %v3427 = vld [vmem:[#allocation14 + $0xd8] sm:$0xff]
    %v3428 = vld [vmem:[#allocation14 + $0xe0] sm:$0xff]
    %v3429 = vld [vmem:[#allocation14 + $0xe8] sm:$0xff]
    %v3430 = vld [vmem:[#allocation14 + $0xf0] sm:$0xff]
    %v3431 = vld [vmem:[#allocation14 + $0xf8] sm:$0xff]
    %v3432 = vld [vmem:[#allocation14 + $0x100] sm:$0xff]
    %v3433 = vld [vmem:[#allocation14 + $0x108] sm:$0xff]
    %v3434 = vld [vmem:[#allocation14 + $0x110] sm:$0xff]
    %v3435 = vld [vmem:[#allocation14 + $0x118] sm:$0xff]
    %v3436 = vld [vmem:[#allocation14 + $0x120] sm:$0xff]
    %v3437 = vld [vmem:[#allocation14 + $0x128] sm:$0xff]
    %v3438 = vld [vmem:[#allocation14 + $0x130] sm:$0xff]
    %v3439 = vld [vmem:[#allocation14 + $0x138] sm:$0xff]
    %v3440 = vld [vmem:[#allocation14 + $0x140] sm:$0xff]
    %v3441 = vld [vmem:[#allocation14 + $0x148] sm:$0xff]
    %v3442 = vld [vmem:[#allocation14 + $0x150] sm:$0xff]
    %v3443 = vld [vmem:[#allocation14 + $0x158] sm:$0xff]
    %v3444 = vld [vmem:[#allocation14 + $0x160] sm:$0xff]
    %v3445 = vld [vmem:[#allocation14 + $0x168] sm:$0xff]
    %v3446 = vld [vmem:[#allocation14 + $0x170] sm:$0xff]
    %v3447 = vld [vmem:[#allocation14 + $0x178] sm:$0xff]
    %v3448 = vld [vmem:[#allocation14 + $0x180] sm:$0xff]
    %v3449 = vld [vmem:[#allocation14 + $0x188] sm:$0xff]
    %v3450 = vld [vmem:[#allocation14 + $0x190] sm:$0xff]
    %v3451 = vld [vmem:[#allocation14 + $0x198] sm:$0xff]
    %v3452 = vld [vmem:[#allocation14 + $0x1a0] sm:$0xff]
    %v3453 = vld [vmem:[#allocation14 + $0x1a8] sm:$0xff]
    %v3454 = vld [vmem:[#allocation14 + $0x1b0] sm:$0xff]
    %v3455 = vld [vmem:[#allocation14 + $0x1b8] sm:$0xff]
    %v3456 = vld [vmem:[#allocation14 + $0x1c0] sm:$0xff]
    %v3457 = vld [vmem:[#allocation14 + $0x1c8] sm:$0xff]
    %v3458 = vld [vmem:[#allocation14 + $0x1d0] sm:$0xff]
    %v3459 = vld [vmem:[#allocation14 + $0x1d8] sm:$0xff]
    %v3460 = vld [vmem:[#allocation14 + $0x1e0] sm:$0xff]
    %v3461 = vld [vmem:[#allocation14 + $0x1e8] sm:$0xff]
    %v3462 = vld [vmem:[#allocation14 + $0x1f0] sm:$0xff]
    %v3463 = vld [vmem:[#allocation14 + $0x1f8] sm:$0xff]
    %v3464 = vld [vmem:[#allocation14 + $0x200] sm:$0xff]
    %v3465 = vld [vmem:[#allocation14 + $0x208] sm:$0xff]
    %v3466 = vld [vmem:[#allocation14 + $0x210] sm:$0xff]
    %v3467 = vld [vmem:[#allocation14 + $0x218] sm:$0xff]
    %v3468 = vld [vmem:[#allocation14 + $0x220] sm:$0xff]
    %v3469 = vld [vmem:[#allocation14 + $0x228] sm:$0xff]
    %v3470 = vld [vmem:[#allocation14 + $0x230] sm:$0xff]
    %v3471 = vld [vmem:[#allocation14 + $0x238] sm:$0xff]
    %v3472 = vld [vmem:[#allocation14 + $0x240] sm:$0xff]
    %v3473 = vld [vmem:[#allocation14 + $0x248] sm:$0xff]
    %v3474 = vld [vmem:[#allocation14 + $0x250] sm:$0xff]
    %v3475 = vld [vmem:[#allocation14 + $0x258] sm:$0xff]
    %v3476 = vld [vmem:[#allocation14 + $0x260] sm:$0xff]
    %v3477 = vld [vmem:[#allocation14 + $0x268] sm:$0xff]
    %v3478 = vld [vmem:[#allocation14 + $0x270] sm:$0xff]
    %v3479 = vld [vmem:[#allocation14 + $0x278] sm:$0xff]
    %v3480 = vld [vmem:[#allocation14 + $0x280] sm:$0xff]
    %v3481 = vld [vmem:[#allocation14 + $0x288] sm:$0xff]
    %v3482 = vld [vmem:[#allocation14 + $0x290] sm:$0xff]
    %v3483 = vld [vmem:[#allocation14 + $0x298] sm:$0xff]
    %v3484 = vld [vmem:[#allocation14 + $0x2a0] sm:$0xff]
    %v3485 = vld [vmem:[#allocation14 + $0x2a8] sm:$0xff]
    %v3486 = vld [vmem:[#allocation14 + $0x2b0] sm:$0xff]
    %v3487 = vld [vmem:[#allocation14 + $0x2b8] sm:$0xff]
    %v3488 = vld [vmem:[#allocation14 + $0x2c0] sm:$0xff]
    %v3489 = vld [vmem:[#allocation14 + $0x2c8] sm:$0xff]
    %v3490 = vld [vmem:[#allocation14 + $0x2d0] sm:$0xff]
    %v3491 = vld [vmem:[#allocation14 + $0x2d8] sm:$0xff]
    %v3492 = vld [vmem:[#allocation14 + $0x2e0] sm:$0xff]
    %v3493 = vld [vmem:[#allocation14 + $0x2e8] sm:$0xff]
    %v3494 = vld [vmem:[#allocation14 + $0x2f0] sm:$0xff]
    %v3495 = vld [vmem:[#allocation14 + $0x2f8] sm:$0xff]
    %v3496 = vld [vmem:[#allocation14 + $0x300] sm:$0xff]
    %v3497 = vld [vmem:[#allocation14 + $0x308] sm:$0xff]
    %v3498 = vld [vmem:[#allocation14 + $0x310] sm:$0xff]
    %v3499 = vld [vmem:[#allocation14 + $0x318] sm:$0xff]
    %v3500 = vld [vmem:[#allocation14 + $0x320] sm:$0xff]
    %v3501 = vld [vmem:[#allocation14 + $0x328] sm:$0xff]
    %v3502 = vld [vmem:[#allocation14 + $0x330] sm:$0xff]
    %v3503 = vld [vmem:[#allocation14 + $0x338] sm:$0xff]
    %v3504 = vld [vmem:[#allocation14 + $0x340] sm:$0xff]
    %v3505 = vld [vmem:[#allocation14 + $0x348] sm:$0xff]
    %v3506 = vld [vmem:[#allocation14 + $0x350] sm:$0xff]
    %v3507 = vld [vmem:[#allocation14 + $0x358] sm:$0xff]
    %v3508 = vld [vmem:[#allocation14 + $0x360] sm:$0xff]
    %v3509 = vld [vmem:[#allocation14 + $0x368] sm:$0xff]
    %v3510 = vld [vmem:[#allocation14 + $0x370] sm:$0xff]
    %v3511 = vld [vmem:[#allocation14 + $0x378] sm:$0xff]
    %v3512 = vld [vmem:[#allocation14 + $0x380] sm:$0xff]
    %v3513 = vld [vmem:[#allocation14 + $0x388] sm:$0xff]
    %v3514 = vld [vmem:[#allocation14 + $0x390] sm:$0xff]
    %v3515 = vld [vmem:[#allocation14 + $0x398] sm:$0xff]
    %v3516 = vld [vmem:[#allocation14 + $0x3a0] sm:$0xff]
    %v3517 = vld [vmem:[#allocation14 + $0x3a8] sm:$0xff]
    %v3518 = vld [vmem:[#allocation14 + $0x3b0] sm:$0xff]
    %v3519 = vld [vmem:[#allocation14 + $0x3b8] sm:$0xff]
    %v3520 = vld [vmem:[#allocation14 + $0x3c0] sm:$0xff]
    %v3521 = vld [vmem:[#allocation14 + $0x3c8] sm:$0xff]
    %v3522 = vld [vmem:[#allocation14 + $0x3d0] sm:$0xff]
    %v3523 = vld [vmem:[#allocation14 + $0x3d8] sm:$0xff]
    %v3524 = vld [vmem:[#allocation14 + $0x3e0] sm:$0xff]
    %v3525 = vld [vmem:[#allocation14 + $0x3e8] sm:$0xff]
    %v3526 = vld [vmem:[#allocation14 + $0x3f0] sm:$0xff]
    %v3527 = vld [vmem:[#allocation14 + $0x3f8] sm:$0xff]
    %v3528 = vld [vmem:[#allocation16] sm:$0xf]
    %v3530 = vperm.slane %v3528, 0
    %v3531 = vperm.slane %v3528, 1
    %v3532 = vperm.slane %v3528, 2
    %v3533 = vperm.slane %v3528, 3
    %v3666 = vunpack.c.l.b16 %v3400
    %v3667 = vunpack.c.h.b16 %v3400
    %v3668 = vunpack.c.l.b16 %v3401
    %v3669 = vunpack.c.h.b16 %v3401
    %v3670 = vunpack.c.l.b16 %v3402
    %v3671 = vunpack.c.h.b16 %v3402
    %v3672 = vunpack.c.l.b16 %v3403
    %v3673 = vunpack.c.h.b16 %v3403
    %v3674 = vunpack.c.l.b16 %v3404
    %v3675 = vunpack.c.h.b16 %v3404
    %v3676 = vunpack.c.l.b16 %v3405
    %v3677 = vunpack.c.h.b16 %v3405
    %v3678 = vunpack.c.l.b16 %v3406
    %v3679 = vunpack.c.h.b16 %v3406
    %v3680 = vunpack.c.l.b16 %v3407
    %v3681 = vunpack.c.h.b16 %v3407
    %v3682 = vunpack.c.l.b16 %v3408
    %v3683 = vunpack.c.h.b16 %v3408
    %v3684 = vunpack.c.l.b16 %v3409
    %v3685 = vunpack.c.h.b16 %v3409
    %v3686 = vunpack.c.l.b16 %v3410
    %v3687 = vunpack.c.h.b16 %v3410
    %v3688 = vunpack.c.l.b16 %v3411
    %v3689 = vunpack.c.h.b16 %v3411
    %v3690 = vunpack.c.l.b16 %v3412
    %v3691 = vunpack.c.h.b16 %v3412
    %v3692 = vunpack.c.l.b16 %v3413
    %v3693 = vunpack.c.h.b16 %v3413
    %v3694 = vunpack.c.l.b16 %v3414
    %v3695 = vunpack.c.h.b16 %v3414
    %v3696 = vunpack.c.l.b16 %v3415
    %v3697 = vunpack.c.h.b16 %v3415
    %v3698 = vunpack.c.l.b16 %v3416
    %v3699 = vunpack.c.h.b16 %v3416
    %v3700 = vunpack.c.l.b16 %v3417
    %v3701 = vunpack.c.h.b16 %v3417
    %v3702 = vunpack.c.l.b16 %v3418
    %v3703 = vunpack.c.h.b16 %v3418
    %v3704 = vunpack.c.l.b16 %v3419
    %v3705 = vunpack.c.h.b16 %v3419
    %v3706 = vunpack.c.l.b16 %v3420
    %v3707 = vunpack.c.h.b16 %v3420
    %v3708 = vunpack.c.l.b16 %v3421
    %v3709 = vunpack.c.h.b16 %v3421
    %v3710 = vunpack.c.l.b16 %v3422
    %v3711 = vunpack.c.h.b16 %v3422
    %v3712 = vunpack.c.l.b16 %v3423
    %v3713 = vunpack.c.h.b16 %v3423
    %v3714 = vunpack.c.l.b16 %v3424
    %v3715 = vunpack.c.h.b16 %v3424
    %v3716 = vunpack.c.l.b16 %v3425
    %v3717 = vunpack.c.h.b16 %v3425
    %v3718 = vunpack.c.l.b16 %v3426
    %v3719 = vunpack.c.h.b16 %v3426
    %v3720 = vunpack.c.l.b16 %v3427
    %v3721 = vunpack.c.h.b16 %v3427
    %v3722 = vunpack.c.l.b16 %v3428
    %v3723 = vunpack.c.h.b16 %v3428
    %v3724 = vunpack.c.l.b16 %v3429
    %v3725 = vunpack.c.h.b16 %v3429
    %v3726 = vunpack.c.l.b16 %v3430
    %v3727 = vunpack.c.h.b16 %v3430
    %v3728 = vunpack.c.l.b16 %v3431
    %v3729 = vunpack.c.h.b16 %v3431
    %v3730 = vunpack.c.l.b16 %v3432
    %v3731 = vunpack.c.h.b16 %v3432
    %v3732 = vunpack.c.l.b16 %v3433
    %v3733 = vunpack.c.h.b16 %v3433
    %v3734 = vunpack.c.l.b16 %v3434
    %v3735 = vunpack.c.h.b16 %v3434
    %v3736 = vunpack.c.l.b16 %v3435
    %v3737 = vunpack.c.h.b16 %v3435
    %v3738 = vunpack.c.l.b16 %v3436
    %v3739 = vunpack.c.h.b16 %v3436
    %v3740 = vunpack.c.l.b16 %v3437
    %v3741 = vunpack.c.h.b16 %v3437
    %v3742 = vunpack.c.l.b16 %v3438
    %v3743 = vunpack.c.h.b16 %v3438
    %v3744 = vunpack.c.l.b16 %v3439
    %v3745 = vunpack.c.h.b16 %v3439
    %v3746 = vunpack.c.l.b16 %v3440
    %v3747 = vunpack.c.h.b16 %v3440
    %v3748 = vunpack.c.l.b16 %v3441
    %v3749 = vunpack.c.h.b16 %v3441
    %v3750 = vunpack.c.l.b16 %v3442
    %v3751 = vunpack.c.h.b16 %v3442
    %v3752 = vunpack.c.l.b16 %v3443
    %v3753 = vunpack.c.h.b16 %v3443
    %v3754 = vunpack.c.l.b16 %v3444
    %v3755 = vunpack.c.h.b16 %v3444
    %v3756 = vunpack.c.l.b16 %v3445
    %v3757 = vunpack.c.h.b16 %v3445
    %v3758 = vunpack.c.l.b16 %v3446
    %v3759 = vunpack.c.h.b16 %v3446
    %v3760 = vunpack.c.l.b16 %v3447
    %v3761 = vunpack.c.h.b16 %v3447
    %v3762 = vunpack.c.l.b16 %v3448
    %v3763 = vunpack.c.h.b16 %v3448
    %v3764 = vunpack.c.l.b16 %v3449
    %v3765 = vunpack.c.h.b16 %v3449
    %v3766 = vunpack.c.l.b16 %v3450
    %v3767 = vunpack.c.h.b16 %v3450
    %v3768 = vunpack.c.l.b16 %v3451
    %v3769 = vunpack.c.h.b16 %v3451
    %v3770 = vunpack.c.l.b16 %v3452
    %v3771 = vunpack.c.h.b16 %v3452
    %v3772 = vunpack.c.l.b16 %v3453
    %v3773 = vunpack.c.h.b16 %v3453
    %v3774 = vunpack.c.l.b16 %v3454
    %v3775 = vunpack.c.h.b16 %v3454
    %v3776 = vunpack.c.l.b16 %v3455
    %v3777 = vunpack.c.h.b16 %v3455
    %v3778 = vunpack.c.l.b16 %v3456
    %v3779 = vunpack.c.h.b16 %v3456
    %v3780 = vunpack.c.l.b16 %v3457
    %v3781 = vunpack.c.h.b16 %v3457
    %v3782 = vunpack.c.l.b16 %v3458
    %v3783 = vunpack.c.h.b16 %v3458
    %v3784 = vunpack.c.l.b16 %v3459
    %v3785 = vunpack.c.h.b16 %v3459
    %v3786 = vunpack.c.l.b16 %v3460
    %v3787 = vunpack.c.h.b16 %v3460
    %v3788 = vunpack.c.l.b16 %v3461
    %v3789 = vunpack.c.h.b16 %v3461
    %v3790 = vunpack.c.l.b16 %v3462
    %v3791 = vunpack.c.h.b16 %v3462
    %v3792 = vunpack.c.l.b16 %v3463
    %v3793 = vunpack.c.h.b16 %v3463
    %v3794 = vunpack.c.l.b16 %v3464
    %v3795 = vunpack.c.h.b16 %v3464
    %v3796 = vunpack.c.l.b16 %v3465
    %v3797 = vunpack.c.h.b16 %v3465
    %v3798 = vunpack.c.l.b16 %v3466
    %v3799 = vunpack.c.h.b16 %v3466
    %v3800 = vunpack.c.l.b16 %v3467
    %v3801 = vunpack.c.h.b16 %v3467
    %v3802 = vunpack.c.l.b16 %v3468
    %v3803 = vunpack.c.h.b16 %v3468
    %v3804 = vunpack.c.l.b16 %v3469
    %v3805 = vunpack.c.h.b16 %v3469
    %v3806 = vunpack.c.l.b16 %v3470
    %v3807 = vunpack.c.h.b16 %v3470
    %v3808 = vunpack.c.l.b16 %v3471
    %v3809 = vunpack.c.h.b16 %v3471
    %v3810 = vunpack.c.l.b16 %v3472
    %v3811 = vunpack.c.h.b16 %v3472
    %v3812 = vunpack.c.l.b16 %v3473
    %v3813 = vunpack.c.h.b16 %v3473
    %v3814 = vunpack.c.l.b16 %v3474
    %v3815 = vunpack.c.h.b16 %v3474
    %v3816 = vunpack.c.l.b16 %v3475
    %v3817 = vunpack.c.h.b16 %v3475
    %v3818 = vunpack.c.l.b16 %v3476
    %v3819 = vunpack.c.h.b16 %v3476
    %v3820 = vunpack.c.l.b16 %v3477
    %v3821 = vunpack.c.h.b16 %v3477
    %v3822 = vunpack.c.l.b16 %v3478
    %v3823 = vunpack.c.h.b16 %v3478
    %v3824 = vunpack.c.l.b16 %v3479
    %v3825 = vunpack.c.h.b16 %v3479
    %v3826 = vunpack.c.l.b16 %v3480
    %v3827 = vunpack.c.h.b16 %v3480
    %v3828 = vunpack.c.l.b16 %v3481
    %v3829 = vunpack.c.h.b16 %v3481
    %v3830 = vunpack.c.l.b16 %v3482
    %v3831 = vunpack.c.h.b16 %v3482
    %v3832 = vunpack.c.l.b16 %v3483
    %v3833 = vunpack.c.h.b16 %v3483
    %v3834 = vunpack.c.l.b16 %v3484
    %v3835 = vunpack.c.h.b16 %v3484
    %v3836 = vunpack.c.l.b16 %v3485
    %v3837 = vunpack.c.h.b16 %v3485
    %v3838 = vunpack.c.l.b16 %v3486
    %v3839 = vunpack.c.h.b16 %v3486
    %v3840 = vunpack.c.l.b16 %v3487
    %v3841 = vunpack.c.h.b16 %v3487
    %v3842 = vunpack.c.l.b16 %v3488
    %v3843 = vunpack.c.h.b16 %v3488
    %v3844 = vunpack.c.l.b16 %v3489
    %v3845 = vunpack.c.h.b16 %v3489
    %v3846 = vunpack.c.l.b16 %v3490
    %v3847 = vunpack.c.h.b16 %v3490
    %v3848 = vunpack.c.l.b16 %v3491
    %v3849 = vunpack.c.h.b16 %v3491
    %v3850 = vunpack.c.l.b16 %v3492
    %v3851 = vunpack.c.h.b16 %v3492
    %v3852 = vunpack.c.l.b16 %v3493
    %v3853 = vunpack.c.h.b16 %v3493
    %v3854 = vunpack.c.l.b16 %v3494
    %v3855 = vunpack.c.h.b16 %v3494
    %v3856 = vunpack.c.l.b16 %v3495
    %v3857 = vunpack.c.h.b16 %v3495
    %v3858 = vunpack.c.l.b16 %v3496
    %v3859 = vunpack.c.h.b16 %v3496
    %v3860 = vunpack.c.l.b16 %v3497
    %v3861 = vunpack.c.h.b16 %v3497
    %v3862 = vunpack.c.l.b16 %v3498
    %v3863 = vunpack.c.h.b16 %v3498
    %v3864 = vunpack.c.l.b16 %v3499
    %v3865 = vunpack.c.h.b16 %v3499
    %v3866 = vunpack.c.l.b16 %v3500
    %v3867 = vunpack.c.h.b16 %v3500
    %v3868 = vunpack.c.l.b16 %v3501
    %v3869 = vunpack.c.h.b16 %v3501
    %v3870 = vunpack.c.l.b16 %v3502
    %v3871 = vunpack.c.h.b16 %v3502
    %v3872 = vunpack.c.l.b16 %v3503
    %v3873 = vunpack.c.h.b16 %v3503
    %v3874 = vunpack.c.l.b16 %v3504
    %v3875 = vunpack.c.h.b16 %v3504
    %v3876 = vunpack.c.l.b16 %v3505
    %v3877 = vunpack.c.h.b16 %v3505
    %v3878 = vunpack.c.l.b16 %v3506
    %v3879 = vunpack.c.h.b16 %v3506
    %v3880 = vunpack.c.l.b16 %v3507
    %v3881 = vunpack.c.h.b16 %v3507
    %v3882 = vunpack.c.l.b16 %v3508
    %v3883 = vunpack.c.h.b16 %v3508
    %v3884 = vunpack.c.l.b16 %v3509
    %v3885 = vunpack.c.h.b16 %v3509
    %v3886 = vunpack.c.l.b16 %v3510
    %v3887 = vunpack.c.h.b16 %v3510
    %v3888 = vunpack.c.l.b16 %v3511
    %v3889 = vunpack.c.h.b16 %v3511
    %v3890 = vunpack.c.l.b16 %v3512
    %v3891 = vunpack.c.h.b16 %v3512
    %v3892 = vunpack.c.l.b16 %v3513
    %v3893 = vunpack.c.h.b16 %v3513
    %v3894 = vunpack.c.l.b16 %v3514
    %v3895 = vunpack.c.h.b16 %v3514
    %v3896 = vunpack.c.l.b16 %v3515
    %v3897 = vunpack.c.h.b16 %v3515
    %v3898 = vunpack.c.l.b16 %v3516
    %v3899 = vunpack.c.h.b16 %v3516
    %v3900 = vunpack.c.l.b16 %v3517
    %v3901 = vunpack.c.h.b16 %v3517
    %v3902 = vunpack.c.l.b16 %v3518
    %v3903 = vunpack.c.h.b16 %v3518
    %v3904 = vunpack.c.l.b16 %v3519
    %v3905 = vunpack.c.h.b16 %v3519
    %v3906 = vunpack.c.l.b16 %v3520
    %v3907 = vunpack.c.h.b16 %v3520
    %v3908 = vunpack.c.l.b16 %v3521
    %v3909 = vunpack.c.h.b16 %v3521
    %v3910 = vunpack.c.l.b16 %v3522
    %v3911 = vunpack.c.h.b16 %v3522
    %v3912 = vunpack.c.l.b16 %v3523
    %v3913 = vunpack.c.h.b16 %v3523
    %v3914 = vunpack.c.l.b16 %v3524
    %v3915 = vunpack.c.h.b16 %v3524
    %v3916 = vunpack.c.l.b16 %v3525
    %v3917 = vunpack.c.h.b16 %v3525
    %v3918 = vunpack.c.l.b16 %v3526
    %v3919 = vunpack.c.h.b16 %v3526
    %v3920 = vunpack.c.l.b16 %v3527
    %v3921 = vunpack.c.h.b16 %v3527
    %v3922 = vpack.c.b16 %v3670, %v3666
    %v3923 = vpack.c.b16 %v3671, %v3667
    %v3924 = vpack.c.b16 %v3672, %v3668
    %v3925 = vpack.c.b16 %v3673, %v3669
    %v3926 = vpack.c.b16 %v3678, %v3674
    %v3927 = vpack.c.b16 %v3679, %v3675
    %v3928 = vpack.c.b16 %v3680, %v3676
    %v3929 = vpack.c.b16 %v3681, %v3677
    %v3930 = vpack.c.b16 %v3686, %v3682
    %v3931 = vpack.c.b16 %v3687, %v3683
    %v3932 = vpack.c.b16 %v3688, %v3684
    %v3933 = vpack.c.b16 %v3689, %v3685
    %v3934 = vpack.c.b16 %v3694, %v3690
    %v3935 = vpack.c.b16 %v3695, %v3691
    %v3936 = vpack.c.b16 %v3696, %v3692
    %v3937 = vpack.c.b16 %v3697, %v3693
    %v3938 = vpack.c.b16 %v3702, %v3698
    %v3939 = vpack.c.b16 %v3703, %v3699
    %v3940 = vpack.c.b16 %v3704, %v3700
    %v3941 = vpack.c.b16 %v3705, %v3701
    %v3942 = vpack.c.b16 %v3710, %v3706
    %v3943 = vpack.c.b16 %v3711, %v3707
    %v3944 = vpack.c.b16 %v3712, %v3708
    %v3945 = vpack.c.b16 %v3713, %v3709
    %v3946 = vpack.c.b16 %v3718, %v3714
    %v3947 = vpack.c.b16 %v3719, %v3715
    %v3948 = vpack.c.b16 %v3720, %v3716
    %v3949 = vpack.c.b16 %v3721, %v3717
    %v3950 = vpack.c.b16 %v3726, %v3722
    %v3951 = vpack.c.b16 %v3727, %v3723
    %v3952 = vpack.c.b16 %v3728, %v3724
    %v3953 = vpack.c.b16 %v3729, %v3725
    %v3954 = vpack.c.b16 %v3734, %v3730
    %v3955 = vpack.c.b16 %v3735, %v3731
    %v3956 = vpack.c.b16 %v3736, %v3732
    %v3957 = vpack.c.b16 %v3737, %v3733
    %v3958 = vpack.c.b16 %v3742, %v3738
    %v3959 = vpack.c.b16 %v3743, %v3739
    %v3960 = vpack.c.b16 %v3744, %v3740
    %v3961 = vpack.c.b16 %v3745, %v3741
    %v3962 = vpack.c.b16 %v3750, %v3746
    %v3963 = vpack.c.b16 %v3751, %v3747
    %v3964 = vpack.c.b16 %v3752, %v3748
    %v3965 = vpack.c.b16 %v3753, %v3749
    %v3966 = vpack.c.b16 %v3758, %v3754
    %v3967 = vpack.c.b16 %v3759, %v3755
    %v3968 = vpack.c.b16 %v3760, %v3756
    %v3969 = vpack.c.b16 %v3761, %v3757
    %v3970 = vpack.c.b16 %v3766, %v3762
    %v3971 = vpack.c.b16 %v3767, %v3763
    %v3972 = vpack.c.b16 %v3768, %v3764
    %v3973 = vpack.c.b16 %v3769, %v3765
    %v3974 = vpack.c.b16 %v3774, %v3770
    %v3975 = vpack.c.b16 %v3775, %v3771
    %v3976 = vpack.c.b16 %v3776, %v3772
    %v3977 = vpack.c.b16 %v3777, %v3773
    %v3978 = vpack.c.b16 %v3782, %v3778
    %v3979 = vpack.c.b16 %v3783, %v3779
    %v3980 = vpack.c.b16 %v3784, %v3780
    %v3981 = vpack.c.b16 %v3785, %v3781
    %v3982 = vpack.c.b16 %v3790, %v3786
    %v3983 = vpack.c.b16 %v3791, %v3787
    %v3984 = vpack.c.b16 %v3792, %v3788
    %v3985 = vpack.c.b16 %v3793, %v3789
    %v3986 = vpack.c.b16 %v3798, %v3794
    %v3987 = vpack.c.b16 %v3799, %v3795
    %v3988 = vpack.c.b16 %v3800, %v3796
    %v3989 = vpack.c.b16 %v3801, %v3797
    %v3990 = vpack.c.b16 %v3806, %v3802
    %v3991 = vpack.c.b16 %v3807, %v3803
    %v3992 = vpack.c.b16 %v3808, %v3804
    %v3993 = vpack.c.b16 %v3809, %v3805
    %v3994 = vpack.c.b16 %v3814, %v3810
    %v3995 = vpack.c.b16 %v3815, %v3811
    %v3996 = vpack.c.b16 %v3816, %v3812
    %v3997 = vpack.c.b16 %v3817, %v3813
    %v3998 = vpack.c.b16 %v3822, %v3818
    %v3999 = vpack.c.b16 %v3823, %v3819
    %v4000 = vpack.c.b16 %v3824, %v3820
    %v4001 = vpack.c.b16 %v3825, %v3821
    %v4002 = vpack.c.b16 %v3830, %v3826
    %v4003 = vpack.c.b16 %v3831, %v3827
    %v4004 = vpack.c.b16 %v3832, %v3828
    %v4005 = vpack.c.b16 %v3833, %v3829
    %v4006 = vpack.c.b16 %v3838, %v3834
    %v4007 = vpack.c.b16 %v3839, %v3835
    %v4008 = vpack.c.b16 %v3840, %v3836
    %v4009 = vpack.c.b16 %v3841, %v3837
    %v4010 = vpack.c.b16 %v3846, %v3842
    %v4011 = vpack.c.b16 %v3847, %v3843
    %v4012 = vpack.c.b16 %v3848, %v3844
    %v4013 = vpack.c.b16 %v3849, %v3845
    %v4014 = vpack.c.b16 %v3854, %v3850
    %v4015 = vpack.c.b16 %v3855, %v3851
    %v4016 = vpack.c.b16 %v3856, %v3852
    %v4017 = vpack.c.b16 %v3857, %v3853
    %v4018 = vpack.c.b16 %v3862, %v3858
    %v4019 = vpack.c.b16 %v3863, %v3859
    %v4020 = vpack.c.b16 %v3864, %v3860
    %v4021 = vpack.c.b16 %v3865, %v3861
    %v4022 = vpack.c.b16 %v3870, %v3866
    %v4023 = vpack.c.b16 %v3871, %v3867
    %v4024 = vpack.c.b16 %v3872, %v3868
    %v4025 = vpack.c.b16 %v3873, %v3869
    %v4026 = vpack.c.b16 %v3878, %v3874
    %v4027 = vpack.c.b16 %v3879, %v3875
    %v4028 = vpack.c.b16 %v3880, %v3876
    %v4029 = vpack.c.b16 %v3881, %v3877
    %v4030 = vpack.c.b16 %v3886, %v3882
    %v4031 = vpack.c.b16 %v3887, %v3883
    %v4032 = vpack.c.b16 %v3888, %v3884
    %v4033 = vpack.c.b16 %v3889, %v3885
    %v4034 = vpack.c.b16 %v3894, %v3890
    %v4035 = vpack.c.b16 %v3895, %v3891
    %v4036 = vpack.c.b16 %v3896, %v3892
    %v4037 = vpack.c.b16 %v3897, %v3893
    %v4038 = vpack.c.b16 %v3902, %v3898
    %v4039 = vpack.c.b16 %v3903, %v3899
    %v4040 = vpack.c.b16 %v3904, %v3900
    %v4041 = vpack.c.b16 %v3905, %v3901
    %v4042 = vpack.c.b16 %v3910, %v3906
    %v4043 = vpack.c.b16 %v3911, %v3907
    %v4044 = vpack.c.b16 %v3912, %v3908
    %v4045 = vpack.c.b16 %v3913, %v3909
    %v4046 = vpack.c.b16 %v3918, %v3914
    %v4047 = vpack.c.b16 %v3919, %v3915
    %v4048 = vpack.c.b16 %v3920, %v3916
    %v4049 = vpack.c.b16 %v3921, %v3917
    %4178 = vmatpush.bf16.msra.mxu0 %v3950
    %4179 = vmatpush.bf16.msra.mxu0 %v3946
    %4180 = vmatpush.bf16.msra.mxu0 %v3942
    %4181 = vmatpush.bf16.msra.mxu0 %v3938
    %4182 = vmatpush.bf16.msra.mxu0 %v3934
    %4183 = vmatpush.bf16.msra.mxu0 %v3930
    %4184 = vmatpush.bf16.msra.mxu0 %v3926
    %4185 = vmatpush.bf16.msra.mxu0 %v3922
    %4186 = vmatmul.bf16.gmra.mxu0 %v3396
    %v4187 = vpop.f32.mrf.mxu0
    %v4188 = vadd.f32 %v3530, %v4187
    %v4189 = vpop.f32.mrf.mxu0
    %v4190 = vadd.f32 %v3530, %v4189
    %4191 = vdwg.mxu0
    %4192 = vmatpush.bf16.msra.mxu0 %v3982
    %4193 = vmatpush.bf16.msra.mxu0 %v3978
    %4194 = vmatpush.bf16.msra.mxu0 %v3974
    %4195 = vmatpush.bf16.msra.mxu0 %v3970
    %4196 = vmatpush.bf16.msra.mxu0 %v3966
    %4197 = vmatpush.bf16.msra.mxu0 %v3962
    %4198 = vmatpush.bf16.msra.mxu0 %v3958
    %4199 = vmatpush.bf16.msra.mxu0 %v3954
    %4200 = vmatmul.bf16.gmra.mxu0 %v3397
    %v4201 = vpop.f32.mrf.mxu0
    %v4202 = vadd.f32 %v4188, %v4201
    %v4203 = vpop.f32.mrf.mxu0
    %v4204 = vadd.f32 %v4190, %v4203
    %4205 = vdwg.mxu0
    %4206 = vmatpush.bf16.msra.mxu0 %v4014
    %4207 = vmatpush.bf16.msra.mxu0 %v4010
    %4208 = vmatpush.bf16.msra.mxu0 %v4006
    %4209 = vmatpush.bf16.msra.mxu0 %v4002
    %4210 = vmatpush.bf16.msra.mxu0 %v3998
    %4211 = vmatpush.bf16.msra.mxu0 %v3994
    %4212 = vmatpush.bf16.msra.mxu0 %v3990
    %4213 = vmatpush.bf16.msra.mxu0 %v3986
    %4214 = vmatmul.bf16.gmra.mxu0 %v3398
    %v4215 = vpop.f32.mrf.mxu0
    %v4216 = vadd.f32 %v4202, %v4215
    %v4217 = vpop.f32.mrf.mxu0
    %v4218 = vadd.f32 %v4204, %v4217
    %4219 = vdwg.mxu0
    %4220 = vmatpush.bf16.msra.mxu0 %v4046
    %4221 = vmatpush.bf16.msra.mxu0 %v4042
    %4222 = vmatpush.bf16.msra.mxu0 %v4038
    %4223 = vmatpush.bf16.msra.mxu0 %v4034
    %4224 = vmatpush.bf16.msra.mxu0 %v4030
    %4225 = vmatpush.bf16.msra.mxu0 %v4026
    %4226 = vmatpush.bf16.msra.mxu0 %v4022
    %4227 = vmatpush.bf16.msra.mxu0 %v4018
    %4228 = vmatmul.bf16.gmra.mxu0 %v3399
    %v4229 = vpop.f32.mrf.mxu0
    %v4230 = vadd.f32 %v4216, %v4229
    %v4231 = vpop.f32.mrf.mxu0
    %v4232 = vadd.f32 %v4218, %v4231
    %4233 = vdwg.mxu0
    %4234 = vmatpush.bf16.msra.mxu0 %v3951
    %4235 = vmatpush.bf16.msra.mxu0 %v3947
    %4236 = vmatpush.bf16.msra.mxu0 %v3943
    %4237 = vmatpush.bf16.msra.mxu0 %v3939
    %4238 = vmatpush.bf16.msra.mxu0 %v3935
    %4239 = vmatpush.bf16.msra.mxu0 %v3931
    %4240 = vmatpush.bf16.msra.mxu0 %v3927
    %4241 = vmatpush.bf16.msra.mxu0 %v3923
    %4242 = vmatmul.bf16.gmra.mxu0 %v3396
    %v4243 = vpop.f32.mrf.mxu0
    %v4244 = vadd.f32 %v3531, %v4243
    %v4245 = vpop.f32.mrf.mxu0
    %v4246 = vadd.f32 %v3531, %v4245
    %4247 = vdwg.mxu0
    %4248 = vmatpush.bf16.msra.mxu0 %v3983
    %4249 = vmatpush.bf16.msra.mxu0 %v3979
    %4250 = vmatpush.bf16.msra.mxu0 %v3975
    %4251 = vmatpush.bf16.msra.mxu0 %v3971
    %4252 = vmatpush.bf16.msra.mxu0 %v3967
    %4253 = vmatpush.bf16.msra.mxu0 %v3963
    %4254 = vmatpush.bf16.msra.mxu0 %v3959
    %4255 = vmatpush.bf16.msra.mxu0 %v3955
    %4256 = vmatmul.bf16.gmra.mxu0 %v3397
    %v4257 = vpop.f32.mrf.mxu0
    %v4258 = vadd.f32 %v4244, %v4257
    %v4259 = vpop.f32.mrf.mxu0
    %v4260 = vadd.f32 %v4246, %v4259
    %4261 = vdwg.mxu0
    %4262 = vmatpush.bf16.msra.mxu0 %v4015
    %4263 = vmatpush.bf16.msra.mxu0 %v4011
    %4264 = vmatpush.bf16.msra.mxu0 %v4007
    %4265 = vmatpush.bf16.msra.mxu0 %v4003
    %4266 = vmatpush.bf16.msra.mxu0 %v3999
    %4267 = vmatpush.bf16.msra.mxu0 %v3995
    %4268 = vmatpush.bf16.msra.mxu0 %v3991
    %4269 = vmatpush.bf16.msra.mxu0 %v3987
    %4270 = vmatmul.bf16.gmra.mxu0 %v3398
    %v4271 = vpop.f32.mrf.mxu0
    %v4272 = vadd.f32 %v4258, %v4271
    %v4273 = vpop.f32.mrf.mxu0
    %v4274 = vadd.f32 %v4260, %v4273
    %4275 = vdwg.mxu0
    %4276 = vmatpush.bf16.msra.mxu0 %v4047
    %4277 = vmatpush.bf16.msra.mxu0 %v4043
    %4278 = vmatpush.bf16.msra.mxu0 %v4039
    %4279 = vmatpush.bf16.msra.mxu0 %v4035
    %4280 = vmatpush.bf16.msra.mxu0 %v4031
    %4281 = vmatpush.bf16.msra.mxu0 %v4027
    %4282 = vmatpush.bf16.msra.mxu0 %v4023
    %4283 = vmatpush.bf16.msra.mxu0 %v4019
    %4284 = vmatmul.bf16.gmra.mxu0 %v3399
    %v4285 = vpop.f32.mrf.mxu0
    %v4286 = vadd.f32 %v4272, %v4285
    %v4287 = vpop.f32.mrf.mxu0
    %v4288 = vadd.f32 %v4274, %v4287
    %4289 = vdwg.mxu0
    %4290 = vmatpush.bf16.msra.mxu0 %v3952
    %4291 = vmatpush.bf16.msra.mxu0 %v3948
    %4292 = vmatpush.bf16.msra.mxu0 %v3944
    %4293 = vmatpush.bf16.msra.mxu0 %v3940
    %4294 = vmatpush.bf16.msra.mxu0 %v3936
    %4295 = vmatpush.bf16.msra.mxu0 %v3932
    %4296 = vmatpush.bf16.msra.mxu0 %v3928
    %4297 = vmatpush.bf16.msra.mxu0 %v3924
    %4298 = vmatmul.bf16.gmra.mxu0 %v3396
    %v4299 = vpop.f32.mrf.mxu0
    %v4300 = vadd.f32 %v3532, %v4299
    %v4301 = vpop.f32.mrf.mxu0
    %v4302 = vadd.f32 %v3532, %v4301
    %4303 = vdwg.mxu0
    %4304 = vmatpush.bf16.msra.mxu0 %v3984
    %4305 = vmatpush.bf16.msra.mxu0 %v3980
    %4306 = vmatpush.bf16.msra.mxu0 %v3976
    %4307 = vmatpush.bf16.msra.mxu0 %v3972
    %4308 = vmatpush.bf16.msra.mxu0 %v3968
    %4309 = vmatpush.bf16.msra.mxu0 %v3964
    %4310 = vmatpush.bf16.msra.mxu0 %v3960
    %4311 = vmatpush.bf16.msra.mxu0 %v3956
    %4312 = vmatmul.bf16.gmra.mxu0 %v3397
    %v4313 = vpop.f32.mrf.mxu0
    %v4314 = vadd.f32 %v4300, %v4313
    %v4315 = vpop.f32.mrf.mxu0
    %v4316 = vadd.f32 %v4302, %v4315
    %4317 = vdwg.mxu0
    %4318 = vmatpush.bf16.msra.mxu0 %v4016
    %4319 = vmatpush.bf16.msra.mxu0 %v4012
    %4320 = vmatpush.bf16.msra.mxu0 %v4008
    %4321 = vmatpush.bf16.msra.mxu0 %v4004
    %4322 = vmatpush.bf16.msra.mxu0 %v4000
    %4323 = vmatpush.bf16.msra.mxu0 %v3996
    %4324 = vmatpush.bf16.msra.mxu0 %v3992
    %4325 = vmatpush.bf16.msra.mxu0 %v3988
    %4326 = vmatmul.bf16.gmra.mxu0 %v3398
    %v4327 = vpop.f32.mrf.mxu0
    %v4328 = vadd.f32 %v4314, %v4327
    %v4329 = vpop.f32.mrf.mxu0
    %v4330 = vadd.f32 %v4316, %v4329
    %4331 = vdwg.mxu0
    %4332 = vmatpush.bf16.msra.mxu0 %v4048
    %4333 = vmatpush.bf16.msra.mxu0 %v4044
    %4334 = vmatpush.bf16.msra.mxu0 %v4040
    %4335 = vmatpush.bf16.msra.mxu0 %v4036
    %4336 = vmatpush.bf16.msra.mxu0 %v4032
    %4337 = vmatpush.bf16.msra.mxu0 %v4028
    %4338 = vmatpush.bf16.msra.mxu0 %v4024
    %4339 = vmatpush.bf16.msra.mxu0 %v4020
    %4340 = vmatmul.bf16.gmra.mxu0 %v3399
    %v4341 = vpop.f32.mrf.mxu0
    %v4342 = vadd.f32 %v4328, %v4341
    %v4343 = vpop.f32.mrf.mxu0
    %v4344 = vadd.f32 %v4330, %v4343
    %4345 = vdwg.mxu0
    %4346 = vmatpush.bf16.msra.mxu0 %v3953
    %4347 = vmatpush.bf16.msra.mxu0 %v3949
    %4348 = vmatpush.bf16.msra.mxu0 %v3945
    %4349 = vmatpush.bf16.msra.mxu0 %v3941
    %4350 = vmatpush.bf16.msra.mxu0 %v3937
    %4351 = vmatpush.bf16.msra.mxu0 %v3933
    %4352 = vmatpush.bf16.msra.mxu0 %v3929
    %4353 = vmatpush.bf16.msra.mxu0 %v3925
    %4354 = vmatmul.bf16.gmra.mxu0 %v3396
    %v4355 = vpop.f32.mrf.mxu0
    %v4356 = vadd.f32 %v3533, %v4355
    %v4357 = vpop.f32.mrf.mxu0
    %v4358 = vadd.f32 %v3533, %v4357
    %4359 = vdwg.mxu0
    %4360 = vmatpush.bf16.msra.mxu0 %v3985
    %4361 = vmatpush.bf16.msra.mxu0 %v3981
    %4362 = vmatpush.bf16.msra.mxu0 %v3977
    %4363 = vmatpush.bf16.msra.mxu0 %v3973
    %4364 = vmatpush.bf16.msra.mxu0 %v3969
    %4365 = vmatpush.bf16.msra.mxu0 %v3965
    %4366 = vmatpush.bf16.msra.mxu0 %v3961
    %4367 = vmatpush.bf16.msra.mxu0 %v3957
    %4368 = vmatmul.bf16.gmra.mxu0 %v3397
    %v4369 = vpop.f32.mrf.mxu0
    %v4370 = vadd.f32 %v4356, %v4369
    %v4371 = vpop.f32.mrf.mxu0
    %v4372 = vadd.f32 %v4358, %v4371
    %4373 = vdwg.mxu0
    %4374 = vmatpush.bf16.msra.mxu0 %v4017
    %4375 = vmatpush.bf16.msra.mxu0 %v4013
    %4376 = vmatpush.bf16.msra.mxu0 %v4009
    %4377 = vmatpush.bf16.msra.mxu0 %v4005
    %4378 = vmatpush.bf16.msra.mxu0 %v4001
    %4379 = vmatpush.bf16.msra.mxu0 %v3997
    %4380 = vmatpush.bf16.msra.mxu0 %v3993
    %4381 = vmatpush.bf16.msra.mxu0 %v3989
    %4382 = vmatmul.bf16.gmra.mxu0 %v3398
    %v4383 = vpop.f32.mrf.mxu0
    %v4384 = vadd.f32 %v4370, %v4383
    %v4385 = vpop.f32.mrf.mxu0
    %v4386 = vadd.f32 %v4372, %v4385
    %4387 = vdwg.mxu0
    %4388 = vmatpush.bf16.msra.mxu0 %v4049
    %4389 = vmatpush.bf16.msra.mxu0 %v4045
    %4390 = vmatpush.bf16.msra.mxu0 %v4041
    %4391 = vmatpush.bf16.msra.mxu0 %v4037
    %4392 = vmatpush.bf16.msra.mxu0 %v4033
    %4393 = vmatpush.bf16.msra.mxu0 %v4029
    %4394 = vmatpush.bf16.msra.mxu0 %v4025
    %4395 = vmatpush.bf16.msra.mxu0 %v4021
    %4396 = vmatmul.bf16.gmra.mxu0 %v3399
    %v4397 = vpop.f32.mrf.mxu0
    %v4398 = vadd.f32 %v4384, %v4397
    %v4399 = vpop.f32.mrf.mxu0
    %v4400 = vadd.f32 %v4386, %v4399
    %4401 = vdwg.mxu0
    %v4402 = vmax.f32 %v4230, 0.0
    %v4403 = vmax.f32 %v4286, 0.0
    %v4404 = vmax.f32 %v4342, 0.0
    %v4405 = vmax.f32 %v4398, 0.0
    %v4406 = vmax.f32 %v4232, 0.0
    %v4407 = vmax.f32 %v4288, 0.0
    %v4408 = vmax.f32 %v4344, 0.0
    %v4409 = vmax.f32 %v4400, 0.0
    %v4410 = vpack.c.bf16 %v4403, %v4402
    %v4411 = vpack.c.bf16 %v4405, %v4404
    %v4412 = vpack.c.bf16 %v4407, %v4406
    %v4413 = vpack.c.bf16 %v4409, %v4408
    %v4414 = vunpack.c.l.bf16 %v4410
    %v4415 = vunpack.c.h.bf16 %v4410
    %v4416 = vunpack.c.l.bf16 %v4411
    %v4417 = vunpack.c.h.bf16 %v4411
    %v4418 = vunpack.c.l.bf16 %v4412
    %v4419 = vunpack.c.h.bf16 %v4412
    %v4420 = vunpack.c.l.bf16 %v4413
    %v4421 = vunpack.c.h.bf16 %v4413
    %v4422 = vld [vmem:[%s11] sm:$0xf]
    %v4423 = vunpack.c.l.bf16 %v4422
    %v4425 = vperm.slane %v4423, 0
    %v4426 = vperm.slane %v4423, 2
    %v4427 = vperm.slane %v4423, 4
    %v4428 = vperm.slane %v4423, 6
    %v4433 = vperm.slane %v4425, 0
    %v4434 = vperm.slane %v4426, 0
    %v4435 = vperm.slane %v4427, 0
    %v4436 = vperm.slane %v4428, 0
    %v4437 = vmul.f32 %v4414, %v4433
    %v4438 = vmul.f32 %v4415, %v4434
    %v4439 = vmul.f32 %v4416, %v4435
    %v4440 = vmul.f32 %v4417, %v4436
    %v4441 = vmul.f32 %v4418, %v4433
    %v4442 = vmul.f32 %v4419, %v4434
    %v4443 = vmul.f32 %v4420, %v4435
    %v4444 = vmul.f32 %v4421, %v4436
    %v4445 = vadd.f32 %v4437, %v4438
    %v4446 = vadd.f32 %v4445, %v4439
    %v4447 = vadd.f32 %v4446, %v4440
    %4448 = vadd.xlane.f32.xlu0 %v4447
    %v4449 = vpop.xlane.xlu0 %4448
    %v4450 = vadd.f32 %v4441, %v4442
    %v4451 = vadd.f32 %v4450, %v4443
    %v4452 = vadd.f32 %v4451, %v4444
    %4453 = vadd.xlane.f32.xlu0 %v4452
    %v4454 = vpop.xlane.xlu0 %4453
    %v4455 = vld [vmem:[#allocation2] sm:$0x1]
    %v4457 = vperm.slane %v4455, 0
    %v4459 = vadd.f32 %v4449, %v4457
    %v4460 = vadd.f32 %v4454, %v4457
    %vm4461 = vcmask 7168
    %4462 = vst.msk [vmem:[%s13] sm:$0xff] %vm4461, %v4459
    %4463 = vst.msk [vmem:[%s13 + $0x8] sm:$0xff] %vm4461, %v4460
    // Predicated region
    $region90: #{tpu_custom_call.1} parent=1 // pred_check
      _
    $region91: #{tpu_custom_call.1} parent=1 // pred_check_branch
      %4465 = sbr.rel (0) target = $region93
    $region92: #{tpu_custom_call.1} parent=1 // pred_region
      _
    $region93: #{tpu_custom_call.1} parent=1 // pred_fallthru
      _
    // Predicated region
    $region94: #{tpu_custom_call.1} parent=1 // pred_check
      _
    $region95: #{tpu_custom_call.1} parent=1 // pred_check_branch
      %4467 = sbr.rel (0) target = $region97
    $region96: #{tpu_custom_call.1} parent=1 // pred_region
      _
    $region97: #{tpu_custom_call.1} parent=1 // pred_fallthru
      _
    %4468 = vsyncpa [#allocation4], 1
    %4469 = vsyncpa [#allocation6], 1
    %4470 = vsyncpa [#allocation9], 1
    %4471 = vsyncpa [#allocation12], 1
    %4472 = vsyncpa [#allocation15], 1

</llo_original>
